<compile_context>
chip_gen: v7x
topology: tpu7x:2x2x1
jax: 0.10.0
libtpu: 0.0.40
codegen_flags: <defaults>
</compile_context>

<pallas_src>
import functools

import jax
import jax.numpy as jnp
from jax.experimental import pallas as pl
from jax.experimental.pallas import tpu as pltpu

STATE_SIZE = 8        # small example state dim
ACTION_SIZE = 4       # small example action dim
H1 = 2 ** 10          # 1024  (fc1 out)
H2 = 2 ** 11          # 2048  (fc2 out)
BATCH = 8

TILE_B = 8            # batch tile per grid step (raise to 128-256 for training batches)
TILE_H2 = 1024        # fc2-output columns streamed per grid step
NUM_CHUNKS = H2 // TILE_H2


def dqn_kernel(x_ref, w1_ref, b1_ref, w2_ref, b2_ref, w3_ref, b3_ref,
               o_ref, h1_ref, acc_ref):
    j = pl.program_id(1)

    @pl.when(j == 0)
    def _():
        # fc1 + relu, computed once per batch tile; cached as bf16.
        h1 = jnp.dot(x_ref[...].astype(jnp.bfloat16), w1_ref[...],
                     preferred_element_type=jnp.float32)
        h1_ref[...] = jnp.maximum(h1 + b1_ref[...], 0.0).astype(jnp.bfloat16)
        # Fold the fc3 bias into the accumulator init (no wrapper epilogue).
        acc_ref[...] = jnp.broadcast_to(b3_ref[...], acc_ref.shape).astype(jnp.float32)

    # fc2 chunk + relu, then partial fc3 accumulation (f32 accumulator).
    # b2 / W3 are VMEM-resident full arrays; slice the current column chunk.
    col = pl.multiple_of(j * TILE_H2, TILE_H2)
    h2 = jnp.dot(h1_ref[...], w2_ref[...], preferred_element_type=jnp.float32)
    h2 = jnp.maximum(h2 + b2_ref[:, pl.ds(col, TILE_H2)], 0.0)
    acc_ref[...] += jnp.dot(h2.astype(jnp.bfloat16),
                            w3_ref[pl.ds(col, TILE_H2), :],
                            preferred_element_type=jnp.float32)

    @pl.when(j == pl.num_programs(1) - 1)
    def _():
        o_ref[...] = acc_ref[...].astype(o_ref.dtype)


@functools.partial(jax.jit, static_argnames=())
def dqn_forward(x, params):
    """params = (w1, b1, w2_packed, b2, w3, b3) with w2_packed: (nc, H1, TILE_H2)."""
    w1, b1, w2p, b2, w3, b3 = params
    B, S = x.shape
    A = w3.shape[1]
    assert B % TILE_B == 0
    assert H2 % TILE_H2 == 0
    nb = B // TILE_B
    nc = NUM_CHUNKS

    cost = pl.CostEstimate(
        flops=2 * B * (S * H1 + H1 * H2 + H2 * A),
        transcendentals=0,
        bytes_accessed=(2 * (S * H1 + H1 * H2 + H2 * A)   # bf16 weights
                        + 4 * (H1 + H2 + A)               # f32 biases
                        + 4 * B * S                       # x
                        + 4 * B * A),                     # output
    )

    return pl.pallas_call(
        dqn_kernel,
        out_shape=jax.ShapeDtypeStruct((B, A), jnp.float32),
        grid_spec=pltpu.PrefetchScalarGridSpec(
            num_scalar_prefetch=0,
            grid=(nb, nc),
            in_specs=[
                pl.BlockSpec((TILE_B, S), lambda i, j: (i, 0)),            # x tile
                pl.BlockSpec((S, H1), lambda i, j: (0, 0)),                # W1 (tiny, resident)
                pl.BlockSpec((1, H1), lambda i, j: (0, 0)),                # b1 (resident)
                pl.BlockSpec((None, H1, TILE_H2), lambda i, j: (j, 0, 0)), # W2 chunk (streamed)
                pl.BlockSpec((1, H2), lambda i, j: (0, 0)),                # b2 (resident)
                pl.BlockSpec((H2, A), lambda i, j: (0, 0)),                # W3 (resident)
                pl.BlockSpec((1, A), lambda i, j: (0, 0)),                 # b3 (resident)
            ],
            out_specs=pl.BlockSpec((TILE_B, A), lambda i, j: (i, 0)),
            scratch_shapes=[
                pltpu.VMEM((TILE_B, H1), jnp.bfloat16),   # cached relu(fc1)
                pltpu.VMEM((TILE_B, A), jnp.float32),     # fc3 accumulator (b3-initialized)
            ],
        ),
        compiler_params=pltpu.CompilerParams(
            dimension_semantics=("parallel", "arbitrary"),
            vmem_limit_bytes=16 << 20,     # footprint ~4.2 MiB; ample headroom everywhere
        ),
        cost_estimate=cost,
    )(x, w1, b1, w2p, b2, w3, b3)


def pack_w2(w2):
    """One-time (outside the hot path) repack of W2 into contiguous column chunks.

    (H1, H2) -> (nc, H1, TILE_H2) so each streamed chunk is one dense DMA slab.
    """
    return jnp.transpose(w2.reshape(H1, NUM_CHUNKS, TILE_H2), (1, 0, 2))


def init_params(key, state_size, action_size):
    """Deterministic init mimicking torch nn.Linear: U(-1/sqrt(fan_in), 1/sqrt(fan_in)).

    Weights are cast to bf16 (streamed from HBM in bf16, accumulated in f32);
    biases stay f32.
    """
    ks = jax.random.split(key, 6)

    def linear(kw, kb, fan_in, fan_out):
        bound = 1.0 / jnp.sqrt(jnp.float32(fan_in))
        w = jax.random.uniform(kw, (fan_in, fan_out), jnp.float32, -bound, bound)
        b = jax.random.uniform(kb, (1, fan_out), jnp.float32, -bound, bound)
        return w.astype(jnp.bfloat16), b

    w1, b1 = linear(ks[0], ks[1], state_size, H1)
    w2, b2 = linear(ks[2], ks[3], H1, H2)
    w3, b3 = linear(ks[4], ks[5], H2, action_size)
    return (w1, b1, w2, b2, w3, b3)


def dqn_reference(x, params):
    """Pure-JAX reference using the same bf16-weight / f32-accumulate math."""
    w1, b1, w2, b2, w3, b3 = params
    h1 = jnp.maximum(
        jnp.dot(x.astype(jnp.bfloat16), w1, preferred_element_type=jnp.float32) + b1, 0.0)
    h2 = jnp.maximum(
        jnp.dot(h1.astype(jnp.bfloat16), w2, preferred_element_type=jnp.float32) + b2, 0.0)
    return jnp.dot(h2.astype(jnp.bfloat16), w3, preferred_element_type=jnp.float32) + b3


if __name__ == "__main__":
    key = jax.random.PRNGKey(0)
    kx, kp = jax.random.split(key)
    x = jax.random.normal(kx, (BATCH, STATE_SIZE), dtype=jnp.float32)
    w1, b1, w2, b2, w3, b3 = init_params(kp, STATE_SIZE, ACTION_SIZE)

    # Pack W2 once, outside the hot path.
    kernel_params = (w1, b1, pack_w2(w2), b2, w3, b3)

    out = dqn_forward(x, kernel_params)
    out = jax.block_until_ready(out)

    ref = dqn_reference(x, (w1, b1, w2, b2, w3, b3))
    assert out.shape == (BATCH, ACTION_SIZE)
    # Only difference vs reference is f32 summation order (bf16 products are
    # exact in f32), so a tight tolerance still holds.
    assert jnp.allclose(out, ref, atol=2e-3, rtol=2e-3)

    print("KERNEL_OK")
</pallas_src>

<mosaic_0001>
module attributes {stable_mosaic.version = 11 : i64} {
  func.func @dqn_kernel(%arg0: i32, %arg1: i32, %arg2: memref<8x8xf32, #tpu.memory_space<vmem>>, %arg3: memref<8x1024xbf16, #tpu.memory_space<vmem>>, %arg4: memref<1x1024xf32, #tpu.memory_space<vmem>>, %arg5: memref<1x1024x1024xbf16, #tpu.memory_space<vmem>>, %arg6: memref<1x2048xf32, #tpu.memory_space<vmem>>, %arg7: memref<2048x4xbf16, #tpu.memory_space<vmem>>, %arg8: memref<1x4xf32, #tpu.memory_space<vmem>>, %arg9: memref<8x4xf32, #tpu.memory_space<vmem>>, %arg10: memref<8x1024xbf16, #tpu.memory_space<vmem>>, %arg11: memref<8x4xf32, #tpu.memory_space<vmem>>) attributes {dimension_semantics = [#tpu.dimension_semantics<parallel>, #tpu.dimension_semantics<arbitrary>], iteration_bounds = array<i64: 1, 2>, scalar_prefetch = 0 : i64, scratch_operands = 2 : i64, tpu.core_type = #tpu.core_type<tc>, window_params = [{transform_indices = @transform_0, window_bounds = array<i64: 8, 8>}, {pipeline_mode = #tpu.pipeline_mode<synchronous>, transform_indices = @transform_1, window_bounds = array<i64: 8, 1024>}, {pipeline_mode = #tpu.pipeline_mode<synchronous>, transform_indices = @transform_2, window_bounds = array<i64: 1, 1024>}, {transform_indices = @transform_3, window_bounds = array<i64: 1, 1024, 1024>}, {pipeline_mode = #tpu.pipeline_mode<synchronous>, transform_indices = @transform_4, window_bounds = array<i64: 1, 2048>}, {pipeline_mode = #tpu.pipeline_mode<synchronous>, transform_indices = @transform_5, window_bounds = array<i64: 2048, 4>}, {pipeline_mode = #tpu.pipeline_mode<synchronous>, transform_indices = @transform_6, window_bounds = array<i64: 1, 4>}, {transform_indices = @transform_7, window_bounds = array<i64: 8, 4>}]} {
    %c0_i32 = arith.constant 0 : i32
    %0 = arith.cmpi eq, %arg1, %c0_i32 : i32
    %1 = arith.extui %0 : i1 to i32
    %c0_i32_0 = arith.constant 0 : i32
    %2 = arith.cmpi ne, %1, %c0_i32_0 : i32
    scf.if %2 {
      %c0_14 = arith.constant 0 : index
      %c0_15 = arith.constant 0 : index
      %25 = vector.load %arg2[%c0_14, %c0_15] : memref<8x8xf32, #tpu.memory_space<vmem>>, vector<8x8xf32>
      %26 = arith.truncf %25 : vector<8x8xf32> to vector<8x8xbf16>
      %c0_16 = arith.constant 0 : index
      %c0_17 = arith.constant 0 : index
      %27 = vector.load %arg3[%c0_16, %c0_17] : memref<8x1024xbf16, #tpu.memory_space<vmem>>, vector<8x1024xbf16>
      %cst_18 = arith.constant dense<0.000000e+00> : vector<8x1024xf32>
      %28 = tpu.matmul %26, %27, %cst_18 {dimension_numbers = #tpu.dot_dimension_numbers<[1], [0], [0], [1], [0, 0, 1, 1], [], []>} : vector<8x8xbf16>, vector<8x1024xbf16>, vector<8x1024xf32> -> vector<8x1024xf32>
      %c0_19 = arith.constant 0 : index
      %c0_20 = arith.constant 0 : index
      %29 = vector.load %arg4[%c0_19, %c0_20] : memref<1x1024xf32, #tpu.memory_space<vmem>>, vector<1x1024xf32>
      %30 = vector.broadcast %29 : vector<1x1024xf32> to vector<8x1024xf32>
      %31 = arith.addf %28, %30 : vector<8x1024xf32>
      %cst_21 = arith.constant 0.000000e+00 : f32
      %32 = vector.broadcast %cst_21 : f32 to vector<8x1024xf32>
      %33 = arith.maximumf %31, %32 : vector<8x1024xf32>
      %34 = arith.truncf %33 : vector<8x1024xf32> to vector<8x1024xbf16>
      %c0_22 = arith.constant 0 : index
      %c0_23 = arith.constant 0 : index
      %35 = vector.load %arg10[%c0_22, %c0_23] : memref<8x1024xbf16, #tpu.memory_space<vmem>>, vector<8x1024xbf16>
      tpu.vector_store %arg10[%c0_22, %c0_23], %34 {strides = array<i32>} : memref<8x1024xbf16, #tpu.memory_space<vmem>>, vector<8x1024xbf16>,
      %c0_24 = arith.constant 0 : index
      %c0_25 = arith.constant 0 : index
      %36 = vector.load %arg8[%c0_24, %c0_25] : memref<1x4xf32, #tpu.memory_space<vmem>>, vector<1x4xf32>
      %37 = vector.shape_cast %36 : vector<1x4xf32> to vector<1x4xf32>
      %38 = vector.broadcast %37 : vector<1x4xf32> to vector<8x4xf32>
      %c0_26 = arith.constant 0 : index
      %c0_27 = arith.constant 0 : index
      %39 = vector.load %arg11[%c0_26, %c0_27] : memref<8x4xf32, #tpu.memory_space<vmem>>, vector<8x4xf32>
      tpu.vector_store %arg11[%c0_26, %c0_27], %38 {strides = array<i32>} : memref<8x4xf32, #tpu.memory_space<vmem>>, vector<8x4xf32>,
    } else {
    }
    %c1024_i32 = arith.constant 1024 : i32
    %3 = arith.muli %arg1, %c1024_i32 : i32
    %4 = tpu.assume_multiple %3, 1024 : i32
    %c0 = arith.constant 0 : index
    %c0_1 = arith.constant 0 : index
    %5 = vector.load %arg10[%c0, %c0_1] : memref<8x1024xbf16, #tpu.memory_space<vmem>>, vector<8x1024xbf16>
    %c0_2 = arith.constant 0 : index
    %c0_3 = arith.constant 0 : index
    %c0_4 = arith.constant 0 : index
    %6 = vector.load %arg5[%c0_2, %c0_3, %c0_4] : memref<1x1024x1024xbf16, #tpu.memory_space<vmem>>, vector<1x1024x1024xbf16>
    %7 = vector.shape_cast %6 : vector<1x1024x1024xbf16> to vector<1024x1024xbf16>
    %cst = arith.constant dense<0.000000e+00> : vector<8x1024xf32>
    %8 = tpu.matmul %5, %7, %cst {dimension_numbers = #tpu.dot_dimension_numbers<[1], [0], [0], [1], [0, 0, 1, 1], [], []>} : vector<8x1024xbf16>, vector<1024x1024xbf16>, vector<8x1024xf32> -> vector<8x1024xf32>
    %c0_5 = arith.constant 0 : index
    %9 = arith.index_cast %4 : i32 to index
    %10 = vector.load %arg6[%c0_5, %9] : memref<1x2048xf32, #tpu.memory_space<vmem>>, vector<1x1024xf32>
    %11 = vector.broadcast %10 : vector<1x1024xf32> to vector<8x1024xf32>
    %12 = arith.addf %8, %11 : vector<8x1024xf32>
    %cst_6 = arith.constant 0.000000e+00 : f32
    %13 = vector.broadcast %cst_6 : f32 to vector<8x1024xf32>
    %14 = arith.maximumf %12, %13 : vector<8x1024xf32>
    %c0_7 = arith.constant 0 : index
    %c0_8 = arith.constant 0 : index
    %15 = vector.load %arg11[%c0_7, %c0_8] : memref<8x4xf32, #tpu.memory_space<vmem>>, vector<8x4xf32>
    %16 = arith.truncf %14 : vector<8x1024xf32> to vector<8x1024xbf16>
    %17 = arith.index_cast %4 : i32 to index
    %c0_9 = arith.constant 0 : index
    %18 = vector.load %arg7[%17, %c0_9] : memref<2048x4xbf16, #tpu.memory_space<vmem>>, vector<1024x4xbf16>
    %cst_10 = arith.constant dense<0.000000e+00> : vector<8x4xf32>
    %19 = tpu.matmul %16, %18, %cst_10 {dimension_numbers = #tpu.dot_dimension_numbers<[1], [0], [0], [1], [0, 0, 1, 1], [], []>} : vector<8x1024xbf16>, vector<1024x4xbf16>, vector<8x4xf32> -> vector<8x4xf32>
    %20 = arith.addf %15, %19 : vector<8x4xf32>
    %c0_11 = arith.constant 0 : index
    %c0_12 = arith.constant 0 : index
    %21 = vector.load %arg11[%c0_11, %c0_12] : memref<8x4xf32, #tpu.memory_space<vmem>>, vector<8x4xf32>
    tpu.vector_store %arg11[%c0_11, %c0_12], %20 {strides = array<i32>} : memref<8x4xf32, #tpu.memory_space<vmem>>, vector<8x4xf32>,
    %c1_i32 = arith.constant 1 : i32
    %22 = arith.cmpi eq, %arg1, %c1_i32 : i32
    %23 = arith.extui %22 : i1 to i32
    %c0_i32_13 = arith.constant 0 : i32
    %24 = arith.cmpi ne, %23, %c0_i32_13 : i32
    scf.if %24 {
      %c0_14 = arith.constant 0 : index
      %c0_15 = arith.constant 0 : index
      %25 = vector.load %arg11[%c0_14, %c0_15] : memref<8x4xf32, #tpu.memory_space<vmem>>, vector<8x4xf32>
      %c0_16 = arith.constant 0 : index
      %c0_17 = arith.constant 0 : index
      %26 = vector.load %arg9[%c0_16, %c0_17] : memref<8x4xf32, #tpu.memory_space<vmem>>, vector<8x4xf32>
      tpu.vector_store %arg9[%c0_16, %c0_17], %25 {strides = array<i32>} : memref<8x4xf32, #tpu.memory_space<vmem>>, vector<8x4xf32>,
    } else {
    }
    return
  }
  func.func @transform_0(%arg0: i32, %arg1: i32) -> (i32, i32) {
    %c0_i32 = arith.constant 0 : i32
    %c0_i32_0 = arith.constant 0 : i32
    return %arg0, %c0_i32 : i32, i32
  }
  func.func @transform_1(%arg0: i32, %arg1: i32) -> (i32, i32) {
    %c0_i32 = arith.constant 0 : i32
    %c0_i32_0 = arith.constant 0 : i32
    %c0_i32_1 = arith.constant 0 : i32
    return %c0_i32, %c0_i32_0 : i32, i32
  }
  func.func @transform_2(%arg0: i32, %arg1: i32) -> (i32, i32) {
    %c0_i32 = arith.constant 0 : i32
    %c0_i32_0 = arith.constant 0 : i32
    %c0_i32_1 = arith.constant 0 : i32
    return %c0_i32, %c0_i32_0 : i32, i32
  }
  func.func @transform_3(%arg0: i32, %arg1: i32) -> (i32, i32, i32) {
    %c0_i32 = arith.constant 0 : i32
    %c0_i32_0 = arith.constant 0 : i32
    %c0_i32_1 = arith.constant 0 : i32
    return %arg1, %c0_i32, %c0_i32_0 : i32, i32, i32
  }
  func.func @transform_4(%arg0: i32, %arg1: i32) -> (i32, i32) {
    %c0_i32 = arith.constant 0 : i32
    %c0_i32_0 = arith.constant 0 : i32
    %c0_i32_1 = arith.constant 0 : i32
    return %c0_i32, %c0_i32_0 : i32, i32
  }
  func.func @transform_5(%arg0: i32, %arg1: i32) -> (i32, i32) {
    %c0_i32 = arith.constant 0 : i32
    %c0_i32_0 = arith.constant 0 : i32
    %c0_i32_1 = arith.constant 0 : i32
    return %c0_i32, %c0_i32_0 : i32, i32
  }
  func.func @transform_6(%arg0: i32, %arg1: i32) -> (i32, i32) {
    %c0_i32 = arith.constant 0 : i32
    %c0_i32_0 = arith.constant 0 : i32
    %c0_i32_1 = arith.constant 0 : i32
    return %c0_i32, %c0_i32_0 : i32, i32
  }
  func.func @transform_7(%arg0: i32, %arg1: i32) -> (i32, i32) {
    %c0_i32 = arith.constant 0 : i32
    %c0_i32_0 = arith.constant 0 : i32
    return %arg0, %c0_i32 : i32, i32
  }
}

</mosaic_0001>

<llo_original>
// kernel: dqn_forward.1
$region0: #{dqn_forward.1}
  #allocation0 [shape = 'u32[]', space=smem, size = 0x4, offset = 0x4, fixed_abs, tag = 'smem constant byte address 0x4 - core index']
  #allocation1 [shape = 'u32[144,128]{1,0:T(1,128)}', space=vmem, size = 0x12000, scoped, tag = 'internal scratch']
  #allocation2 [shape = 'bf16[8,1024]{1,0:T(8,128)(2,1)}', space=vmem, size = 0x4000, scoped, tag = 'scratch operand']
  #allocation3 [shape = 'f32[8,4]{1,0:T(8,128)}', space=vmem, size = 0x1000, scoped, tag = 'scratch operand']
  %s0 = inlined_call_operand.hbm [shape: f32[8,8], index: 0, kind: input, shape index: {}]
  %s1 = inlined_call_operand.hbm [shape: bf16[8,1024], index: 1, kind: input, shape index: {}]
  %s2 = inlined_call_operand.hbm [shape: f32[1,1024], index: 2, kind: input, shape index: {}]
  %s3 = inlined_call_operand.hbm [shape: bf16[2,1024,1024], index: 3, kind: input, shape index: {}]
  %s4 = inlined_call_operand.hbm [shape: f32[1,2048], index: 4, kind: input, shape index: {}]
  %s5 = inlined_call_operand.vmem [shape: bf16[2048,4], index: 5, kind: input, shape index: {}]
  %s6 = inlined_call_operand.hbm [shape: f32[1,4], index: 6, kind: input, shape index: {}]
  %s7 = inlined_call_operand.vmem [shape: f32[8,4], index: 7, kind: output, shape index: {}]
  %s8 = sld [smem:[#allocation0]]
  $region93: #{dqn_forward.1} parent=0
    _
  %s10 = ssub.s32 1, %s8
  %s11 = scalar_select 0, %s10, %s8
  $region1: #{dqn_forward.1} parent=0
    #allocation4 [shape = 'u8[4096]{0}', space=vmem, size = 0x1000, scoped, tag = 'input window, operand 0, single buffered']
    #allocation5 [shape = 's32[2]{0}', space=sflag, size = 0x8, scoped, tag = 'scoped memory for dqn_forward.1']
    #allocation6 [shape = 'u8[16384]{0}', space=vmem, size = 0x4000, scoped, tag = 'input window, operand 1, single buffered']
    #allocation7 [shape = 's32[1]{0}', space=sflag, size = 0x4, scoped, tag = 'scoped memory for dqn_forward.1']
    #allocation8 [shape = 'u8[4096]{0}', space=vmem, size = 0x1000, scoped, tag = 'input window, operand 2, single buffered']
    #allocation9 [shape = 'u8[4194304]{0}', space=vmem, size = 0x400000, scoped, tag = 'input window, operand 3']
    #allocation10 [shape = 's32[2]{0}', space=sflag, size = 0x8, scoped, tag = 'scoped memory for dqn_forward.1']
    #allocation11 [shape = 'u8[8192]{0}', space=vmem, size = 0x2000, scoped, tag = 'input window, operand 4, single buffered']
    #allocation12 [shape = 'u8[512]{0}', space=vmem, size = 0x400, scoped, tag = 'input window, operand 6, single buffered']
    #allocation13 [shape = 's32[1]{0}', space=sflag, size = 0x4, scoped, tag = 'scoped memory for dqn_forward.1']
    %12 = vsyncpa [#allocation5], 0
    %13 = vsyncpa [#allocation7], 0
    %14 = vsyncpa [#allocation10], 0
    %s15 = scalar_lea.sflag [#allocation10], 1
    %16 = vsyncpa %s15, 0
    %17 = vsyncpa [#allocation13], 0
    loop: start=0, step=1, limit=4
    $region2: #{dqn_forward.1} parent=1 // loop_pre_header
      _
    $region3: #{dqn_forward.1} parent=1 // loop_header
      %s19 = sphi 0, %s23
      %p20 = scmp.ge.s32.totalorder %s19, 4
      %s26 = sphi 0, %s38
      %s27 = sphi 0, %s34
      %s28 = sphi 0, %s26
      %s29 = sphi 0, %s27
      %s30 = sphi 0, %s28
      %s31 = sphi 0, %s29
      %s41 = sphi 0, %s43
      %s44 = sphi 0, %s41
      %s45 = sphi 0, %s44
      %s61 = sphi 0, %s45
      %s65 = sphi 0, %s65
      %s67 = sphi 0, %s65
      %s68 = sphi 0, %s67
      %s82 = sphi 0, %s68
      %s86 = sphi 0, %s86
      %s88 = sphi 0, %s86
      %s89 = sphi 0, %s88
      %s103 = sphi 0, %s89
      %s109 = sphi 0, %s111
      %s112 = sphi 0, %s109
      %s113 = sphi 0, %s112
      %s129 = sphi 0, %s113
      %s133 = sphi 0, %s133
      %s135 = sphi 0, %s133
      %s136 = sphi 0, %s135
      %s150 = sphi 0, %s136
      %s154 = sphi 0, %s154
      %s156 = sphi 0, %s154
      %s157 = sphi 0, %s156
      %s171 = sphi 0, %s157
      %s175 = sphi 0, %s175
      %s177 = sphi 0, %s175
      %s178 = sphi 0, %s177
      %s192 = sphi 0, %s178
      %s198 = sphi 0, %s200
      %s201 = sphi 0, %s198
      %s202 = sphi 0, %s201
      %s218 = sphi 0, %s202
    $region4: #{dqn_forward.1} parent=1 // loop_header_branch
      %22 = sbr.rel (%p20) target = $region8
    $region5: #{dqn_forward.1} parent=1 // loop_body
      %s24 = ssub.s32 %s19, 1
      %s25 = ssub.s32 %s19, 2
      %s32 = sadd.s32 1, %s27
      %p33 = scmp.ge.s32.totalorder %s32, 2
      %s34 = scalar_select %p33, 0, %s32
      %s35 = sadd.s32 1, %s26
      %s36 = scalar_select %p33, %s35, %s26
      %p37 = scmp.ge.s32.totalorder %s36, 1
      %s38 = scalar_select %p37, 0, %s36
      %s39 = ssub.s32 %s26, %s38
      %p40 = scmp.eq.s32.totalorder %s39, 0
      %s42 = sadd.s32 %s41, 1
      %s43 = scalar_select %p40, %s41, %s42
      %p46 = pneg %p40
      %p47 = scmp.eq.s32.totalorder %s19, 1
      %p48 = por %p46, %p47
      %p49 = scmp.ne.s32.totalorder %s41, %s44
      %p50 = scmp.eq.s32.totalorder %s19, 0
      %p51 = por %p49, %p50
      %p52 = scmp.ne.s32.totalorder %s41, %s44
      %p53 = scmp.eq.s32.totalorder %s24, 1
      %p54 = por %p52, %p53
      %p55 = scmp.ne.s32.totalorder %s44, %s45
      %p56 = scmp.eq.s32.totalorder %s24, 0
      %p57 = por %p55, %p56
      %p58 = scmp.ne.s32.totalorder %s44, %s45
      %p59 = scmp.eq.s32.totalorder %s25, 1
      %p60 = por %p58, %p59
      %p62 = scmp.ne.s32.totalorder %s45, %s61
      %p63 = scmp.eq.s32.totalorder %s25, 0
      %p64 = por %p62, %p63
      %s66 = sadd.s32 %s65, 1
      %p69 = scmp.eq.s32.totalorder %s19, 1
      %p70 = scmp.ne.s32.totalorder %s65, %s67
      %p71 = scmp.eq.s32.totalorder %s19, 0
      %p72 = por %p70, %p71
      %p73 = scmp.ne.s32.totalorder %s65, %s67
      %p74 = scmp.eq.s32.totalorder %s24, 1
      %p75 = por %p73, %p74
      %p76 = scmp.ne.s32.totalorder %s67, %s68
      %p77 = scmp.eq.s32.totalorder %s24, 0
      %p78 = por %p76, %p77
      %p79 = scmp.ne.s32.totalorder %s67, %s68
      %p80 = scmp.eq.s32.totalorder %s25, 1
      %p81 = por %p79, %p80
      %p83 = scmp.ne.s32.totalorder %s68, %s82
      %p84 = scmp.eq.s32.totalorder %s25, 0
      %p85 = por %p83, %p84
      %s87 = sadd.s32 %s86, 1
      %p90 = scmp.eq.s32.totalorder %s19, 1
      %p91 = scmp.ne.s32.totalorder %s86, %s88
      %p92 = scmp.eq.s32.totalorder %s19, 0
      %p93 = por %p91, %p92
      %p94 = scmp.ne.s32.totalorder %s86, %s88
      %p95 = scmp.eq.s32.totalorder %s24, 1
      %p96 = por %p94, %p95
      %p97 = scmp.ne.s32.totalorder %s88, %s89
      %p98 = scmp.eq.s32.totalorder %s24, 0
      %p99 = por %p97, %p98
      %p100 = scmp.ne.s32.totalorder %s88, %s89
      %p101 = scmp.eq.s32.totalorder %s25, 1
      %p102 = por %p100, %p101
      %p104 = scmp.ne.s32.totalorder %s89, %s103
      %p105 = scmp.eq.s32.totalorder %s25, 0
      %p106 = por %p104, %p105
      %s107 = ssub.s32 %s27, %s34
      %p108 = scmp.eq.s32.totalorder %s107, 0
      %s110 = sadd.s32 %s109, 1
      %s111 = scalar_select %p108, %s109, %s110
      %p114 = pneg %p108
      %p115 = scmp.eq.s32.totalorder %s19, 1
      %p116 = por %p114, %p115
      %p117 = scmp.ne.s32.totalorder %s109, %s112
      %p118 = scmp.eq.s32.totalorder %s19, 0
      %p119 = por %p117, %p118
      %p120 = scmp.ne.s32.totalorder %s109, %s112
      %p121 = scmp.eq.s32.totalorder %s24, 1
      %p122 = por %p120, %p121
      %p123 = scmp.ne.s32.totalorder %s112, %s113
      %p124 = scmp.eq.s32.totalorder %s24, 0
      %p125 = por %p123, %p124
      %p126 = scmp.ne.s32.totalorder %s112, %s113
      %p127 = scmp.eq.s32.totalorder %s25, 1
      %p128 = por %p126, %p127
      %p130 = scmp.ne.s32.totalorder %s113, %s129
      %p131 = scmp.eq.s32.totalorder %s25, 0
      %p132 = por %p130, %p131
      %s134 = sadd.s32 %s133, 1
      %p137 = scmp.eq.s32.totalorder %s19, 1
      %p138 = scmp.ne.s32.totalorder %s133, %s135
      %p139 = scmp.eq.s32.totalorder %s19, 0
      %p140 = por %p138, %p139
      %p141 = scmp.ne.s32.totalorder %s133, %s135
      %p142 = scmp.eq.s32.totalorder %s24, 1
      %p143 = por %p141, %p142
      %p144 = scmp.ne.s32.totalorder %s135, %s136
      %p145 = scmp.eq.s32.totalorder %s24, 0
      %p146 = por %p144, %p145
      %p147 = scmp.ne.s32.totalorder %s135, %s136
      %p148 = scmp.eq.s32.totalorder %s25, 1
      %p149 = por %p147, %p148
      %p151 = scmp.ne.s32.totalorder %s136, %s150
      %p152 = scmp.eq.s32.totalorder %s25, 0
      %p153 = por %p151, %p152
      %s155 = sadd.s32 %s154, 1
      %p158 = scmp.eq.s32.totalorder %s19, 1
      %p159 = scmp.ne.s32.totalorder %s154, %s156
      %p160 = scmp.eq.s32.totalorder %s19, 0
      %p161 = por %p159, %p160
      %p162 = scmp.ne.s32.totalorder %s154, %s156
      %p163 = scmp.eq.s32.totalorder %s24, 1
      %p164 = por %p162, %p163
      %p165 = scmp.ne.s32.totalorder %s156, %s157
      %p166 = scmp.eq.s32.totalorder %s24, 0
      %p167 = por %p165, %p166
      %p168 = scmp.ne.s32.totalorder %s156, %s157
      %p169 = scmp.eq.s32.totalorder %s25, 1
      %p170 = por %p168, %p169
      %p172 = scmp.ne.s32.totalorder %s157, %s171
      %p173 = scmp.eq.s32.totalorder %s25, 0
      %p174 = por %p172, %p173
      %s176 = sadd.s32 %s175, 1
      %p179 = scmp.eq.s32.totalorder %s19, 1
      %p180 = scmp.ne.s32.totalorder %s175, %s177
      %p181 = scmp.eq.s32.totalorder %s19, 0
      %p182 = por %p180, %p181
      %p183 = scmp.ne.s32.totalorder %s175, %s177
      %p184 = scmp.eq.s32.totalorder %s24, 1
      %p185 = por %p183, %p184
      %p186 = scmp.ne.s32.totalorder %s177, %s178
      %p187 = scmp.eq.s32.totalorder %s24, 0
      %p188 = por %p186, %p187
      %p189 = scmp.ne.s32.totalorder %s177, %s178
      %p190 = scmp.eq.s32.totalorder %s25, 1
      %p191 = por %p189, %p190
      %p193 = scmp.ne.s32.totalorder %s178, %s192
      %p194 = scmp.eq.s32.totalorder %s25, 0
      %p195 = por %p193, %p194
      %s196 = ssub.s32 %s26, %s38
      %p197 = scmp.eq.s32.totalorder %s196, 0
      %s199 = sadd.s32 %s198, 1
      %s200 = scalar_select %p197, %s198, %s199
      %p203 = pneg %p197
      %p204 = scmp.eq.s32.totalorder %s19, 1
      %p205 = por %p203, %p204
      %p206 = scmp.ne.s32.totalorder %s198, %s201
      %p207 = scmp.eq.s32.totalorder %s19, 0
      %p208 = por %p206, %p207
      %p209 = scmp.ne.s32.totalorder %s198, %s201
      %p210 = scmp.eq.s32.totalorder %s24, 1
      %p211 = por %p209, %p210
      %p212 = scmp.ne.s32.totalorder %s201, %s202
      %p213 = scmp.eq.s32.totalorder %s24, 0
      %p214 = por %p212, %p213
      %p215 = scmp.ne.s32.totalorder %s201, %s202
      %p216 = scmp.eq.s32.totalorder %s25, 1
      %p217 = por %p215, %p216
      %p219 = scmp.ne.s32.totalorder %s202, %s218
      %p220 = scmp.eq.s32.totalorder %s25, 0
      %p221 = por %p219, %p220
      %p222 = scmp.le.s32.totalorder 1, %s19
      %p223 = scmp.lt.s32.totalorder %s19, 3
      %p224 = pnand %p222, %p223
      %p225 = pneg %p224
      // Predicated region
      $region9: #{dqn_forward.1} parent=5 // pred_check
        _
      $region10: #{dqn_forward.1} parent=5 // pred_check_branch
        %227 = sbr.rel (%p224) target = $region12
      $region11: #{dqn_forward.1} parent=5 // pred_region
        %s228 = ssub.s32 %s19, 1
        // Predicated region
        $region13: #{dqn_forward.1} parent=11 // pred_check
          %p229 = pneg %p57
        $region14: #{dqn_forward.1} parent=11 // pred_check_branch
          %231 = sbr.rel (%p229) target = $region16
        $region15: #{dqn_forward.1} parent=11 // pred_region
          %s233 = ssub.s32 128, 128
          %234 = vsyncadd [#allocation5], %s233
          %s235 = smul.addr %s28, 128
          %s236 = scalar_lea.hbm %s0, %s235
          %s238 = sshll.u32 [#allocation4], 4
          %s239 = int_to_ptr.vmem [resolvable:$true] %s238
          %241 = dma.hbm_to_vmem [thread:$0]  %s236, 128, %s239, [#allocation5]
        $region16: #{dqn_forward.1} parent=11 // pred_fallthru
          _
        // Predicated region
        $region17: #{dqn_forward.1} parent=11 // pred_check
          %p242 = pneg %p78
        $region18: #{dqn_forward.1} parent=11 // pred_check_branch
          %244 = sbr.rel (%p242) target = $region20
        $region19: #{dqn_forward.1} parent=11 // pred_region
          %s246 = ssub.s32 512, 512
          %247 = vsyncadd [#allocation7], %s246
          %s249 = sshll.u32 [#allocation6], 4
          %s250 = int_to_ptr.vmem [resolvable:$true] %s249
          %252 = dma.hbm_to_vmem [thread:$0]  %s1, 512, %s250, [#allocation7]
        $region20: #{dqn_forward.1} parent=11 // pred_fallthru
          _
        // Predicated region
        $region21: #{dqn_forward.1} parent=11 // pred_check
          %p253 = pneg %p99
        $region22: #{dqn_forward.1} parent=11 // pred_check_branch
          %255 = sbr.rel (%p253) target = $region24
        $region23: #{dqn_forward.1} parent=11 // pred_region
          %s257 = ssub.s32 128, 128
          %258 = vsyncadd [#allocation7], %s257
          %s260 = sshll.u32 [#allocation8], 4
          %s261 = int_to_ptr.vmem [resolvable:$true] %s260
          %263 = dma.hbm_to_vmem [thread:$0]  %s2, 128, %s261, [#allocation7]
        $region24: #{dqn_forward.1} parent=11 // pred_fallthru
          _
        // Predicated region
        $region25: #{dqn_forward.1} parent=11 // pred_check
          %p264 = pneg %p146
        $region26: #{dqn_forward.1} parent=11 // pred_check_branch
          %266 = sbr.rel (%p264) target = $region28
        $region27: #{dqn_forward.1} parent=11 // pred_region
          %s268 = ssub.s32 256, 256
          %269 = vsyncadd [#allocation10], %s268
          %s271 = sshll.u32 [#allocation11], 4
          %s272 = int_to_ptr.vmem [resolvable:$true] %s271
          %274 = dma.hbm_to_vmem [thread:$0]  %s4, 256, %s272, [#allocation10]
        $region28: #{dqn_forward.1} parent=11 // pred_fallthru
          _
        // Predicated region
        $region29: #{dqn_forward.1} parent=11 // pred_check
          %p275 = pneg %p167
        $region30: #{dqn_forward.1} parent=11 // pred_check_branch
          %277 = sbr.rel (%p275) target = $region32
        $region31: #{dqn_forward.1} parent=11 // pred_region
          _
        $region32: #{dqn_forward.1} parent=11 // pred_fallthru
          _
        // Predicated region
        $region33: #{dqn_forward.1} parent=11 // pred_check
          %p278 = pneg %p188
        $region34: #{dqn_forward.1} parent=11 // pred_check_branch
          %280 = sbr.rel (%p278) target = $region36
        $region35: #{dqn_forward.1} parent=11 // pred_region
          %s282 = ssub.s32 16, 16
          %283 = vsyncadd [#allocation13], %s282
          %s285 = sshll.u32 [#allocation12], 4
          %s286 = int_to_ptr.vmem [resolvable:$true] %s285
          %288 = dma.hbm_to_vmem [thread:$0]  %s6, 16, %s286, [#allocation13]
        $region36: #{dqn_forward.1} parent=11 // pred_fallthru
          _
      $region12: #{dqn_forward.1} parent=5 // pred_fallthru
        _
      %p289 = scmp.lt.s32.totalorder %s19, 2
      // Predicated region
      $region37: #{dqn_forward.1} parent=5 // pred_check
        %p290 = pneg %p289
      $region38: #{dqn_forward.1} parent=5 // pred_check_branch
        %292 = sbr.rel (%p290) target = $region40
      $region39: #{dqn_forward.1} parent=5 // pred_region
        // Predicated region
        $region41: #{dqn_forward.1} parent=39 // pred_check
          %p293 = pneg %p119
        $region42: #{dqn_forward.1} parent=39 // pred_check_branch
          %295 = sbr.rel (%p293) target = $region44
        $region43: #{dqn_forward.1} parent=39 // pred_region
          %s296 = sand.u32 %s19, 1
          %s297 = scalar_lea.sflag [#allocation10], %s296
          %s298 = sand.u32 %s109, 1
          %s299 = smul.addr %s298, 4096
          %s300 = scalar_lea.vmem [#allocation9], %s299
          %s302 = ssub.s32 65536, 65536
          %303 = vsyncadd %s297, %s302
          %s304 = smul.addr %s27, 1024
          %s305 = smul.addr %s304, 64
          %s306 = scalar_lea.hbm %s3, %s305
          %s307 = sshll.u32 %s300, 4
          %s308 = int_to_ptr.vmem [resolvable:$true] %s307
          %313 = dma.hbm_to_vmem [thread:$0]  %s306, 65536, %s308, %s297, 512, 512, 32
        $region44: #{dqn_forward.1} parent=39 // pred_fallthru
          _
      $region40: #{dqn_forward.1} parent=5 // pred_fallthru
        _
      %p314 = scmp.le.s32.totalorder 1, %s19
      %p315 = scmp.lt.s32.totalorder %s19, 3
      %p316 = pnand %p314, %p315
      %p317 = pneg %p316
      // Predicated region
      $region45: #{dqn_forward.1} parent=5 // pred_check
        _
      $region46: #{dqn_forward.1} parent=5 // pred_check_branch
        %319 = sbr.rel (%p316) target = $region48
      $region47: #{dqn_forward.1} parent=5 // pred_region
        %s320 = ssub.s32 %s19, 1
        // Predicated region
        $region49: #{dqn_forward.1} parent=47 // pred_check
          %p321 = pneg %p57
        $region50: #{dqn_forward.1} parent=47 // pred_check_branch
          %323 = sbr.rel (%p321) target = $region52
        $region51: #{dqn_forward.1} parent=47 // pred_region
          %324 = dma.done [#allocation5], 128
        $region52: #{dqn_forward.1} parent=47 // pred_fallthru
          _
        // Predicated region
        $region53: #{dqn_forward.1} parent=47 // pred_check
          %p325 = pneg %p78
        $region54: #{dqn_forward.1} parent=47 // pred_check_branch
          %327 = sbr.rel (%p325) target = $region56
        $region55: #{dqn_forward.1} parent=47 // pred_region
          %328 = dma.done [#allocation7], 512
        $region56: #{dqn_forward.1} parent=47 // pred_fallthru
          _
        // Predicated region
        $region57: #{dqn_forward.1} parent=47 // pred_check
          %p329 = pneg %p99
        $region58: #{dqn_forward.1} parent=47 // pred_check_branch
          %331 = sbr.rel (%p329) target = $region60
        $region59: #{dqn_forward.1} parent=47 // pred_region
          %332 = dma.done [#allocation7], 128
        $region60: #{dqn_forward.1} parent=47 // pred_fallthru
          _
        %s333 = sand.u32 %s24, 1
        %s334 = scalar_lea.sflag [#allocation10], %s333
        %s335 = sand.u32 %s112, 1
        %s336 = smul.addr %s335, 4096
        %s337 = scalar_lea.vmem [#allocation9], %s336
        // Predicated region
        $region61: #{dqn_forward.1} parent=47 // pred_check
          %p338 = pneg %p125
        $region62: #{dqn_forward.1} parent=47 // pred_check_branch
          %340 = sbr.rel (%p338) target = $region64
        $region63: #{dqn_forward.1} parent=47 // pred_region
          %341 = dma.done %s334, 65536
        $region64: #{dqn_forward.1} parent=47 // pred_fallthru
          _
        // Predicated region
        $region65: #{dqn_forward.1} parent=47 // pred_check
          %p342 = pneg %p146
        $region66: #{dqn_forward.1} parent=47 // pred_check_branch
          %344 = sbr.rel (%p342) target = $region68
        $region67: #{dqn_forward.1} parent=47 // pred_region
          %345 = dma.done [#allocation10], 256
        $region68: #{dqn_forward.1} parent=47 // pred_fallthru
          _
        // Predicated region
        $region69: #{dqn_forward.1} parent=47 // pred_check
          %p346 = pneg %p188
        $region70: #{dqn_forward.1} parent=47 // pred_check_branch
          %348 = sbr.rel (%p346) target = $region72
        $region71: #{dqn_forward.1} parent=47 // pred_region
          %349 = dma.done [#allocation13], 16
        $region72: #{dqn_forward.1} parent=47 // pred_fallthru
          _
        %p350 = pneg %p57
        %p351 = pneg %p54
        %p352 = pneg %p78
        %p353 = pneg %p75
        %p354 = pneg %p99
        %p355 = pneg %p96
        %s356 = sand.u32 %s24, 1
        %s357 = scalar_lea.sflag [#allocation10], %s356
        %s358 = sand.u32 %s112, 1
        %s359 = smul.addr %s358, 4096
        %s360 = scalar_lea.vmem [#allocation9], %s359
        %p361 = pneg %p125
        %p362 = pneg %p122
        %p363 = pneg %p146
        %p364 = pneg %p143
        %p365 = pneg %p167
        %p366 = pneg %p164
        %p367 = pneg %p188
        %p368 = pneg %p185
        %p369 = pneg %p214
        %p370 = pneg %p211
        %p371 = scmp.lt.s32.totalorder %s28, 0
        %s372 = scalar_select %p371, %s28, 0
        %s373 = smul.addr %s372, 8
        %s374 = scalar_lea.vmem %s7, %s373
        %p375 = scmp.lt.s32.totalorder %s28, 0
        %s376 = scalar_select %p375, %s28, 0
        %s377 = smul.addr %s376, 8
        %s378 = scalar_lea.vmem %s7, %s377
        %p380 = scmp.eq.s32.totalorder %s29, 0
        // Predicated region
        $region73: #{dqn_forward.1} parent=47 // pred_check
          %p381 = pneg %p380
        $region74: #{dqn_forward.1} parent=47 // pred_check_branch
          %383 = sbr.rel (%p381) target = $region76
        $region75: #{dqn_forward.1} parent=47 // pred_region
          %v384 = vld [vmem:[#allocation4] sm:$0xff]
          %v385 = vpack.c.bf16 %v384, %v384
          %v386 = vld [vmem:[#allocation6] sm:$0xff]
          %v387 = vld [vmem:[#allocation6 + $0x8] sm:$0xff]
          %v388 = vld [vmem:[#allocation6 + $0x10] sm:$0xff]
          %v389 = vld [vmem:[#allocation6 + $0x18] sm:$0xff]
          %v390 = vld [vmem:[#allocation8] sm:$0xff]
          %v392 = vlaneseq
          %v393 = vshrl.u32 %v392, 7
          %v394 = vsub.s32 0, %v393
          %v395 = vrot.slane %v390, %v394
          %v396 = vlaneseq
          %v397 = vshrl.u32 %v396, 7
          %v398 = vsub.s32 1, %v397
          %v399 = vrot.slane %v390, %v398
          %v400 = vlaneseq
          %v401 = vshrl.u32 %v400, 7
          %v402 = vsub.s32 2, %v401
          %v403 = vrot.slane %v390, %v402
          %v404 = vlaneseq
          %v405 = vshrl.u32 %v404, 7
          %v406 = vsub.s32 3, %v405
          %v407 = vrot.slane %v390, %v406
          %v408 = vlaneseq
          %v409 = vshrl.u32 %v408, 7
          %v410 = vsub.s32 4, %v409
          %v411 = vrot.slane %v390, %v410
          %v412 = vlaneseq
          %v413 = vshrl.u32 %v412, 7
          %v414 = vsub.s32 5, %v413
          %v415 = vrot.slane %v390, %v414
          %v416 = vlaneseq
          %v417 = vshrl.u32 %v416, 7
          %v418 = vsub.s32 6, %v417
          %v419 = vrot.slane %v390, %v418
          %v420 = vlaneseq
          %v421 = vshrl.u32 %v420, 7
          %v422 = vsub.s32 7, %v421
          %v423 = vrot.slane %v390, %v422
          %v436 = vunpack.c.l.b16 %v386
          %v437 = vunpack.c.h.b16 %v386
          %v438 = vunpack.c.l.b16 %v387
          %v439 = vunpack.c.h.b16 %v387
          %v440 = vunpack.c.l.b16 %v388
          %v441 = vunpack.c.h.b16 %v388
          %v442 = vunpack.c.l.b16 %v389
          %v443 = vunpack.c.h.b16 %v389
          %v444 = vpack.c.b16 %v436, %v436
          %v445 = vpack.c.b16 %v437, %v437
          %v446 = vpack.c.b16 %v438, %v438
          %v447 = vpack.c.b16 %v439, %v439
          %v448 = vpack.c.b16 %v440, %v440
          %v449 = vpack.c.b16 %v441, %v441
          %v450 = vpack.c.b16 %v442, %v442
          %v451 = vpack.c.b16 %v443, %v443
          %vm452 = vcmask 64512
          %v454 = vsel %vm452, %v385, 0
          %vm456 = vcmask 1043456
          %v458 = vsel %vm456, %v444, 0
          %v461 = vsel %vm456, %v445, 0
          %v464 = vsel %vm456, %v446, 0
          %v467 = vsel %vm456, %v447, 0
          %v470 = vsel %vm456, %v448, 0
          %v473 = vsel %vm456, %v449, 0
          %v476 = vsel %vm456, %v450, 0
          %v479 = vsel %vm456, %v451, 0
          %481 = vmatprep.subr.bf16.mxu0 %v461
          %482 = vmatpush1.bf16.msra.mxu0 %v458
          %483 = vmatprep.subr.bf16.mxu0 0
          %484 = vmatpush1.bf16.msra.mxu0 0
          %485 = vmatprep.subr.bf16.mxu0 0
          %486 = vmatpush1.bf16.msra.mxu0 0
          %487 = vmatprep.subr.bf16.mxu0 0
          %488 = vmatpush1.bf16.msra.mxu0 0
          %489 = vmatprep.subr.bf16.mxu0 0
          %490 = vmatpush1.bf16.msra.mxu0 0
          %491 = vmatprep.subr.bf16.mxu0 0
          %492 = vmatpush1.bf16.msra.mxu0 0
          %493 = vmatprep.subr.bf16.mxu0 0
          %494 = vmatpush1.bf16.msra.mxu0 0
          %495 = vmatprep.subr.bf16.mxu0 0
          %496 = vmatpush1.bf16.msra.mxu0 0
          %497 = vmatprep.subr.bf16.mxu0 0
          %498 = vmatpush1.bf16.msra.mxu0 0
          %499 = vmatprep.subr.bf16.mxu0 0
          %500 = vmatpush1.bf16.msra.mxu0 0
          %501 = vmatprep.subr.bf16.mxu0 0
          %502 = vmatpush1.bf16.msra.mxu0 0
          %503 = vmatprep.subr.bf16.mxu0 0
          %504 = vmatpush1.bf16.msra.mxu0 0
          %505 = vmatprep.subr.bf16.mxu0 0
          %506 = vmatpush1.bf16.msra.mxu0 0
          %507 = vmatprep.subr.bf16.mxu0 0
          %508 = vmatpush1.bf16.msra.mxu0 0
          %509 = vmatprep.subr.bf16.mxu0 0
          %510 = vmatpush1.bf16.msra.mxu0 0
          %511 = vmatprep.subr.bf16.mxu0 0
          %512 = vmatpush1.bf16.msra.mxu0 0
          %513 = vmatprep.mubr.bf16.mxu0 0
          %514 = vmatmul.mubr.bf16.gmra.mrb[0].mxu0 %v454
          %v515 = vpop.f32.mrb[0].mxu0
          %v516 = vadd.f32 %v395, %v515
          %v517 = vpop.f32.mrb[0].mxu0
          %v518 = vadd.f32 %v399, %v517
          %v519 = vpop.f32.mrb[0].mxu0
          %v520 = vpop.f32.mrb[0].mxu0
          %521 = vdwg.mxu0
          %522 = vmatprep.subr.bf16.mxu0 %v467
          %523 = vmatpush1.bf16.msra.mxu0 %v464
          %524 = vmatprep.subr.bf16.mxu0 0
          %525 = vmatpush1.bf16.msra.mxu0 0
          %526 = vmatprep.subr.bf16.mxu0 0
          %527 = vmatpush1.bf16.msra.mxu0 0
          %528 = vmatprep.subr.bf16.mxu0 0
          %529 = vmatpush1.bf16.msra.mxu0 0
          %530 = vmatprep.subr.bf16.mxu0 0
          %531 = vmatpush1.bf16.msra.mxu0 0
          %532 = vmatprep.subr.bf16.mxu0 0
          %533 = vmatpush1.bf16.msra.mxu0 0
          %534 = vmatprep.subr.bf16.mxu0 0
          %535 = vmatpush1.bf16.msra.mxu0 0
          %536 = vmatprep.subr.bf16.mxu0 0
          %537 = vmatpush1.bf16.msra.mxu0 0
          %538 = vmatprep.subr.bf16.mxu0 0
          %539 = vmatpush1.bf16.msra.mxu0 0
          %540 = vmatprep.subr.bf16.mxu0 0
          %541 = vmatpush1.bf16.msra.mxu0 0
          %542 = vmatprep.subr.bf16.mxu0 0
          %543 = vmatpush1.bf16.msra.mxu0 0
          %544 = vmatprep.subr.bf16.mxu0 0
          %545 = vmatpush1.bf16.msra.mxu0 0
          %546 = vmatprep.subr.bf16.mxu0 0
          %547 = vmatpush1.bf16.msra.mxu0 0
          %548 = vmatprep.subr.bf16.mxu0 0
          %549 = vmatpush1.bf16.msra.mxu0 0
          %550 = vmatprep.subr.bf16.mxu0 0
          %551 = vmatpush1.bf16.msra.mxu0 0
          %552 = vmatprep.subr.bf16.mxu0 0
          %553 = vmatpush1.bf16.msra.mxu0 0
          %554 = vmatprep.mubr.bf16.mxu0 0
          %555 = vmatmul.mubr.bf16.gmra.mrb[0].mxu0 %v454
          %v556 = vpop.f32.mrb[0].mxu0
          %v557 = vadd.f32 %v403, %v556
          %v558 = vpop.f32.mrb[0].mxu0
          %v559 = vadd.f32 %v407, %v558
          %v560 = vpop.f32.mrb[0].mxu0
          %v561 = vpop.f32.mrb[0].mxu0
          %562 = vdwg.mxu0
          %563 = vmatprep.subr.bf16.mxu0 %v473
          %564 = vmatpush1.bf16.msra.mxu0 %v470
          %565 = vmatprep.subr.bf16.mxu0 0
          %566 = vmatpush1.bf16.msra.mxu0 0
          %567 = vmatprep.subr.bf16.mxu0 0
          %568 = vmatpush1.bf16.msra.mxu0 0
          %569 = vmatprep.subr.bf16.mxu0 0
          %570 = vmatpush1.bf16.msra.mxu0 0
          %571 = vmatprep.subr.bf16.mxu0 0
          %572 = vmatpush1.bf16.msra.mxu0 0
          %573 = vmatprep.subr.bf16.mxu0 0
          %574 = vmatpush1.bf16.msra.mxu0 0
          %575 = vmatprep.subr.bf16.mxu0 0
          %576 = vmatpush1.bf16.msra.mxu0 0
          %577 = vmatprep.subr.bf16.mxu0 0
          %578 = vmatpush1.bf16.msra.mxu0 0
          %579 = vmatprep.subr.bf16.mxu0 0
          %580 = vmatpush1.bf16.msra.mxu0 0
          %581 = vmatprep.subr.bf16.mxu0 0
          %582 = vmatpush1.bf16.msra.mxu0 0
          %583 = vmatprep.subr.bf16.mxu0 0
          %584 = vmatpush1.bf16.msra.mxu0 0
          %585 = vmatprep.subr.bf16.mxu0 0
          %586 = vmatpush1.bf16.msra.mxu0 0
          %587 = vmatprep.subr.bf16.mxu0 0
          %588 = vmatpush1.bf16.msra.mxu0 0
          %589 = vmatprep.subr.bf16.mxu0 0
          %590 = vmatpush1.bf16.msra.mxu0 0
          %591 = vmatprep.subr.bf16.mxu0 0
          %592 = vmatpush1.bf16.msra.mxu0 0
          %593 = vmatprep.subr.bf16.mxu0 0
          %594 = vmatpush1.bf16.msra.mxu0 0
          %595 = vmatprep.mubr.bf16.mxu0 0
          %596 = vmatmul.mubr.bf16.gmra.mrb[0].mxu0 %v454
          %v597 = vpop.f32.mrb[0].mxu0
          %v598 = vadd.f32 %v411, %v597
          %v599 = vpop.f32.mrb[0].mxu0
          %v600 = vadd.f32 %v415, %v599
          %v601 = vpop.f32.mrb[0].mxu0
          %v602 = vpop.f32.mrb[0].mxu0
          %603 = vdwg.mxu0
          %604 = vmatprep.subr.bf16.mxu0 %v479
          %605 = vmatpush1.bf16.msra.mxu0 %v476
          %606 = vmatprep.subr.bf16.mxu0 0
          %607 = vmatpush1.bf16.msra.mxu0 0
          %608 = vmatprep.subr.bf16.mxu0 0
          %609 = vmatpush1.bf16.msra.mxu0 0
          %610 = vmatprep.subr.bf16.mxu0 0
          %611 = vmatpush1.bf16.msra.mxu0 0
          %612 = vmatprep.subr.bf16.mxu0 0
          %613 = vmatpush1.bf16.msra.mxu0 0
          %614 = vmatprep.subr.bf16.mxu0 0
          %615 = vmatpush1.bf16.msra.mxu0 0
          %616 = vmatprep.subr.bf16.mxu0 0
          %617 = vmatpush1.bf16.msra.mxu0 0
          %618 = vmatprep.subr.bf16.mxu0 0
          %619 = vmatpush1.bf16.msra.mxu0 0
          %620 = vmatprep.subr.bf16.mxu0 0
          %621 = vmatpush1.bf16.msra.mxu0 0
          %622 = vmatprep.subr.bf16.mxu0 0
          %623 = vmatpush1.bf16.msra.mxu0 0
          %624 = vmatprep.subr.bf16.mxu0 0
          %625 = vmatpush1.bf16.msra.mxu0 0
          %626 = vmatprep.subr.bf16.mxu0 0
          %627 = vmatpush1.bf16.msra.mxu0 0
          %628 = vmatprep.subr.bf16.mxu0 0
          %629 = vmatpush1.bf16.msra.mxu0 0
          %630 = vmatprep.subr.bf16.mxu0 0
          %631 = vmatpush1.bf16.msra.mxu0 0
          %632 = vmatprep.subr.bf16.mxu0 0
          %633 = vmatpush1.bf16.msra.mxu0 0
          %634 = vmatprep.subr.bf16.mxu0 0
          %635 = vmatpush1.bf16.msra.mxu0 0
          %636 = vmatprep.mubr.bf16.mxu0 0
          %637 = vmatmul.mubr.bf16.gmra.mrb[0].mxu0 %v454
          %v638 = vpop.f32.mrb[0].mxu0
          %v639 = vadd.f32 %v419, %v638
          %v640 = vpop.f32.mrb[0].mxu0
          %v641 = vadd.f32 %v423, %v640
          %v642 = vpop.f32.mrb[0].mxu0
          %v643 = vpop.f32.mrb[0].mxu0
          %644 = vdwg.mxu0
          %v645 = vmax.f32 %v516, 0.0
          %v646 = vmax.f32 %v518, 0.0
          %v647 = vmax.f32 %v557, 0.0
          %v648 = vmax.f32 %v559, 0.0
          %v649 = vmax.f32 %v598, 0.0
          %v650 = vmax.f32 %v600, 0.0
          %v651 = vmax.f32 %v639, 0.0
          %v652 = vmax.f32 %v641, 0.0
          %v653 = vpack.c.bf16 %v645, %v645
          %v654 = vpack.c.bf16 %v646, %v646
          %v655 = vpack.c.bf16 %v647, %v647
          %v656 = vpack.c.bf16 %v648, %v648
          %v657 = vpack.c.bf16 %v649, %v649
          %v658 = vpack.c.bf16 %v650, %v650
          %v659 = vpack.c.bf16 %v651, %v651
          %v660 = vpack.c.bf16 %v652, %v652
          %v669 = vunpack.c.l.b16 %v653
          %v670 = vunpack.c.l.b16 %v654
          %v671 = vunpack.c.l.b16 %v655
          %v672 = vunpack.c.l.b16 %v656
          %v673 = vunpack.c.l.b16 %v657
          %v674 = vunpack.c.l.b16 %v658
          %v675 = vunpack.c.l.b16 %v659
          %v676 = vunpack.c.l.b16 %v660
          %v677 = vpack.c.b16 %v670, %v669
          %v678 = vpack.c.b16 %v672, %v671
          %v679 = vpack.c.b16 %v674, %v673
          %v680 = vpack.c.b16 %v676, %v675
          %685 = vst [vmem:[#allocation2] sm:$0xff] %v677
          %686 = vst [vmem:[#allocation2 + $0x8] sm:$0xff] %v678
          %687 = vst [vmem:[#allocation2 + $0x10] sm:$0xff] %v679
          %688 = vst [vmem:[#allocation2 + $0x18] sm:$0xff] %v680
          %v689 = vld [vmem:[#allocation12] sm:$0x1]
          %v691 = vlaneseq
          %v692 = vshrl.u32 %v691, 7
          %v693 = vsub.s32 0, %v692
          %v694 = vrot.slane %v689, %v693
          %vm696 = vcmask 31744
          %697 = vst.msk [vmem:[#allocation3] sm:$0xff] %vm696, %v694
        $region76: #{dqn_forward.1} parent=47 // pred_fallthru
          _
        %s698 = smul.u32 %s29, 1024
        %v699 = vld [vmem:[#allocation2] sm:$0xff]
        %v700 = vld [vmem:[#allocation2 + $0x8] sm:$0xff]
        %v701 = vld [vmem:[#allocation2 + $0x10] sm:$0xff]
        %v702 = vld [vmem:[#allocation2 + $0x18] sm:$0xff]
        %v703 = vld [vmem:[%s337] sm:$0xff]
        %v704 = vld [vmem:[%s337 + $0x8] sm:$0xff]
        %v705 = vld [vmem:[%s337 + $0x10] sm:$0xff]
        %v706 = vld [vmem:[%s337 + $0x18] sm:$0xff]
        %v707 = vld [vmem:[%s337 + $0x20] sm:$0xff]
        %v708 = vld [vmem:[%s337 + $0x28] sm:$0xff]
        %v709 = vld [vmem:[%s337 + $0x30] sm:$0xff]
        %v710 = vld [vmem:[%s337 + $0x38] sm:$0xff]
        %v711 = vld [vmem:[%s337 + $0x40] sm:$0xff]
        %v712 = vld [vmem:[%s337 + $0x48] sm:$0xff]
        %v713 = vld [vmem:[%s337 + $0x50] sm:$0xff]
        %v714 = vld [vmem:[%s337 + $0x58] sm:$0xff]
        %v715 = vld [vmem:[%s337 + $0x60] sm:$0xff]
        %v716 = vld [vmem:[%s337 + $0x68] sm:$0xff]
        %v717 = vld [vmem:[%s337 + $0x70] sm:$0xff]
        %v718 = vld [vmem:[%s337 + $0x78] sm:$0xff]
        %v719 = vld [vmem:[%s337 + $0x80] sm:$0xff]
        %v720 = vld [vmem:[%s337 + $0x88] sm:$0xff]
        %v721 = vld [vmem:[%s337 + $0x90] sm:$0xff]
        %v722 = vld [vmem:[%s337 + $0x98] sm:$0xff]
        %v723 = vld [vmem:[%s337 + $0xa0] sm:$0xff]
        %v724 = vld [vmem:[%s337 + $0xa8] sm:$0xff]
        %v725 = vld [vmem:[%s337 + $0xb0] sm:$0xff]
        %v726 = vld [vmem:[%s337 + $0xb8] sm:$0xff]
        %v727 = vld [vmem:[%s337 + $0xc0] sm:$0xff]
        %v728 = vld [vmem:[%s337 + $0xc8] sm:$0xff]
        %v729 = vld [vmem:[%s337 + $0xd0] sm:$0xff]
        %v730 = vld [vmem:[%s337 + $0xd8] sm:$0xff]
        %v731 = vld [vmem:[%s337 + $0xe0] sm:$0xff]
        %v732 = vld [vmem:[%s337 + $0xe8] sm:$0xff]
        %v733 = vld [vmem:[%s337 + $0xf0] sm:$0xff]
        %v734 = vld [vmem:[%s337 + $0xf8] sm:$0xff]
        %v735 = vld [vmem:[%s337 + $0x100] sm:$0xff]
        %v736 = vld [vmem:[%s337 + $0x108] sm:$0xff]
        %v737 = vld [vmem:[%s337 + $0x110] sm:$0xff]
        %v738 = vld [vmem:[%s337 + $0x118] sm:$0xff]
        %v739 = vld [vmem:[%s337 + $0x120] sm:$0xff]
        %v740 = vld [vmem:[%s337 + $0x128] sm:$0xff]
        %v741 = vld [vmem:[%s337 + $0x130] sm:$0xff]
        %v742 = vld [vmem:[%s337 + $0x138] sm:$0xff]
        %v743 = vld [vmem:[%s337 + $0x140] sm:$0xff]
        %v744 = vld [vmem:[%s337 + $0x148] sm:$0xff]
        %v745 = vld [vmem:[%s337 + $0x150] sm:$0xff]
        %v746 = vld [vmem:[%s337 + $0x158] sm:$0xff]
        %v747 = vld [vmem:[%s337 + $0x160] sm:$0xff]
        %v748 = vld [vmem:[%s337 + $0x168] sm:$0xff]
        %v749 = vld [vmem:[%s337 + $0x170] sm:$0xff]
        %v750 = vld [vmem:[%s337 + $0x178] sm:$0xff]
        %v751 = vld [vmem:[%s337 + $0x180] sm:$0xff]
        %v752 = vld [vmem:[%s337 + $0x188] sm:$0xff]
        %v753 = vld [vmem:[%s337 + $0x190] sm:$0xff]
        %v754 = vld [vmem:[%s337 + $0x198] sm:$0xff]
        %v755 = vld [vmem:[%s337 + $0x1a0] sm:$0xff]
        %v756 = vld [vmem:[%s337 + $0x1a8] sm:$0xff]
        %v757 = vld [vmem:[%s337 + $0x1b0] sm:$0xff]
        %v758 = vld [vmem:[%s337 + $0x1b8] sm:$0xff]
        %v759 = vld [vmem:[%s337 + $0x1c0] sm:$0xff]
        %v760 = vld [vmem:[%s337 + $0x1c8] sm:$0xff]
        %v761 = vld [vmem:[%s337 + $0x1d0] sm:$0xff]
        %v762 = vld [vmem:[%s337 + $0x1d8] sm:$0xff]
        %v763 = vld [vmem:[%s337 + $0x1e0] sm:$0xff]
        %v764 = vld [vmem:[%s337 + $0x1e8] sm:$0xff]
        %v765 = vld [vmem:[%s337 + $0x1f0] sm:$0xff]
        %v766 = vld [vmem:[%s337 + $0x1f8] sm:$0xff]
        %v767 = vld [vmem:[%s337 + $0x200] sm:$0xff]
        %v768 = vld [vmem:[%s337 + $0x208] sm:$0xff]
        %v769 = vld [vmem:[%s337 + $0x210] sm:$0xff]
        %v770 = vld [vmem:[%s337 + $0x218] sm:$0xff]
        %v771 = vld [vmem:[%s337 + $0x220] sm:$0xff]
        %v772 = vld [vmem:[%s337 + $0x228] sm:$0xff]
        %v773 = vld [vmem:[%s337 + $0x230] sm:$0xff]
        %v774 = vld [vmem:[%s337 + $0x238] sm:$0xff]
        %v775 = vld [vmem:[%s337 + $0x240] sm:$0xff]
        %v776 = vld [vmem:[%s337 + $0x248] sm:$0xff]
        %v777 = vld [vmem:[%s337 + $0x250] sm:$0xff]
        %v778 = vld [vmem:[%s337 + $0x258] sm:$0xff]
        %v779 = vld [vmem:[%s337 + $0x260] sm:$0xff]
        %v780 = vld [vmem:[%s337 + $0x268] sm:$0xff]
        %v781 = vld [vmem:[%s337 + $0x270] sm:$0xff]
        %v782 = vld [vmem:[%s337 + $0x278] sm:$0xff]
        %v783 = vld [vmem:[%s337 + $0x280] sm:$0xff]
        %v784 = vld [vmem:[%s337 + $0x288] sm:$0xff]
        %v785 = vld [vmem:[%s337 + $0x290] sm:$0xff]
        %v786 = vld [vmem:[%s337 + $0x298] sm:$0xff]
        %v787 = vld [vmem:[%s337 + $0x2a0] sm:$0xff]
        %v788 = vld [vmem:[%s337 + $0x2a8] sm:$0xff]
        %v789 = vld [vmem:[%s337 + $0x2b0] sm:$0xff]
        %v790 = vld [vmem:[%s337 + $0x2b8] sm:$0xff]
        %v791 = vld [vmem:[%s337 + $0x2c0] sm:$0xff]
        %v792 = vld [vmem:[%s337 + $0x2c8] sm:$0xff]
        %v793 = vld [vmem:[%s337 + $0x2d0] sm:$0xff]
        %v794 = vld [vmem:[%s337 + $0x2d8] sm:$0xff]
        %v795 = vld [vmem:[%s337 + $0x2e0] sm:$0xff]
        %v796 = vld [vmem:[%s337 + $0x2e8] sm:$0xff]
        %v797 = vld [vmem:[%s337 + $0x2f0] sm:$0xff]
        %v798 = vld [vmem:[%s337 + $0x2f8] sm:$0xff]
        %v799 = vld [vmem:[%s337 + $0x300] sm:$0xff]
        %v800 = vld [vmem:[%s337 + $0x308] sm:$0xff]
        %v801 = vld [vmem:[%s337 + $0x310] sm:$0xff]
        %v802 = vld [vmem:[%s337 + $0x318] sm:$0xff]
        %v803 = vld [vmem:[%s337 + $0x320] sm:$0xff]
        %v804 = vld [vmem:[%s337 + $0x328] sm:$0xff]
        %v805 = vld [vmem:[%s337 + $0x330] sm:$0xff]
        %v806 = vld [vmem:[%s337 + $0x338] sm:$0xff]
        %v807 = vld [vmem:[%s337 + $0x340] sm:$0xff]
        %v808 = vld [vmem:[%s337 + $0x348] sm:$0xff]
        %v809 = vld [vmem:[%s337 + $0x350] sm:$0xff]
        %v810 = vld [vmem:[%s337 + $0x358] sm:$0xff]
        %v811 = vld [vmem:[%s337 + $0x360] sm:$0xff]
        %v812 = vld [vmem:[%s337 + $0x368] sm:$0xff]
        %v813 = vld [vmem:[%s337 + $0x370] sm:$0xff]
        %v814 = vld [vmem:[%s337 + $0x378] sm:$0xff]
        %v815 = vld [vmem:[%s337 + $0x380] sm:$0xff]
        %v816 = vld [vmem:[%s337 + $0x388] sm:$0xff]
        %v817 = vld [vmem:[%s337 + $0x390] sm:$0xff]
        %v818 = vld [vmem:[%s337 + $0x398] sm:$0xff]
        %v819 = vld [vmem:[%s337 + $0x3a0] sm:$0xff]
        %v820 = vld [vmem:[%s337 + $0x3a8] sm:$0xff]
        %v821 = vld [vmem:[%s337 + $0x3b0] sm:$0xff]
        %v822 = vld [vmem:[%s337 + $0x3b8] sm:$0xff]
        %v823 = vld [vmem:[%s337 + $0x3c0] sm:$0xff]
        %v824 = vld [vmem:[%s337 + $0x3c8] sm:$0xff]
        %v825 = vld [vmem:[%s337 + $0x3d0] sm:$0xff]
        %v826 = vld [vmem:[%s337 + $0x3d8] sm:$0xff]
        %v827 = vld [vmem:[%s337 + $0x3e0] sm:$0xff]
        %v828 = vld [vmem:[%s337 + $0x3e8] sm:$0xff]
        %v829 = vld [vmem:[%s337 + $0x3f0] sm:$0xff]
        %v830 = vld [vmem:[%s337 + $0x3f8] sm:$0xff]
        %v831 = vld [vmem:[%s337 + $0x400] sm:$0xff]
        %v832 = vld [vmem:[%s337 + $0x408] sm:$0xff]
        %v833 = vld [vmem:[%s337 + $0x410] sm:$0xff]
        %v834 = vld [vmem:[%s337 + $0x418] sm:$0xff]
        %v835 = vld [vmem:[%s337 + $0x420] sm:$0xff]
        %v836 = vld [vmem:[%s337 + $0x428] sm:$0xff]
        %v837 = vld [vmem:[%s337 + $0x430] sm:$0xff]
        %v838 = vld [vmem:[%s337 + $0x438] sm:$0xff]
        %v839 = vld [vmem:[%s337 + $0x440] sm:$0xff]
        %v840 = vld [vmem:[%s337 + $0x448] sm:$0xff]
        %v841 = vld [vmem:[%s337 + $0x450] sm:$0xff]
        %v842 = vld [vmem:[%s337 + $0x458] sm:$0xff]
        %v843 = vld [vmem:[%s337 + $0x460] sm:$0xff]
        %v844 = vld [vmem:[%s337 + $0x468] sm:$0xff]
        %v845 = vld [vmem:[%s337 + $0x470] sm:$0xff]
        %v846 = vld [vmem:[%s337 + $0x478] sm:$0xff]
        %v847 = vld [vmem:[%s337 + $0x480] sm:$0xff]
        %v848 = vld [vmem:[%s337 + $0x488] sm:$0xff]
        %v849 = vld [vmem:[%s337 + $0x490] sm:$0xff]
        %v850 = vld [vmem:[%s337 + $0x498] sm:$0xff]
        %v851 = vld [vmem:[%s337 + $0x4a0] sm:$0xff]
        %v852 = vld [vmem:[%s337 + $0x4a8] sm:$0xff]
        %v853 = vld [vmem:[%s337 + $0x4b0] sm:$0xff]
        %v854 = vld [vmem:[%s337 + $0x4b8] sm:$0xff]
        %v855 = vld [vmem:[%s337 + $0x4c0] sm:$0xff]
        %v856 = vld [vmem:[%s337 + $0x4c8] sm:$0xff]
        %v857 = vld [vmem:[%s337 + $0x4d0] sm:$0xff]
        %v858 = vld [vmem:[%s337 + $0x4d8] sm:$0xff]
        %v859 = vld [vmem:[%s337 + $0x4e0] sm:$0xff]
        %v860 = vld [vmem:[%s337 + $0x4e8] sm:$0xff]
        %v861 = vld [vmem:[%s337 + $0x4f0] sm:$0xff]
        %v862 = vld [vmem:[%s337 + $0x4f8] sm:$0xff]
        %v863 = vld [vmem:[%s337 + $0x500] sm:$0xff]
        %v864 = vld [vmem:[%s337 + $0x508] sm:$0xff]
        %v865 = vld [vmem:[%s337 + $0x510] sm:$0xff]
        %v866 = vld [vmem:[%s337 + $0x518] sm:$0xff]
        %v867 = vld [vmem:[%s337 + $0x520] sm:$0xff]
        %v868 = vld [vmem:[%s337 + $0x528] sm:$0xff]
        %v869 = vld [vmem:[%s337 + $0x530] sm:$0xff]
        %v870 = vld [vmem:[%s337 + $0x538] sm:$0xff]
        %v871 = vld [vmem:[%s337 + $0x540] sm:$0xff]
        %v872 = vld [vmem:[%s337 + $0x548] sm:$0xff]
        %v873 = vld [vmem:[%s337 + $0x550] sm:$0xff]
        %v874 = vld [vmem:[%s337 + $0x558] sm:$0xff]
        %v875 = vld [vmem:[%s337 + $0x560] sm:$0xff]
        %v876 = vld [vmem:[%s337 + $0x568] sm:$0xff]
        %v877 = vld [vmem:[%s337 + $0x570] sm:$0xff]
        %v878 = vld [vmem:[%s337 + $0x578] sm:$0xff]
        %v879 = vld [vmem:[%s337 + $0x580] sm:$0xff]
        %v880 = vld [vmem:[%s337 + $0x588] sm:$0xff]
        %v881 = vld [vmem:[%s337 + $0x590] sm:$0xff]
        %v882 = vld [vmem:[%s337 + $0x598] sm:$0xff]
        %v883 = vld [vmem:[%s337 + $0x5a0] sm:$0xff]
        %v884 = vld [vmem:[%s337 + $0x5a8] sm:$0xff]
        %v885 = vld [vmem:[%s337 + $0x5b0] sm:$0xff]
        %v886 = vld [vmem:[%s337 + $0x5b8] sm:$0xff]
        %v887 = vld [vmem:[%s337 + $0x5c0] sm:$0xff]
        %v888 = vld [vmem:[%s337 + $0x5c8] sm:$0xff]
        %v889 = vld [vmem:[%s337 + $0x5d0] sm:$0xff]
        %v890 = vld [vmem:[%s337 + $0x5d8] sm:$0xff]
        %v891 = vld [vmem:[%s337 + $0x5e0] sm:$0xff]
        %v892 = vld [vmem:[%s337 + $0x5e8] sm:$0xff]
        %v893 = vld [vmem:[%s337 + $0x5f0] sm:$0xff]
        %v894 = vld [vmem:[%s337 + $0x5f8] sm:$0xff]
        %v895 = vld [vmem:[%s337 + $0x600] sm:$0xff]
        %v896 = vld [vmem:[%s337 + $0x608] sm:$0xff]
        %v897 = vld [vmem:[%s337 + $0x610] sm:$0xff]
        %v898 = vld [vmem:[%s337 + $0x618] sm:$0xff]
        %v899 = vld [vmem:[%s337 + $0x620] sm:$0xff]
        %v900 = vld [vmem:[%s337 + $0x628] sm:$0xff]
        %v901 = vld [vmem:[%s337 + $0x630] sm:$0xff]
        %v902 = vld [vmem:[%s337 + $0x638] sm:$0xff]
        %v903 = vld [vmem:[%s337 + $0x640] sm:$0xff]
        %v904 = vld [vmem:[%s337 + $0x648] sm:$0xff]
        %v905 = vld [vmem:[%s337 + $0x650] sm:$0xff]
        %v906 = vld [vmem:[%s337 + $0x658] sm:$0xff]
        %v907 = vld [vmem:[%s337 + $0x660] sm:$0xff]
        %v908 = vld [vmem:[%s337 + $0x668] sm:$0xff]
        %v909 = vld [vmem:[%s337 + $0x670] sm:$0xff]
        %v910 = vld [vmem:[%s337 + $0x678] sm:$0xff]
        %v911 = vld [vmem:[%s337 + $0x680] sm:$0xff]
        %v912 = vld [vmem:[%s337 + $0x688] sm:$0xff]
        %v913 = vld [vmem:[%s337 + $0x690] sm:$0xff]
        %v914 = vld [vmem:[%s337 + $0x698] sm:$0xff]
        %v915 = vld [vmem:[%s337 + $0x6a0] sm:$0xff]
        %v916 = vld [vmem:[%s337 + $0x6a8] sm:$0xff]
        %v917 = vld [vmem:[%s337 + $0x6b0] sm:$0xff]
        %v918 = vld [vmem:[%s337 + $0x6b8] sm:$0xff]
        %v919 = vld [vmem:[%s337 + $0x6c0] sm:$0xff]
        %v920 = vld [vmem:[%s337 + $0x6c8] sm:$0xff]
        %v921 = vld [vmem:[%s337 + $0x6d0] sm:$0xff]
        %v922 = vld [vmem:[%s337 + $0x6d8] sm:$0xff]
        %v923 = vld [vmem:[%s337 + $0x6e0] sm:$0xff]
        %v924 = vld [vmem:[%s337 + $0x6e8] sm:$0xff]
        %v925 = vld [vmem:[%s337 + $0x6f0] sm:$0xff]
        %v926 = vld [vmem:[%s337 + $0x6f8] sm:$0xff]
        %v927 = vld [vmem:[%s337 + $0x700] sm:$0xff]
        %v928 = vld [vmem:[%s337 + $0x708] sm:$0xff]
        %v929 = vld [vmem:[%s337 + $0x710] sm:$0xff]
        %v930 = vld [vmem:[%s337 + $0x718] sm:$0xff]
        %v931 = vld [vmem:[%s337 + $0x720] sm:$0xff]
        %v932 = vld [vmem:[%s337 + $0x728] sm:$0xff]
        %v933 = vld [vmem:[%s337 + $0x730] sm:$0xff]
        %v934 = vld [vmem:[%s337 + $0x738] sm:$0xff]
        %v935 = vld [vmem:[%s337 + $0x740] sm:$0xff]
        %v936 = vld [vmem:[%s337 + $0x748] sm:$0xff]
        %v937 = vld [vmem:[%s337 + $0x750] sm:$0xff]
        %v938 = vld [vmem:[%s337 + $0x758] sm:$0xff]
        %v939 = vld [vmem:[%s337 + $0x760] sm:$0xff]
        %v940 = vld [vmem:[%s337 + $0x768] sm:$0xff]
        %v941 = vld [vmem:[%s337 + $0x770] sm:$0xff]
        %v942 = vld [vmem:[%s337 + $0x778] sm:$0xff]
        %v943 = vld [vmem:[%s337 + $0x780] sm:$0xff]
        %v944 = vld [vmem:[%s337 + $0x788] sm:$0xff]
        %v945 = vld [vmem:[%s337 + $0x790] sm:$0xff]
        %v946 = vld [vmem:[%s337 + $0x798] sm:$0xff]
        %v947 = vld [vmem:[%s337 + $0x7a0] sm:$0xff]
        %v948 = vld [vmem:[%s337 + $0x7a8] sm:$0xff]
        %v949 = vld [vmem:[%s337 + $0x7b0] sm:$0xff]
        %v950 = vld [vmem:[%s337 + $0x7b8] sm:$0xff]
        %v951 = vld [vmem:[%s337 + $0x7c0] sm:$0xff]
        %v952 = vld [vmem:[%s337 + $0x7c8] sm:$0xff]
        %v953 = vld [vmem:[%s337 + $0x7d0] sm:$0xff]
        %v954 = vld [vmem:[%s337 + $0x7d8] sm:$0xff]
        %v955 = vld [vmem:[%s337 + $0x7e0] sm:$0xff]
        %v956 = vld [vmem:[%s337 + $0x7e8] sm:$0xff]
        %v957 = vld [vmem:[%s337 + $0x7f0] sm:$0xff]
        %v958 = vld [vmem:[%s337 + $0x7f8] sm:$0xff]
        %v959 = vld [vmem:[%s337 + $0x800] sm:$0xff]
        %v960 = vld [vmem:[%s337 + $0x808] sm:$0xff]
        %v961 = vld [vmem:[%s337 + $0x810] sm:$0xff]
        %v962 = vld [vmem:[%s337 + $0x818] sm:$0xff]
        %v963 = vld [vmem:[%s337 + $0x820] sm:$0xff]
        %v964 = vld [vmem:[%s337 + $0x828] sm:$0xff]
        %v965 = vld [vmem:[%s337 + $0x830] sm:$0xff]
        %v966 = vld [vmem:[%s337 + $0x838] sm:$0xff]
        %v967 = vld [vmem:[%s337 + $0x840] sm:$0xff]
        %v968 = vld [vmem:[%s337 + $0x848] sm:$0xff]
        %v969 = vld [vmem:[%s337 + $0x850] sm:$0xff]
        %v970 = vld [vmem:[%s337 + $0x858] sm:$0xff]
        %v971 = vld [vmem:[%s337 + $0x860] sm:$0xff]
        %v972 = vld [vmem:[%s337 + $0x868] sm:$0xff]
        %v973 = vld [vmem:[%s337 + $0x870] sm:$0xff]
        %v974 = vld [vmem:[%s337 + $0x878] sm:$0xff]
        %v975 = vld [vmem:[%s337 + $0x880] sm:$0xff]
        %v976 = vld [vmem:[%s337 + $0x888] sm:$0xff]
        %v977 = vld [vmem:[%s337 + $0x890] sm:$0xff]
        %v978 = vld [vmem:[%s337 + $0x898] sm:$0xff]
        %v979 = vld [vmem:[%s337 + $0x8a0] sm:$0xff]
        %v980 = vld [vmem:[%s337 + $0x8a8] sm:$0xff]
        %v981 = vld [vmem:[%s337 + $0x8b0] sm:$0xff]
        %v982 = vld [vmem:[%s337 + $0x8b8] sm:$0xff]
        %v983 = vld [vmem:[%s337 + $0x8c0] sm:$0xff]
        %v984 = vld [vmem:[%s337 + $0x8c8] sm:$0xff]
        %v985 = vld [vmem:[%s337 + $0x8d0] sm:$0xff]
        %v986 = vld [vmem:[%s337 + $0x8d8] sm:$0xff]
        %v987 = vld [vmem:[%s337 + $0x8e0] sm:$0xff]
        %v988 = vld [vmem:[%s337 + $0x8e8] sm:$0xff]
        %v989 = vld [vmem:[%s337 + $0x8f0] sm:$0xff]
        %v990 = vld [vmem:[%s337 + $0x8f8] sm:$0xff]
        %v991 = vld [vmem:[%s337 + $0x900] sm:$0xff]
        %v992 = vld [vmem:[%s337 + $0x908] sm:$0xff]
        %v993 = vld [vmem:[%s337 + $0x910] sm:$0xff]
        %v994 = vld [vmem:[%s337 + $0x918] sm:$0xff]
        %v995 = vld [vmem:[%s337 + $0x920] sm:$0xff]
        %v996 = vld [vmem:[%s337 + $0x928] sm:$0xff]
        %v997 = vld [vmem:[%s337 + $0x930] sm:$0xff]
        %v998 = vld [vmem:[%s337 + $0x938] sm:$0xff]
        %v999 = vld [vmem:[%s337 + $0x940] sm:$0xff]
        %v1000 = vld [vmem:[%s337 + $0x948] sm:$0xff]
        %v1001 = vld [vmem:[%s337 + $0x950] sm:$0xff]
        %v1002 = vld [vmem:[%s337 + $0x958] sm:$0xff]
        %v1003 = vld [vmem:[%s337 + $0x960] sm:$0xff]
        %v1004 = vld [vmem:[%s337 + $0x968] sm:$0xff]
        %v1005 = vld [vmem:[%s337 + $0x970] sm:$0xff]
        %v1006 = vld [vmem:[%s337 + $0x978] sm:$0xff]
        %v1007 = vld [vmem:[%s337 + $0x980] sm:$0xff]
        %v1008 = vld [vmem:[%s337 + $0x988] sm:$0xff]
        %v1009 = vld [vmem:[%s337 + $0x990] sm:$0xff]
        %v1010 = vld [vmem:[%s337 + $0x998] sm:$0xff]
        %v1011 = vld [vmem:[%s337 + $0x9a0] sm:$0xff]
        %v1012 = vld [vmem:[%s337 + $0x9a8] sm:$0xff]
        %v1013 = vld [vmem:[%s337 + $0x9b0] sm:$0xff]
        %v1014 = vld [vmem:[%s337 + $0x9b8] sm:$0xff]
        %v1015 = vld [vmem:[%s337 + $0x9c0] sm:$0xff]
        %v1016 = vld [vmem:[%s337 + $0x9c8] sm:$0xff]
        %v1017 = vld [vmem:[%s337 + $0x9d0] sm:$0xff]
        %v1018 = vld [vmem:[%s337 + $0x9d8] sm:$0xff]
        %v1019 = vld [vmem:[%s337 + $0x9e0] sm:$0xff]
        %v1020 = vld [vmem:[%s337 + $0x9e8] sm:$0xff]
        %v1021 = vld [vmem:[%s337 + $0x9f0] sm:$0xff]
        %v1022 = vld [vmem:[%s337 + $0x9f8] sm:$0xff]
        %v1023 = vld [vmem:[%s337 + $0xa00] sm:$0xff]
        %v1024 = vld [vmem:[%s337 + $0xa08] sm:$0xff]
        %v1025 = vld [vmem:[%s337 + $0xa10] sm:$0xff]
        %v1026 = vld [vmem:[%s337 + $0xa18] sm:$0xff]
        %v1027 = vld [vmem:[%s337 + $0xa20] sm:$0xff]
        %v1028 = vld [vmem:[%s337 + $0xa28] sm:$0xff]
        %v1029 = vld [vmem:[%s337 + $0xa30] sm:$0xff]
        %v1030 = vld [vmem:[%s337 + $0xa38] sm:$0xff]
        %v1031 = vld [vmem:[%s337 + $0xa40] sm:$0xff]
        %v1032 = vld [vmem:[%s337 + $0xa48] sm:$0xff]
        %v1033 = vld [vmem:[%s337 + $0xa50] sm:$0xff]
        %v1034 = vld [vmem:[%s337 + $0xa58] sm:$0xff]
        %v1035 = vld [vmem:[%s337 + $0xa60] sm:$0xff]
        %v1036 = vld [vmem:[%s337 + $0xa68] sm:$0xff]
        %v1037 = vld [vmem:[%s337 + $0xa70] sm:$0xff]
        %v1038 = vld [vmem:[%s337 + $0xa78] sm:$0xff]
        %v1039 = vld [vmem:[%s337 + $0xa80] sm:$0xff]
        %v1040 = vld [vmem:[%s337 + $0xa88] sm:$0xff]
        %v1041 = vld [vmem:[%s337 + $0xa90] sm:$0xff]
        %v1042 = vld [vmem:[%s337 + $0xa98] sm:$0xff]
        %v1043 = vld [vmem:[%s337 + $0xaa0] sm:$0xff]
        %v1044 = vld [vmem:[%s337 + $0xaa8] sm:$0xff]
        %v1045 = vld [vmem:[%s337 + $0xab0] sm:$0xff]
        %v1046 = vld [vmem:[%s337 + $0xab8] sm:$0xff]
        %v1047 = vld [vmem:[%s337 + $0xac0] sm:$0xff]
        %v1048 = vld [vmem:[%s337 + $0xac8] sm:$0xff]
        %v1049 = vld [vmem:[%s337 + $0xad0] sm:$0xff]
        %v1050 = vld [vmem:[%s337 + $0xad8] sm:$0xff]
        %v1051 = vld [vmem:[%s337 + $0xae0] sm:$0xff]
        %v1052 = vld [vmem:[%s337 + $0xae8] sm:$0xff]
        %v1053 = vld [vmem:[%s337 + $0xaf0] sm:$0xff]
        %v1054 = vld [vmem:[%s337 + $0xaf8] sm:$0xff]
        %v1055 = vld [vmem:[%s337 + $0xb00] sm:$0xff]
        %v1056 = vld [vmem:[%s337 + $0xb08] sm:$0xff]
        %v1057 = vld [vmem:[%s337 + $0xb10] sm:$0xff]
        %v1058 = vld [vmem:[%s337 + $0xb18] sm:$0xff]
        %v1059 = vld [vmem:[%s337 + $0xb20] sm:$0xff]
        %v1060 = vld [vmem:[%s337 + $0xb28] sm:$0xff]
        %v1061 = vld [vmem:[%s337 + $0xb30] sm:$0xff]
        %v1062 = vld [vmem:[%s337 + $0xb38] sm:$0xff]
        %v1063 = vld [vmem:[%s337 + $0xb40] sm:$0xff]
        %v1064 = vld [vmem:[%s337 + $0xb48] sm:$0xff]
        %v1065 = vld [vmem:[%s337 + $0xb50] sm:$0xff]
        %v1066 = vld [vmem:[%s337 + $0xb58] sm:$0xff]
        %v1067 = vld [vmem:[%s337 + $0xb60] sm:$0xff]
        %v1068 = vld [vmem:[%s337 + $0xb68] sm:$0xff]
        %v1069 = vld [vmem:[%s337 + $0xb70] sm:$0xff]
        %v1070 = vld [vmem:[%s337 + $0xb78] sm:$0xff]
        %v1071 = vld [vmem:[%s337 + $0xb80] sm:$0xff]
        %v1072 = vld [vmem:[%s337 + $0xb88] sm:$0xff]
        %v1073 = vld [vmem:[%s337 + $0xb90] sm:$0xff]
        %v1074 = vld [vmem:[%s337 + $0xb98] sm:$0xff]
        %v1075 = vld [vmem:[%s337 + $0xba0] sm:$0xff]
        %v1076 = vld [vmem:[%s337 + $0xba8] sm:$0xff]
        %v1077 = vld [vmem:[%s337 + $0xbb0] sm:$0xff]
        %v1078 = vld [vmem:[%s337 + $0xbb8] sm:$0xff]
        %v1079 = vld [vmem:[%s337 + $0xbc0] sm:$0xff]
        %v1080 = vld [vmem:[%s337 + $0xbc8] sm:$0xff]
        %v1081 = vld [vmem:[%s337 + $0xbd0] sm:$0xff]
        %v1082 = vld [vmem:[%s337 + $0xbd8] sm:$0xff]
        %v1083 = vld [vmem:[%s337 + $0xbe0] sm:$0xff]
        %v1084 = vld [vmem:[%s337 + $0xbe8] sm:$0xff]
        %v1085 = vld [vmem:[%s337 + $0xbf0] sm:$0xff]
        %v1086 = vld [vmem:[%s337 + $0xbf8] sm:$0xff]
        %v1087 = vld [vmem:[%s337 + $0xc00] sm:$0xff]
        %v1088 = vld [vmem:[%s337 + $0xc08] sm:$0xff]
        %v1089 = vld [vmem:[%s337 + $0xc10] sm:$0xff]
        %v1090 = vld [vmem:[%s337 + $0xc18] sm:$0xff]
        %v1091 = vld [vmem:[%s337 + $0xc20] sm:$0xff]
        %v1092 = vld [vmem:[%s337 + $0xc28] sm:$0xff]
        %v1093 = vld [vmem:[%s337 + $0xc30] sm:$0xff]
        %v1094 = vld [vmem:[%s337 + $0xc38] sm:$0xff]
        %v1095 = vld [vmem:[%s337 + $0xc40] sm:$0xff]
        %v1096 = vld [vmem:[%s337 + $0xc48] sm:$0xff]
        %v1097 = vld [vmem:[%s337 + $0xc50] sm:$0xff]
        %v1098 = vld [vmem:[%s337 + $0xc58] sm:$0xff]
        %v1099 = vld [vmem:[%s337 + $0xc60] sm:$0xff]
        %v1100 = vld [vmem:[%s337 + $0xc68] sm:$0xff]
        %v1101 = vld [vmem:[%s337 + $0xc70] sm:$0xff]
        %v1102 = vld [vmem:[%s337 + $0xc78] sm:$0xff]
        %v1103 = vld [vmem:[%s337 + $0xc80] sm:$0xff]
        %v1104 = vld [vmem:[%s337 + $0xc88] sm:$0xff]
        %v1105 = vld [vmem:[%s337 + $0xc90] sm:$0xff]
        %v1106 = vld [vmem:[%s337 + $0xc98] sm:$0xff]
        %v1107 = vld [vmem:[%s337 + $0xca0] sm:$0xff]
        %v1108 = vld [vmem:[%s337 + $0xca8] sm:$0xff]
        %v1109 = vld [vmem:[%s337 + $0xcb0] sm:$0xff]
        %v1110 = vld [vmem:[%s337 + $0xcb8] sm:$0xff]
        %v1111 = vld [vmem:[%s337 + $0xcc0] sm:$0xff]
        %v1112 = vld [vmem:[%s337 + $0xcc8] sm:$0xff]
        %v1113 = vld [vmem:[%s337 + $0xcd0] sm:$0xff]
        %v1114 = vld [vmem:[%s337 + $0xcd8] sm:$0xff]
        %v1115 = vld [vmem:[%s337 + $0xce0] sm:$0xff]
        %v1116 = vld [vmem:[%s337 + $0xce8] sm:$0xff]
        %v1117 = vld [vmem:[%s337 + $0xcf0] sm:$0xff]
        %v1118 = vld [vmem:[%s337 + $0xcf8] sm:$0xff]
        %v1119 = vld [vmem:[%s337 + $0xd00] sm:$0xff]
        %v1120 = vld [vmem:[%s337 + $0xd08] sm:$0xff]
        %v1121 = vld [vmem:[%s337 + $0xd10] sm:$0xff]
        %v1122 = vld [vmem:[%s337 + $0xd18] sm:$0xff]
        %v1123 = vld [vmem:[%s337 + $0xd20] sm:$0xff]
        %v1124 = vld [vmem:[%s337 + $0xd28] sm:$0xff]
        %v1125 = vld [vmem:[%s337 + $0xd30] sm:$0xff]
        %v1126 = vld [vmem:[%s337 + $0xd38] sm:$0xff]
        %v1127 = vld [vmem:[%s337 + $0xd40] sm:$0xff]
        %v1128 = vld [vmem:[%s337 + $0xd48] sm:$0xff]
        %v1129 = vld [vmem:[%s337 + $0xd50] sm:$0xff]
        %v1130 = vld [vmem:[%s337 + $0xd58] sm:$0xff]
        %v1131 = vld [vmem:[%s337 + $0xd60] sm:$0xff]
        %v1132 = vld [vmem:[%s337 + $0xd68] sm:$0xff]
        %v1133 = vld [vmem:[%s337 + $0xd70] sm:$0xff]
        %v1134 = vld [vmem:[%s337 + $0xd78] sm:$0xff]
        %v1135 = vld [vmem:[%s337 + $0xd80] sm:$0xff]
        %v1136 = vld [vmem:[%s337 + $0xd88] sm:$0xff]
        %v1137 = vld [vmem:[%s337 + $0xd90] sm:$0xff]
        %v1138 = vld [vmem:[%s337 + $0xd98] sm:$0xff]
        %v1139 = vld [vmem:[%s337 + $0xda0] sm:$0xff]
        %v1140 = vld [vmem:[%s337 + $0xda8] sm:$0xff]
        %v1141 = vld [vmem:[%s337 + $0xdb0] sm:$0xff]
        %v1142 = vld [vmem:[%s337 + $0xdb8] sm:$0xff]
        %v1143 = vld [vmem:[%s337 + $0xdc0] sm:$0xff]
        %v1144 = vld [vmem:[%s337 + $0xdc8] sm:$0xff]
        %v1145 = vld [vmem:[%s337 + $0xdd0] sm:$0xff]
        %v1146 = vld [vmem:[%s337 + $0xdd8] sm:$0xff]
        %v1147 = vld [vmem:[%s337 + $0xde0] sm:$0xff]
        %v1148 = vld [vmem:[%s337 + $0xde8] sm:$0xff]
        %v1149 = vld [vmem:[%s337 + $0xdf0] sm:$0xff]
        %v1150 = vld [vmem:[%s337 + $0xdf8] sm:$0xff]
        %v1151 = vld [vmem:[%s337 + $0xe00] sm:$0xff]
        %v1152 = vld [vmem:[%s337 + $0xe08] sm:$0xff]
        %v1153 = vld [vmem:[%s337 + $0xe10] sm:$0xff]
        %v1154 = vld [vmem:[%s337 + $0xe18] sm:$0xff]
        %v1155 = vld [vmem:[%s337 + $0xe20] sm:$0xff]
        %v1156 = vld [vmem:[%s337 + $0xe28] sm:$0xff]
        %v1157 = vld [vmem:[%s337 + $0xe30] sm:$0xff]
        %v1158 = vld [vmem:[%s337 + $0xe38] sm:$0xff]
        %v1159 = vld [vmem:[%s337 + $0xe40] sm:$0xff]
        %v1160 = vld [vmem:[%s337 + $0xe48] sm:$0xff]
        %v1161 = vld [vmem:[%s337 + $0xe50] sm:$0xff]
        %v1162 = vld [vmem:[%s337 + $0xe58] sm:$0xff]
        %v1163 = vld [vmem:[%s337 + $0xe60] sm:$0xff]
        %v1164 = vld [vmem:[%s337 + $0xe68] sm:$0xff]
        %v1165 = vld [vmem:[%s337 + $0xe70] sm:$0xff]
        %v1166 = vld [vmem:[%s337 + $0xe78] sm:$0xff]
        %v1167 = vld [vmem:[%s337 + $0xe80] sm:$0xff]
        %v1168 = vld [vmem:[%s337 + $0xe88] sm:$0xff]
        %v1169 = vld [vmem:[%s337 + $0xe90] sm:$0xff]
        %v1170 = vld [vmem:[%s337 + $0xe98] sm:$0xff]
        %v1171 = vld [vmem:[%s337 + $0xea0] sm:$0xff]
        %v1172 = vld [vmem:[%s337 + $0xea8] sm:$0xff]
        %v1173 = vld [vmem:[%s337 + $0xeb0] sm:$0xff]
        %v1174 = vld [vmem:[%s337 + $0xeb8] sm:$0xff]
        %v1175 = vld [vmem:[%s337 + $0xec0] sm:$0xff]
        %v1176 = vld [vmem:[%s337 + $0xec8] sm:$0xff]
        %v1177 = vld [vmem:[%s337 + $0xed0] sm:$0xff]
        %v1178 = vld [vmem:[%s337 + $0xed8] sm:$0xff]
        %v1179 = vld [vmem:[%s337 + $0xee0] sm:$0xff]
        %v1180 = vld [vmem:[%s337 + $0xee8] sm:$0xff]
        %v1181 = vld [vmem:[%s337 + $0xef0] sm:$0xff]
        %v1182 = vld [vmem:[%s337 + $0xef8] sm:$0xff]
        %v1183 = vld [vmem:[%s337 + $0xf00] sm:$0xff]
        %v1184 = vld [vmem:[%s337 + $0xf08] sm:$0xff]
        %v1185 = vld [vmem:[%s337 + $0xf10] sm:$0xff]
        %v1186 = vld [vmem:[%s337 + $0xf18] sm:$0xff]
        %v1187 = vld [vmem:[%s337 + $0xf20] sm:$0xff]
        %v1188 = vld [vmem:[%s337 + $0xf28] sm:$0xff]
        %v1189 = vld [vmem:[%s337 + $0xf30] sm:$0xff]
        %v1190 = vld [vmem:[%s337 + $0xf38] sm:$0xff]
        %v1191 = vld [vmem:[%s337 + $0xf40] sm:$0xff]
        %v1192 = vld [vmem:[%s337 + $0xf48] sm:$0xff]
        %v1193 = vld [vmem:[%s337 + $0xf50] sm:$0xff]
        %v1194 = vld [vmem:[%s337 + $0xf58] sm:$0xff]
        %v1195 = vld [vmem:[%s337 + $0xf60] sm:$0xff]
        %v1196 = vld [vmem:[%s337 + $0xf68] sm:$0xff]
        %v1197 = vld [vmem:[%s337 + $0xf70] sm:$0xff]
        %v1198 = vld [vmem:[%s337 + $0xf78] sm:$0xff]
        %v1199 = vld [vmem:[%s337 + $0xf80] sm:$0xff]
        %v1200 = vld [vmem:[%s337 + $0xf88] sm:$0xff]
        %v1201 = vld [vmem:[%s337 + $0xf90] sm:$0xff]
        %v1202 = vld [vmem:[%s337 + $0xf98] sm:$0xff]
        %v1203 = vld [vmem:[%s337 + $0xfa0] sm:$0xff]
        %v1204 = vld [vmem:[%s337 + $0xfa8] sm:$0xff]
        %v1205 = vld [vmem:[%s337 + $0xfb0] sm:$0xff]
        %v1206 = vld [vmem:[%s337 + $0xfb8] sm:$0xff]
        %v1207 = vld [vmem:[%s337 + $0xfc0] sm:$0xff]
        %v1208 = vld [vmem:[%s337 + $0xfc8] sm:$0xff]
        %v1209 = vld [vmem:[%s337 + $0xfd0] sm:$0xff]
        %v1210 = vld [vmem:[%s337 + $0xfd8] sm:$0xff]
        %v1211 = vld [vmem:[%s337 + $0xfe0] sm:$0xff]
        %v1212 = vld [vmem:[%s337 + $0xfe8] sm:$0xff]
        %v1213 = vld [vmem:[%s337 + $0xff0] sm:$0xff]
        %v1214 = vld [vmem:[%s337 + $0xff8] sm:$0xff]
        %s1215 = sshra.s32 %s698, 7
        %s1216 = sand.u32 %s698, 127
        %s1217 = scalar_lea.vmem [#allocation11], %s1215
        %v1218 = vld [vmem:[%s1217] sm:$0xff]
        %v1220 = vlaneseq
        %v1221 = vshrl.u32 %v1220, 7
        %v1222 = vsub.s32 0, %v1221
        %v1223 = vrot.slane %v1218, %v1222
        %v1224 = vlaneseq
        %v1225 = vshrl.u32 %v1224, 7
        %v1226 = vsub.s32 1, %v1225
        %v1227 = vrot.slane %v1218, %v1226
        %v1228 = vlaneseq
        %v1229 = vshrl.u32 %v1228, 7
        %v1230 = vsub.s32 2, %v1229
        %v1231 = vrot.slane %v1218, %v1230
        %v1232 = vlaneseq
        %v1233 = vshrl.u32 %v1232, 7
        %v1234 = vsub.s32 3, %v1233
        %v1235 = vrot.slane %v1218, %v1234
        %v1236 = vlaneseq
        %v1237 = vshrl.u32 %v1236, 7
        %v1238 = vsub.s32 4, %v1237
        %v1239 = vrot.slane %v1218, %v1238
        %v1240 = vlaneseq
        %v1241 = vshrl.u32 %v1240, 7
        %v1242 = vsub.s32 5, %v1241
        %v1243 = vrot.slane %v1218, %v1242
        %v1244 = vlaneseq
        %v1245 = vshrl.u32 %v1244, 7
        %v1246 = vsub.s32 6, %v1245
        %v1247 = vrot.slane %v1218, %v1246
        %v1248 = vlaneseq
        %v1249 = vshrl.u32 %v1248, 7
        %v1250 = vsub.s32 7, %v1249
        %v1251 = vrot.slane %v1218, %v1250
        %v1264 = vunpack.c.l.b16 %v699
        %v1265 = vunpack.c.h.b16 %v699
        %v1266 = vunpack.c.l.b16 %v700
        %v1267 = vunpack.c.h.b16 %v700
        %v1268 = vunpack.c.l.b16 %v701
        %v1269 = vunpack.c.h.b16 %v701
        %v1270 = vunpack.c.l.b16 %v702
        %v1271 = vunpack.c.h.b16 %v702
        %v1272 = vpack.c.b16 %v1264, %v1264
        %v1273 = vpack.c.b16 %v1265, %v1265
        %v1274 = vpack.c.b16 %v1266, %v1266
        %v1275 = vpack.c.b16 %v1267, %v1267
        %v1276 = vpack.c.b16 %v1268, %v1268
        %v1277 = vpack.c.b16 %v1269, %v1269
        %v1278 = vpack.c.b16 %v1270, %v1270
        %v1279 = vpack.c.b16 %v1271, %v1271
        %v1800 = vunpack.c.l.b16 %v703
        %v1801 = vunpack.c.h.b16 %v703
        %v1802 = vunpack.c.l.b16 %v704
        %v1803 = vunpack.c.h.b16 %v704
        %v1804 = vunpack.c.l.b16 %v705
        %v1805 = vunpack.c.h.b16 %v705
        %v1806 = vunpack.c.l.b16 %v706
        %v1807 = vunpack.c.h.b16 %v706
        %v1808 = vunpack.c.l.b16 %v707
        %v1809 = vunpack.c.h.b16 %v707
        %v1810 = vunpack.c.l.b16 %v708
        %v1811 = vunpack.c.h.b16 %v708
        %v1812 = vunpack.c.l.b16 %v709
        %v1813 = vunpack.c.h.b16 %v709
        %v1814 = vunpack.c.l.b16 %v710
        %v1815 = vunpack.c.h.b16 %v710
        %v1816 = vunpack.c.l.b16 %v711
        %v1817 = vunpack.c.h.b16 %v711
        %v1818 = vunpack.c.l.b16 %v712
        %v1819 = vunpack.c.h.b16 %v712
        %v1820 = vunpack.c.l.b16 %v713
        %v1821 = vunpack.c.h.b16 %v713
        %v1822 = vunpack.c.l.b16 %v714
        %v1823 = vunpack.c.h.b16 %v714
        %v1824 = vunpack.c.l.b16 %v715
        %v1825 = vunpack.c.h.b16 %v715
        %v1826 = vunpack.c.l.b16 %v716
        %v1827 = vunpack.c.h.b16 %v716
        %v1828 = vunpack.c.l.b16 %v717
        %v1829 = vunpack.c.h.b16 %v717
        %v1830 = vunpack.c.l.b16 %v718
        %v1831 = vunpack.c.h.b16 %v718
        %v1832 = vunpack.c.l.b16 %v719
        %v1833 = vunpack.c.h.b16 %v719
        %v1834 = vunpack.c.l.b16 %v720
        %v1835 = vunpack.c.h.b16 %v720
        %v1836 = vunpack.c.l.b16 %v721
        %v1837 = vunpack.c.h.b16 %v721
        %v1838 = vunpack.c.l.b16 %v722
        %v1839 = vunpack.c.h.b16 %v722
        %v1840 = vunpack.c.l.b16 %v723
        %v1841 = vunpack.c.h.b16 %v723
        %v1842 = vunpack.c.l.b16 %v724
        %v1843 = vunpack.c.h.b16 %v724
        %v1844 = vunpack.c.l.b16 %v725
        %v1845 = vunpack.c.h.b16 %v725
        %v1846 = vunpack.c.l.b16 %v726
        %v1847 = vunpack.c.h.b16 %v726
        %v1848 = vunpack.c.l.b16 %v727
        %v1849 = vunpack.c.h.b16 %v727
        %v1850 = vunpack.c.l.b16 %v728
        %v1851 = vunpack.c.h.b16 %v728
        %v1852 = vunpack.c.l.b16 %v729
        %v1853 = vunpack.c.h.b16 %v729
        %v1854 = vunpack.c.l.b16 %v730
        %v1855 = vunpack.c.h.b16 %v730
        %v1856 = vunpack.c.l.b16 %v731
        %v1857 = vunpack.c.h.b16 %v731
        %v1858 = vunpack.c.l.b16 %v732
        %v1859 = vunpack.c.h.b16 %v732
        %v1860 = vunpack.c.l.b16 %v733
        %v1861 = vunpack.c.h.b16 %v733
        %v1862 = vunpack.c.l.b16 %v734
        %v1863 = vunpack.c.h.b16 %v734
        %v1864 = vunpack.c.l.b16 %v735
        %v1865 = vunpack.c.h.b16 %v735
        %v1866 = vunpack.c.l.b16 %v736
        %v1867 = vunpack.c.h.b16 %v736
        %v1868 = vunpack.c.l.b16 %v737
        %v1869 = vunpack.c.h.b16 %v737
        %v1870 = vunpack.c.l.b16 %v738
        %v1871 = vunpack.c.h.b16 %v738
        %v1872 = vunpack.c.l.b16 %v739
        %v1873 = vunpack.c.h.b16 %v739
        %v1874 = vunpack.c.l.b16 %v740
        %v1875 = vunpack.c.h.b16 %v740
        %v1876 = vunpack.c.l.b16 %v741
        %v1877 = vunpack.c.h.b16 %v741
        %v1878 = vunpack.c.l.b16 %v742
        %v1879 = vunpack.c.h.b16 %v742
        %v1880 = vunpack.c.l.b16 %v743
        %v1881 = vunpack.c.h.b16 %v743
        %v1882 = vunpack.c.l.b16 %v744
        %v1883 = vunpack.c.h.b16 %v744
        %v1884 = vunpack.c.l.b16 %v745
        %v1885 = vunpack.c.h.b16 %v745
        %v1886 = vunpack.c.l.b16 %v746
        %v1887 = vunpack.c.h.b16 %v746
        %v1888 = vunpack.c.l.b16 %v747
        %v1889 = vunpack.c.h.b16 %v747
        %v1890 = vunpack.c.l.b16 %v748
        %v1891 = vunpack.c.h.b16 %v748
        %v1892 = vunpack.c.l.b16 %v749
        %v1893 = vunpack.c.h.b16 %v749
        %v1894 = vunpack.c.l.b16 %v750
        %v1895 = vunpack.c.h.b16 %v750
        %v1896 = vunpack.c.l.b16 %v751
        %v1897 = vunpack.c.h.b16 %v751
        %v1898 = vunpack.c.l.b16 %v752
        %v1899 = vunpack.c.h.b16 %v752
        %v1900 = vunpack.c.l.b16 %v753
        %v1901 = vunpack.c.h.b16 %v753
        %v1902 = vunpack.c.l.b16 %v754
        %v1903 = vunpack.c.h.b16 %v754
        %v1904 = vunpack.c.l.b16 %v755
        %v1905 = vunpack.c.h.b16 %v755
        %v1906 = vunpack.c.l.b16 %v756
        %v1907 = vunpack.c.h.b16 %v756
        %v1908 = vunpack.c.l.b16 %v757
        %v1909 = vunpack.c.h.b16 %v757
        %v1910 = vunpack.c.l.b16 %v758
        %v1911 = vunpack.c.h.b16 %v758
        %v1912 = vunpack.c.l.b16 %v759
        %v1913 = vunpack.c.h.b16 %v759
        %v1914 = vunpack.c.l.b16 %v760
        %v1915 = vunpack.c.h.b16 %v760
        %v1916 = vunpack.c.l.b16 %v761
        %v1917 = vunpack.c.h.b16 %v761
        %v1918 = vunpack.c.l.b16 %v762
        %v1919 = vunpack.c.h.b16 %v762
        %v1920 = vunpack.c.l.b16 %v763
        %v1921 = vunpack.c.h.b16 %v763
        %v1922 = vunpack.c.l.b16 %v764
        %v1923 = vunpack.c.h.b16 %v764
        %v1924 = vunpack.c.l.b16 %v765
        %v1925 = vunpack.c.h.b16 %v765
        %v1926 = vunpack.c.l.b16 %v766
        %v1927 = vunpack.c.h.b16 %v766
        %v1928 = vunpack.c.l.b16 %v767
        %v1929 = vunpack.c.h.b16 %v767
        %v1930 = vunpack.c.l.b16 %v768
        %v1931 = vunpack.c.h.b16 %v768
        %v1932 = vunpack.c.l.b16 %v769
        %v1933 = vunpack.c.h.b16 %v769
        %v1934 = vunpack.c.l.b16 %v770
        %v1935 = vunpack.c.h.b16 %v770
        %v1936 = vunpack.c.l.b16 %v771
        %v1937 = vunpack.c.h.b16 %v771
        %v1938 = vunpack.c.l.b16 %v772
        %v1939 = vunpack.c.h.b16 %v772
        %v1940 = vunpack.c.l.b16 %v773
        %v1941 = vunpack.c.h.b16 %v773
        %v1942 = vunpack.c.l.b16 %v774
        %v1943 = vunpack.c.h.b16 %v774
        %v1944 = vunpack.c.l.b16 %v775
        %v1945 = vunpack.c.h.b16 %v775
        %v1946 = vunpack.c.l.b16 %v776
        %v1947 = vunpack.c.h.b16 %v776
        %v1948 = vunpack.c.l.b16 %v777
        %v1949 = vunpack.c.h.b16 %v777
        %v1950 = vunpack.c.l.b16 %v778
        %v1951 = vunpack.c.h.b16 %v778
        %v1952 = vunpack.c.l.b16 %v779
        %v1953 = vunpack.c.h.b16 %v779
        %v1954 = vunpack.c.l.b16 %v780
        %v1955 = vunpack.c.h.b16 %v780
        %v1956 = vunpack.c.l.b16 %v781
        %v1957 = vunpack.c.h.b16 %v781
        %v1958 = vunpack.c.l.b16 %v782
        %v1959 = vunpack.c.h.b16 %v782
        %v1960 = vunpack.c.l.b16 %v783
        %v1961 = vunpack.c.h.b16 %v783
        %v1962 = vunpack.c.l.b16 %v784
        %v1963 = vunpack.c.h.b16 %v784
        %v1964 = vunpack.c.l.b16 %v785
        %v1965 = vunpack.c.h.b16 %v785
        %v1966 = vunpack.c.l.b16 %v786
        %v1967 = vunpack.c.h.b16 %v786
        %v1968 = vunpack.c.l.b16 %v787
        %v1969 = vunpack.c.h.b16 %v787
        %v1970 = vunpack.c.l.b16 %v788
        %v1971 = vunpack.c.h.b16 %v788
        %v1972 = vunpack.c.l.b16 %v789
        %v1973 = vunpack.c.h.b16 %v789
        %v1974 = vunpack.c.l.b16 %v790
        %v1975 = vunpack.c.h.b16 %v790
        %v1976 = vunpack.c.l.b16 %v791
        %v1977 = vunpack.c.h.b16 %v791
        %v1978 = vunpack.c.l.b16 %v792
        %v1979 = vunpack.c.h.b16 %v792
        %v1980 = vunpack.c.l.b16 %v793
        %v1981 = vunpack.c.h.b16 %v793
        %v1982 = vunpack.c.l.b16 %v794
        %v1983 = vunpack.c.h.b16 %v794
        %v1984 = vunpack.c.l.b16 %v795
        %v1985 = vunpack.c.h.b16 %v795
        %v1986 = vunpack.c.l.b16 %v796
        %v1987 = vunpack.c.h.b16 %v796
        %v1988 = vunpack.c.l.b16 %v797
        %v1989 = vunpack.c.h.b16 %v797
        %v1990 = vunpack.c.l.b16 %v798
        %v1991 = vunpack.c.h.b16 %v798
        %v1992 = vunpack.c.l.b16 %v799
        %v1993 = vunpack.c.h.b16 %v799
        %v1994 = vunpack.c.l.b16 %v800
        %v1995 = vunpack.c.h.b16 %v800
        %v1996 = vunpack.c.l.b16 %v801
        %v1997 = vunpack.c.h.b16 %v801
        %v1998 = vunpack.c.l.b16 %v802
        %v1999 = vunpack.c.h.b16 %v802
        %v2000 = vunpack.c.l.b16 %v803
        %v2001 = vunpack.c.h.b16 %v803
        %v2002 = vunpack.c.l.b16 %v804
        %v2003 = vunpack.c.h.b16 %v804
        %v2004 = vunpack.c.l.b16 %v805
        %v2005 = vunpack.c.h.b16 %v805
        %v2006 = vunpack.c.l.b16 %v806
        %v2007 = vunpack.c.h.b16 %v806
        %v2008 = vunpack.c.l.b16 %v807
        %v2009 = vunpack.c.h.b16 %v807
        %v2010 = vunpack.c.l.b16 %v808
        %v2011 = vunpack.c.h.b16 %v808
        %v2012 = vunpack.c.l.b16 %v809
        %v2013 = vunpack.c.h.b16 %v809
        %v2014 = vunpack.c.l.b16 %v810
        %v2015 = vunpack.c.h.b16 %v810
        %v2016 = vunpack.c.l.b16 %v811
        %v2017 = vunpack.c.h.b16 %v811
        %v2018 = vunpack.c.l.b16 %v812
        %v2019 = vunpack.c.h.b16 %v812
        %v2020 = vunpack.c.l.b16 %v813
        %v2021 = vunpack.c.h.b16 %v813
        %v2022 = vunpack.c.l.b16 %v814
        %v2023 = vunpack.c.h.b16 %v814
        %v2024 = vunpack.c.l.b16 %v815
        %v2025 = vunpack.c.h.b16 %v815
        %v2026 = vunpack.c.l.b16 %v816
        %v2027 = vunpack.c.h.b16 %v816
        %v2028 = vunpack.c.l.b16 %v817
        %v2029 = vunpack.c.h.b16 %v817
        %v2030 = vunpack.c.l.b16 %v818
        %v2031 = vunpack.c.h.b16 %v818
        %v2032 = vunpack.c.l.b16 %v819
        %v2033 = vunpack.c.h.b16 %v819
        %v2034 = vunpack.c.l.b16 %v820
        %v2035 = vunpack.c.h.b16 %v820
        %v2036 = vunpack.c.l.b16 %v821
        %v2037 = vunpack.c.h.b16 %v821
        %v2038 = vunpack.c.l.b16 %v822
        %v2039 = vunpack.c.h.b16 %v822
        %v2040 = vunpack.c.l.b16 %v823
        %v2041 = vunpack.c.h.b16 %v823
        %v2042 = vunpack.c.l.b16 %v824
        %v2043 = vunpack.c.h.b16 %v824
        %v2044 = vunpack.c.l.b16 %v825
        %v2045 = vunpack.c.h.b16 %v825
        %v2046 = vunpack.c.l.b16 %v826
        %v2047 = vunpack.c.h.b16 %v826
        %v2048 = vunpack.c.l.b16 %v827
        %v2049 = vunpack.c.h.b16 %v827
        %v2050 = vunpack.c.l.b16 %v828
        %v2051 = vunpack.c.h.b16 %v828
        %v2052 = vunpack.c.l.b16 %v829
        %v2053 = vunpack.c.h.b16 %v829
        %v2054 = vunpack.c.l.b16 %v830
        %v2055 = vunpack.c.h.b16 %v830
        %v2056 = vunpack.c.l.b16 %v831
        %v2057 = vunpack.c.h.b16 %v831
        %v2058 = vunpack.c.l.b16 %v832
        %v2059 = vunpack.c.h.b16 %v832
        %v2060 = vunpack.c.l.b16 %v833
        %v2061 = vunpack.c.h.b16 %v833
        %v2062 = vunpack.c.l.b16 %v834
        %v2063 = vunpack.c.h.b16 %v834
        %v2064 = vunpack.c.l.b16 %v835
        %v2065 = vunpack.c.h.b16 %v835
        %v2066 = vunpack.c.l.b16 %v836
        %v2067 = vunpack.c.h.b16 %v836
        %v2068 = vunpack.c.l.b16 %v837
        %v2069 = vunpack.c.h.b16 %v837
        %v2070 = vunpack.c.l.b16 %v838
        %v2071 = vunpack.c.h.b16 %v838
        %v2072 = vunpack.c.l.b16 %v839
        %v2073 = vunpack.c.h.b16 %v839
        %v2074 = vunpack.c.l.b16 %v840
        %v2075 = vunpack.c.h.b16 %v840
        %v2076 = vunpack.c.l.b16 %v841
        %v2077 = vunpack.c.h.b16 %v841
        %v2078 = vunpack.c.l.b16 %v842
        %v2079 = vunpack.c.h.b16 %v842
        %v2080 = vunpack.c.l.b16 %v843
        %v2081 = vunpack.c.h.b16 %v843
        %v2082 = vunpack.c.l.b16 %v844
        %v2083 = vunpack.c.h.b16 %v844
        %v2084 = vunpack.c.l.b16 %v845
        %v2085 = vunpack.c.h.b16 %v845
        %v2086 = vunpack.c.l.b16 %v846
        %v2087 = vunpack.c.h.b16 %v846
        %v2088 = vunpack.c.l.b16 %v847
        %v2089 = vunpack.c.h.b16 %v847
        %v2090 = vunpack.c.l.b16 %v848
        %v2091 = vunpack.c.h.b16 %v848
        %v2092 = vunpack.c.l.b16 %v849
        %v2093 = vunpack.c.h.b16 %v849
        %v2094 = vunpack.c.l.b16 %v850
        %v2095 = vunpack.c.h.b16 %v850
        %v2096 = vunpack.c.l.b16 %v851
        %v2097 = vunpack.c.h.b16 %v851
        %v2098 = vunpack.c.l.b16 %v852
        %v2099 = vunpack.c.h.b16 %v852
        %v2100 = vunpack.c.l.b16 %v853
        %v2101 = vunpack.c.h.b16 %v853
        %v2102 = vunpack.c.l.b16 %v854
        %v2103 = vunpack.c.h.b16 %v854
        %v2104 = vunpack.c.l.b16 %v855
        %v2105 = vunpack.c.h.b16 %v855
        %v2106 = vunpack.c.l.b16 %v856
        %v2107 = vunpack.c.h.b16 %v856
        %v2108 = vunpack.c.l.b16 %v857
        %v2109 = vunpack.c.h.b16 %v857
        %v2110 = vunpack.c.l.b16 %v858
        %v2111 = vunpack.c.h.b16 %v858
        %v2112 = vunpack.c.l.b16 %v859
        %v2113 = vunpack.c.h.b16 %v859
        %v2114 = vunpack.c.l.b16 %v860
        %v2115 = vunpack.c.h.b16 %v860
        %v2116 = vunpack.c.l.b16 %v861
        %v2117 = vunpack.c.h.b16 %v861
        %v2118 = vunpack.c.l.b16 %v862
        %v2119 = vunpack.c.h.b16 %v862
        %v2120 = vunpack.c.l.b16 %v863
        %v2121 = vunpack.c.h.b16 %v863
        %v2122 = vunpack.c.l.b16 %v864
        %v2123 = vunpack.c.h.b16 %v864
        %v2124 = vunpack.c.l.b16 %v865
        %v2125 = vunpack.c.h.b16 %v865
        %v2126 = vunpack.c.l.b16 %v866
        %v2127 = vunpack.c.h.b16 %v866
        %v2128 = vunpack.c.l.b16 %v867
        %v2129 = vunpack.c.h.b16 %v867
        %v2130 = vunpack.c.l.b16 %v868
        %v2131 = vunpack.c.h.b16 %v868
        %v2132 = vunpack.c.l.b16 %v869
        %v2133 = vunpack.c.h.b16 %v869
        %v2134 = vunpack.c.l.b16 %v870
        %v2135 = vunpack.c.h.b16 %v870
        %v2136 = vunpack.c.l.b16 %v871
        %v2137 = vunpack.c.h.b16 %v871
        %v2138 = vunpack.c.l.b16 %v872
        %v2139 = vunpack.c.h.b16 %v872
        %v2140 = vunpack.c.l.b16 %v873
        %v2141 = vunpack.c.h.b16 %v873
        %v2142 = vunpack.c.l.b16 %v874
        %v2143 = vunpack.c.h.b16 %v874
        %v2144 = vunpack.c.l.b16 %v875
        %v2145 = vunpack.c.h.b16 %v875
        %v2146 = vunpack.c.l.b16 %v876
        %v2147 = vunpack.c.h.b16 %v876
        %v2148 = vunpack.c.l.b16 %v877
        %v2149 = vunpack.c.h.b16 %v877
        %v2150 = vunpack.c.l.b16 %v878
        %v2151 = vunpack.c.h.b16 %v878
        %v2152 = vunpack.c.l.b16 %v879
        %v2153 = vunpack.c.h.b16 %v879
        %v2154 = vunpack.c.l.b16 %v880
        %v2155 = vunpack.c.h.b16 %v880
        %v2156 = vunpack.c.l.b16 %v881
        %v2157 = vunpack.c.h.b16 %v881
        %v2158 = vunpack.c.l.b16 %v882
        %v2159 = vunpack.c.h.b16 %v882
        %v2160 = vunpack.c.l.b16 %v883
        %v2161 = vunpack.c.h.b16 %v883
        %v2162 = vunpack.c.l.b16 %v884
        %v2163 = vunpack.c.h.b16 %v884
        %v2164 = vunpack.c.l.b16 %v885
        %v2165 = vunpack.c.h.b16 %v885
        %v2166 = vunpack.c.l.b16 %v886
        %v2167 = vunpack.c.h.b16 %v886
        %v2168 = vunpack.c.l.b16 %v887
        %v2169 = vunpack.c.h.b16 %v887
        %v2170 = vunpack.c.l.b16 %v888
        %v2171 = vunpack.c.h.b16 %v888
        %v2172 = vunpack.c.l.b16 %v889
        %v2173 = vunpack.c.h.b16 %v889
        %v2174 = vunpack.c.l.b16 %v890
        %v2175 = vunpack.c.h.b16 %v890
        %v2176 = vunpack.c.l.b16 %v891
        %v2177 = vunpack.c.h.b16 %v891
        %v2178 = vunpack.c.l.b16 %v892
        %v2179 = vunpack.c.h.b16 %v892
        %v2180 = vunpack.c.l.b16 %v893
        %v2181 = vunpack.c.h.b16 %v893
        %v2182 = vunpack.c.l.b16 %v894
        %v2183 = vunpack.c.h.b16 %v894
        %v2184 = vunpack.c.l.b16 %v895
        %v2185 = vunpack.c.h.b16 %v895
        %v2186 = vunpack.c.l.b16 %v896
        %v2187 = vunpack.c.h.b16 %v896
        %v2188 = vunpack.c.l.b16 %v897
        %v2189 = vunpack.c.h.b16 %v897
        %v2190 = vunpack.c.l.b16 %v898
        %v2191 = vunpack.c.h.b16 %v898
        %v2192 = vunpack.c.l.b16 %v899
        %v2193 = vunpack.c.h.b16 %v899
        %v2194 = vunpack.c.l.b16 %v900
        %v2195 = vunpack.c.h.b16 %v900
        %v2196 = vunpack.c.l.b16 %v901
        %v2197 = vunpack.c.h.b16 %v901
        %v2198 = vunpack.c.l.b16 %v902
        %v2199 = vunpack.c.h.b16 %v902
        %v2200 = vunpack.c.l.b16 %v903
        %v2201 = vunpack.c.h.b16 %v903
        %v2202 = vunpack.c.l.b16 %v904
        %v2203 = vunpack.c.h.b16 %v904
        %v2204 = vunpack.c.l.b16 %v905
        %v2205 = vunpack.c.h.b16 %v905
        %v2206 = vunpack.c.l.b16 %v906
        %v2207 = vunpack.c.h.b16 %v906
        %v2208 = vunpack.c.l.b16 %v907
        %v2209 = vunpack.c.h.b16 %v907
        %v2210 = vunpack.c.l.b16 %v908
        %v2211 = vunpack.c.h.b16 %v908
        %v2212 = vunpack.c.l.b16 %v909
        %v2213 = vunpack.c.h.b16 %v909
        %v2214 = vunpack.c.l.b16 %v910
        %v2215 = vunpack.c.h.b16 %v910
        %v2216 = vunpack.c.l.b16 %v911
        %v2217 = vunpack.c.h.b16 %v911
        %v2218 = vunpack.c.l.b16 %v912
        %v2219 = vunpack.c.h.b16 %v912
        %v2220 = vunpack.c.l.b16 %v913
        %v2221 = vunpack.c.h.b16 %v913
        %v2222 = vunpack.c.l.b16 %v914
        %v2223 = vunpack.c.h.b16 %v914
        %v2224 = vunpack.c.l.b16 %v915
        %v2225 = vunpack.c.h.b16 %v915
        %v2226 = vunpack.c.l.b16 %v916
        %v2227 = vunpack.c.h.b16 %v916
        %v2228 = vunpack.c.l.b16 %v917
        %v2229 = vunpack.c.h.b16 %v917
        %v2230 = vunpack.c.l.b16 %v918
        %v2231 = vunpack.c.h.b16 %v918
        %v2232 = vunpack.c.l.b16 %v919
        %v2233 = vunpack.c.h.b16 %v919
        %v2234 = vunpack.c.l.b16 %v920
        %v2235 = vunpack.c.h.b16 %v920
        %v2236 = vunpack.c.l.b16 %v921
        %v2237 = vunpack.c.h.b16 %v921
        %v2238 = vunpack.c.l.b16 %v922
        %v2239 = vunpack.c.h.b16 %v922
        %v2240 = vunpack.c.l.b16 %v923
        %v2241 = vunpack.c.h.b16 %v923
        %v2242 = vunpack.c.l.b16 %v924
        %v2243 = vunpack.c.h.b16 %v924
        %v2244 = vunpack.c.l.b16 %v925
        %v2245 = vunpack.c.h.b16 %v925
        %v2246 = vunpack.c.l.b16 %v926
        %v2247 = vunpack.c.h.b16 %v926
        %v2248 = vunpack.c.l.b16 %v927
        %v2249 = vunpack.c.h.b16 %v927
        %v2250 = vunpack.c.l.b16 %v928
        %v2251 = vunpack.c.h.b16 %v928
        %v2252 = vunpack.c.l.b16 %v929
        %v2253 = vunpack.c.h.b16 %v929
        %v2254 = vunpack.c.l.b16 %v930
        %v2255 = vunpack.c.h.b16 %v930
        %v2256 = vunpack.c.l.b16 %v931
        %v2257 = vunpack.c.h.b16 %v931
        %v2258 = vunpack.c.l.b16 %v932
        %v2259 = vunpack.c.h.b16 %v932
        %v2260 = vunpack.c.l.b16 %v933
        %v2261 = vunpack.c.h.b16 %v933
        %v2262 = vunpack.c.l.b16 %v934
        %v2263 = vunpack.c.h.b16 %v934
        %v2264 = vunpack.c.l.b16 %v935
        %v2265 = vunpack.c.h.b16 %v935
        %v2266 = vunpack.c.l.b16 %v936
        %v2267 = vunpack.c.h.b16 %v936
        %v2268 = vunpack.c.l.b16 %v937
        %v2269 = vunpack.c.h.b16 %v937
        %v2270 = vunpack.c.l.b16 %v938
        %v2271 = vunpack.c.h.b16 %v938
        %v2272 = vunpack.c.l.b16 %v939
        %v2273 = vunpack.c.h.b16 %v939
        %v2274 = vunpack.c.l.b16 %v940
        %v2275 = vunpack.c.h.b16 %v940
        %v2276 = vunpack.c.l.b16 %v941
        %v2277 = vunpack.c.h.b16 %v941
        %v2278 = vunpack.c.l.b16 %v942
        %v2279 = vunpack.c.h.b16 %v942
        %v2280 = vunpack.c.l.b16 %v943
        %v2281 = vunpack.c.h.b16 %v943
        %v2282 = vunpack.c.l.b16 %v944
        %v2283 = vunpack.c.h.b16 %v944
        %v2284 = vunpack.c.l.b16 %v945
        %v2285 = vunpack.c.h.b16 %v945
        %v2286 = vunpack.c.l.b16 %v946
        %v2287 = vunpack.c.h.b16 %v946
        %v2288 = vunpack.c.l.b16 %v947
        %v2289 = vunpack.c.h.b16 %v947
        %v2290 = vunpack.c.l.b16 %v948
        %v2291 = vunpack.c.h.b16 %v948
        %v2292 = vunpack.c.l.b16 %v949
        %v2293 = vunpack.c.h.b16 %v949
        %v2294 = vunpack.c.l.b16 %v950
        %v2295 = vunpack.c.h.b16 %v950
        %v2296 = vunpack.c.l.b16 %v951
        %v2297 = vunpack.c.h.b16 %v951
        %v2298 = vunpack.c.l.b16 %v952
        %v2299 = vunpack.c.h.b16 %v952
        %v2300 = vunpack.c.l.b16 %v953
        %v2301 = vunpack.c.h.b16 %v953
        %v2302 = vunpack.c.l.b16 %v954
        %v2303 = vunpack.c.h.b16 %v954
        %v2304 = vunpack.c.l.b16 %v955
        %v2305 = vunpack.c.h.b16 %v955
        %v2306 = vunpack.c.l.b16 %v956
        %v2307 = vunpack.c.h.b16 %v956
        %v2308 = vunpack.c.l.b16 %v957
        %v2309 = vunpack.c.h.b16 %v957
        %v2310 = vunpack.c.l.b16 %v958
        %v2311 = vunpack.c.h.b16 %v958
        %v2312 = vunpack.c.l.b16 %v959
        %v2313 = vunpack.c.h.b16 %v959
        %v2314 = vunpack.c.l.b16 %v960
        %v2315 = vunpack.c.h.b16 %v960
        %v2316 = vunpack.c.l.b16 %v961
        %v2317 = vunpack.c.h.b16 %v961
        %v2318 = vunpack.c.l.b16 %v962
        %v2319 = vunpack.c.h.b16 %v962
        %v2320 = vunpack.c.l.b16 %v963
        %v2321 = vunpack.c.h.b16 %v963
        %v2322 = vunpack.c.l.b16 %v964
        %v2323 = vunpack.c.h.b16 %v964
        %v2324 = vunpack.c.l.b16 %v965
        %v2325 = vunpack.c.h.b16 %v965
        %v2326 = vunpack.c.l.b16 %v966
        %v2327 = vunpack.c.h.b16 %v966
        %v2328 = vunpack.c.l.b16 %v967
        %v2329 = vunpack.c.h.b16 %v967
        %v2330 = vunpack.c.l.b16 %v968
        %v2331 = vunpack.c.h.b16 %v968
        %v2332 = vunpack.c.l.b16 %v969
        %v2333 = vunpack.c.h.b16 %v969
        %v2334 = vunpack.c.l.b16 %v970
        %v2335 = vunpack.c.h.b16 %v970
        %v2336 = vunpack.c.l.b16 %v971
        %v2337 = vunpack.c.h.b16 %v971
        %v2338 = vunpack.c.l.b16 %v972
        %v2339 = vunpack.c.h.b16 %v972
        %v2340 = vunpack.c.l.b16 %v973
        %v2341 = vunpack.c.h.b16 %v973
        %v2342 = vunpack.c.l.b16 %v974
        %v2343 = vunpack.c.h.b16 %v974
        %v2344 = vunpack.c.l.b16 %v975
        %v2345 = vunpack.c.h.b16 %v975
        %v2346 = vunpack.c.l.b16 %v976
        %v2347 = vunpack.c.h.b16 %v976
        %v2348 = vunpack.c.l.b16 %v977
        %v2349 = vunpack.c.h.b16 %v977
        %v2350 = vunpack.c.l.b16 %v978
        %v2351 = vunpack.c.h.b16 %v978
        %v2352 = vunpack.c.l.b16 %v979
        %v2353 = vunpack.c.h.b16 %v979
        %v2354 = vunpack.c.l.b16 %v980
        %v2355 = vunpack.c.h.b16 %v980
        %v2356 = vunpack.c.l.b16 %v981
        %v2357 = vunpack.c.h.b16 %v981
        %v2358 = vunpack.c.l.b16 %v982
        %v2359 = vunpack.c.h.b16 %v982
        %v2360 = vunpack.c.l.b16 %v983
        %v2361 = vunpack.c.h.b16 %v983
        %v2362 = vunpack.c.l.b16 %v984
        %v2363 = vunpack.c.h.b16 %v984
        %v2364 = vunpack.c.l.b16 %v985
        %v2365 = vunpack.c.h.b16 %v985
        %v2366 = vunpack.c.l.b16 %v986
        %v2367 = vunpack.c.h.b16 %v986
        %v2368 = vunpack.c.l.b16 %v987
        %v2369 = vunpack.c.h.b16 %v987
        %v2370 = vunpack.c.l.b16 %v988
        %v2371 = vunpack.c.h.b16 %v988
        %v2372 = vunpack.c.l.b16 %v989
        %v2373 = vunpack.c.h.b16 %v989
        %v2374 = vunpack.c.l.b16 %v990
        %v2375 = vunpack.c.h.b16 %v990
        %v2376 = vunpack.c.l.b16 %v991
        %v2377 = vunpack.c.h.b16 %v991
        %v2378 = vunpack.c.l.b16 %v992
        %v2379 = vunpack.c.h.b16 %v992
        %v2380 = vunpack.c.l.b16 %v993
        %v2381 = vunpack.c.h.b16 %v993
        %v2382 = vunpack.c.l.b16 %v994
        %v2383 = vunpack.c.h.b16 %v994
        %v2384 = vunpack.c.l.b16 %v995
        %v2385 = vunpack.c.h.b16 %v995
        %v2386 = vunpack.c.l.b16 %v996
        %v2387 = vunpack.c.h.b16 %v996
        %v2388 = vunpack.c.l.b16 %v997
        %v2389 = vunpack.c.h.b16 %v997
        %v2390 = vunpack.c.l.b16 %v998
        %v2391 = vunpack.c.h.b16 %v998
        %v2392 = vunpack.c.l.b16 %v999
        %v2393 = vunpack.c.h.b16 %v999
        %v2394 = vunpack.c.l.b16 %v1000
        %v2395 = vunpack.c.h.b16 %v1000
        %v2396 = vunpack.c.l.b16 %v1001
        %v2397 = vunpack.c.h.b16 %v1001
        %v2398 = vunpack.c.l.b16 %v1002
        %v2399 = vunpack.c.h.b16 %v1002
        %v2400 = vunpack.c.l.b16 %v1003
        %v2401 = vunpack.c.h.b16 %v1003
        %v2402 = vunpack.c.l.b16 %v1004
        %v2403 = vunpack.c.h.b16 %v1004
        %v2404 = vunpack.c.l.b16 %v1005
        %v2405 = vunpack.c.h.b16 %v1005
        %v2406 = vunpack.c.l.b16 %v1006
        %v2407 = vunpack.c.h.b16 %v1006
        %v2408 = vunpack.c.l.b16 %v1007
        %v2409 = vunpack.c.h.b16 %v1007
        %v2410 = vunpack.c.l.b16 %v1008
        %v2411 = vunpack.c.h.b16 %v1008
        %v2412 = vunpack.c.l.b16 %v1009
        %v2413 = vunpack.c.h.b16 %v1009
        %v2414 = vunpack.c.l.b16 %v1010
        %v2415 = vunpack.c.h.b16 %v1010
        %v2416 = vunpack.c.l.b16 %v1011
        %v2417 = vunpack.c.h.b16 %v1011
        %v2418 = vunpack.c.l.b16 %v1012
        %v2419 = vunpack.c.h.b16 %v1012
        %v2420 = vunpack.c.l.b16 %v1013
        %v2421 = vunpack.c.h.b16 %v1013
        %v2422 = vunpack.c.l.b16 %v1014
        %v2423 = vunpack.c.h.b16 %v1014
        %v2424 = vunpack.c.l.b16 %v1015
        %v2425 = vunpack.c.h.b16 %v1015
        %v2426 = vunpack.c.l.b16 %v1016
        %v2427 = vunpack.c.h.b16 %v1016
        %v2428 = vunpack.c.l.b16 %v1017
        %v2429 = vunpack.c.h.b16 %v1017
        %v2430 = vunpack.c.l.b16 %v1018
        %v2431 = vunpack.c.h.b16 %v1018
        %v2432 = vunpack.c.l.b16 %v1019
        %v2433 = vunpack.c.h.b16 %v1019
        %v2434 = vunpack.c.l.b16 %v1020
        %v2435 = vunpack.c.h.b16 %v1020
        %v2436 = vunpack.c.l.b16 %v1021
        %v2437 = vunpack.c.h.b16 %v1021
        %v2438 = vunpack.c.l.b16 %v1022
        %v2439 = vunpack.c.h.b16 %v1022
        %v2440 = vunpack.c.l.b16 %v1023
        %v2441 = vunpack.c.h.b16 %v1023
        %v2442 = vunpack.c.l.b16 %v1024
        %v2443 = vunpack.c.h.b16 %v1024
        %v2444 = vunpack.c.l.b16 %v1025
        %v2445 = vunpack.c.h.b16 %v1025
        %v2446 = vunpack.c.l.b16 %v1026
        %v2447 = vunpack.c.h.b16 %v1026
        %v2448 = vunpack.c.l.b16 %v1027
        %v2449 = vunpack.c.h.b16 %v1027
        %v2450 = vunpack.c.l.b16 %v1028
        %v2451 = vunpack.c.h.b16 %v1028
        %v2452 = vunpack.c.l.b16 %v1029
        %v2453 = vunpack.c.h.b16 %v1029
        %v2454 = vunpack.c.l.b16 %v1030
        %v2455 = vunpack.c.h.b16 %v1030
        %v2456 = vunpack.c.l.b16 %v1031
        %v2457 = vunpack.c.h.b16 %v1031
        %v2458 = vunpack.c.l.b16 %v1032
        %v2459 = vunpack.c.h.b16 %v1032
        %v2460 = vunpack.c.l.b16 %v1033
        %v2461 = vunpack.c.h.b16 %v1033
        %v2462 = vunpack.c.l.b16 %v1034
        %v2463 = vunpack.c.h.b16 %v1034
        %v2464 = vunpack.c.l.b16 %v1035
        %v2465 = vunpack.c.h.b16 %v1035
        %v2466 = vunpack.c.l.b16 %v1036
        %v2467 = vunpack.c.h.b16 %v1036
        %v2468 = vunpack.c.l.b16 %v1037
        %v2469 = vunpack.c.h.b16 %v1037
        %v2470 = vunpack.c.l.b16 %v1038
        %v2471 = vunpack.c.h.b16 %v1038
        %v2472 = vunpack.c.l.b16 %v1039
        %v2473 = vunpack.c.h.b16 %v1039
        %v2474 = vunpack.c.l.b16 %v1040
        %v2475 = vunpack.c.h.b16 %v1040
        %v2476 = vunpack.c.l.b16 %v1041
        %v2477 = vunpack.c.h.b16 %v1041
        %v2478 = vunpack.c.l.b16 %v1042
        %v2479 = vunpack.c.h.b16 %v1042
        %v2480 = vunpack.c.l.b16 %v1043
        %v2481 = vunpack.c.h.b16 %v1043
        %v2482 = vunpack.c.l.b16 %v1044
        %v2483 = vunpack.c.h.b16 %v1044
        %v2484 = vunpack.c.l.b16 %v1045
        %v2485 = vunpack.c.h.b16 %v1045
        %v2486 = vunpack.c.l.b16 %v1046
        %v2487 = vunpack.c.h.b16 %v1046
        %v2488 = vunpack.c.l.b16 %v1047
        %v2489 = vunpack.c.h.b16 %v1047
        %v2490 = vunpack.c.l.b16 %v1048
        %v2491 = vunpack.c.h.b16 %v1048
        %v2492 = vunpack.c.l.b16 %v1049
        %v2493 = vunpack.c.h.b16 %v1049
        %v2494 = vunpack.c.l.b16 %v1050
        %v2495 = vunpack.c.h.b16 %v1050
        %v2496 = vunpack.c.l.b16 %v1051
        %v2497 = vunpack.c.h.b16 %v1051
        %v2498 = vunpack.c.l.b16 %v1052
        %v2499 = vunpack.c.h.b16 %v1052
        %v2500 = vunpack.c.l.b16 %v1053
        %v2501 = vunpack.c.h.b16 %v1053
        %v2502 = vunpack.c.l.b16 %v1054
        %v2503 = vunpack.c.h.b16 %v1054
        %v2504 = vunpack.c.l.b16 %v1055
        %v2505 = vunpack.c.h.b16 %v1055
        %v2506 = vunpack.c.l.b16 %v1056
        %v2507 = vunpack.c.h.b16 %v1056
        %v2508 = vunpack.c.l.b16 %v1057
        %v2509 = vunpack.c.h.b16 %v1057
        %v2510 = vunpack.c.l.b16 %v1058
        %v2511 = vunpack.c.h.b16 %v1058
        %v2512 = vunpack.c.l.b16 %v1059
        %v2513 = vunpack.c.h.b16 %v1059
        %v2514 = vunpack.c.l.b16 %v1060
        %v2515 = vunpack.c.h.b16 %v1060
        %v2516 = vunpack.c.l.b16 %v1061
        %v2517 = vunpack.c.h.b16 %v1061
        %v2518 = vunpack.c.l.b16 %v1062
        %v2519 = vunpack.c.h.b16 %v1062
        %v2520 = vunpack.c.l.b16 %v1063
        %v2521 = vunpack.c.h.b16 %v1063
        %v2522 = vunpack.c.l.b16 %v1064
        %v2523 = vunpack.c.h.b16 %v1064
        %v2524 = vunpack.c.l.b16 %v1065
        %v2525 = vunpack.c.h.b16 %v1065
        %v2526 = vunpack.c.l.b16 %v1066
        %v2527 = vunpack.c.h.b16 %v1066
        %v2528 = vunpack.c.l.b16 %v1067
        %v2529 = vunpack.c.h.b16 %v1067
        %v2530 = vunpack.c.l.b16 %v1068
        %v2531 = vunpack.c.h.b16 %v1068
        %v2532 = vunpack.c.l.b16 %v1069
        %v2533 = vunpack.c.h.b16 %v1069
        %v2534 = vunpack.c.l.b16 %v1070
        %v2535 = vunpack.c.h.b16 %v1070
        %v2536 = vunpack.c.l.b16 %v1071
        %v2537 = vunpack.c.h.b16 %v1071
        %v2538 = vunpack.c.l.b16 %v1072
        %v2539 = vunpack.c.h.b16 %v1072
        %v2540 = vunpack.c.l.b16 %v1073
        %v2541 = vunpack.c.h.b16 %v1073
        %v2542 = vunpack.c.l.b16 %v1074
        %v2543 = vunpack.c.h.b16 %v1074
        %v2544 = vunpack.c.l.b16 %v1075
        %v2545 = vunpack.c.h.b16 %v1075
        %v2546 = vunpack.c.l.b16 %v1076
        %v2547 = vunpack.c.h.b16 %v1076
        %v2548 = vunpack.c.l.b16 %v1077
        %v2549 = vunpack.c.h.b16 %v1077
        %v2550 = vunpack.c.l.b16 %v1078
        %v2551 = vunpack.c.h.b16 %v1078
        %v2552 = vunpack.c.l.b16 %v1079
        %v2553 = vunpack.c.h.b16 %v1079
        %v2554 = vunpack.c.l.b16 %v1080
        %v2555 = vunpack.c.h.b16 %v1080
        %v2556 = vunpack.c.l.b16 %v1081
        %v2557 = vunpack.c.h.b16 %v1081
        %v2558 = vunpack.c.l.b16 %v1082
        %v2559 = vunpack.c.h.b16 %v1082
        %v2560 = vunpack.c.l.b16 %v1083
        %v2561 = vunpack.c.h.b16 %v1083
        %v2562 = vunpack.c.l.b16 %v1084
        %v2563 = vunpack.c.h.b16 %v1084
        %v2564 = vunpack.c.l.b16 %v1085
        %v2565 = vunpack.c.h.b16 %v1085
        %v2566 = vunpack.c.l.b16 %v1086
        %v2567 = vunpack.c.h.b16 %v1086
        %v2568 = vunpack.c.l.b16 %v1087
        %v2569 = vunpack.c.h.b16 %v1087
        %v2570 = vunpack.c.l.b16 %v1088
        %v2571 = vunpack.c.h.b16 %v1088
        %v2572 = vunpack.c.l.b16 %v1089
        %v2573 = vunpack.c.h.b16 %v1089
        %v2574 = vunpack.c.l.b16 %v1090
        %v2575 = vunpack.c.h.b16 %v1090
        %v2576 = vunpack.c.l.b16 %v1091
        %v2577 = vunpack.c.h.b16 %v1091
        %v2578 = vunpack.c.l.b16 %v1092
        %v2579 = vunpack.c.h.b16 %v1092
        %v2580 = vunpack.c.l.b16 %v1093
        %v2581 = vunpack.c.h.b16 %v1093
        %v2582 = vunpack.c.l.b16 %v1094
        %v2583 = vunpack.c.h.b16 %v1094
        %v2584 = vunpack.c.l.b16 %v1095
        %v2585 = vunpack.c.h.b16 %v1095
        %v2586 = vunpack.c.l.b16 %v1096
        %v2587 = vunpack.c.h.b16 %v1096
        %v2588 = vunpack.c.l.b16 %v1097
        %v2589 = vunpack.c.h.b16 %v1097
        %v2590 = vunpack.c.l.b16 %v1098
        %v2591 = vunpack.c.h.b16 %v1098
        %v2592 = vunpack.c.l.b16 %v1099
        %v2593 = vunpack.c.h.b16 %v1099
        %v2594 = vunpack.c.l.b16 %v1100
        %v2595 = vunpack.c.h.b16 %v1100
        %v2596 = vunpack.c.l.b16 %v1101
        %v2597 = vunpack.c.h.b16 %v1101
        %v2598 = vunpack.c.l.b16 %v1102
        %v2599 = vunpack.c.h.b16 %v1102
        %v2600 = vunpack.c.l.b16 %v1103
        %v2601 = vunpack.c.h.b16 %v1103
        %v2602 = vunpack.c.l.b16 %v1104
        %v2603 = vunpack.c.h.b16 %v1104
        %v2604 = vunpack.c.l.b16 %v1105
        %v2605 = vunpack.c.h.b16 %v1105
        %v2606 = vunpack.c.l.b16 %v1106
        %v2607 = vunpack.c.h.b16 %v1106
        %v2608 = vunpack.c.l.b16 %v1107
        %v2609 = vunpack.c.h.b16 %v1107
        %v2610 = vunpack.c.l.b16 %v1108
        %v2611 = vunpack.c.h.b16 %v1108
        %v2612 = vunpack.c.l.b16 %v1109
        %v2613 = vunpack.c.h.b16 %v1109
        %v2614 = vunpack.c.l.b16 %v1110
        %v2615 = vunpack.c.h.b16 %v1110
        %v2616 = vunpack.c.l.b16 %v1111
        %v2617 = vunpack.c.h.b16 %v1111
        %v2618 = vunpack.c.l.b16 %v1112
        %v2619 = vunpack.c.h.b16 %v1112
        %v2620 = vunpack.c.l.b16 %v1113
        %v2621 = vunpack.c.h.b16 %v1113
        %v2622 = vunpack.c.l.b16 %v1114
        %v2623 = vunpack.c.h.b16 %v1114
        %v2624 = vunpack.c.l.b16 %v1115
        %v2625 = vunpack.c.h.b16 %v1115
        %v2626 = vunpack.c.l.b16 %v1116
        %v2627 = vunpack.c.h.b16 %v1116
        %v2628 = vunpack.c.l.b16 %v1117
        %v2629 = vunpack.c.h.b16 %v1117
        %v2630 = vunpack.c.l.b16 %v1118
        %v2631 = vunpack.c.h.b16 %v1118
        %v2632 = vunpack.c.l.b16 %v1119
        %v2633 = vunpack.c.h.b16 %v1119
        %v2634 = vunpack.c.l.b16 %v1120
        %v2635 = vunpack.c.h.b16 %v1120
        %v2636 = vunpack.c.l.b16 %v1121
        %v2637 = vunpack.c.h.b16 %v1121
        %v2638 = vunpack.c.l.b16 %v1122
        %v2639 = vunpack.c.h.b16 %v1122
        %v2640 = vunpack.c.l.b16 %v1123
        %v2641 = vunpack.c.h.b16 %v1123
        %v2642 = vunpack.c.l.b16 %v1124
        %v2643 = vunpack.c.h.b16 %v1124
        %v2644 = vunpack.c.l.b16 %v1125
        %v2645 = vunpack.c.h.b16 %v1125
        %v2646 = vunpack.c.l.b16 %v1126
        %v2647 = vunpack.c.h.b16 %v1126
        %v2648 = vunpack.c.l.b16 %v1127
        %v2649 = vunpack.c.h.b16 %v1127
        %v2650 = vunpack.c.l.b16 %v1128
        %v2651 = vunpack.c.h.b16 %v1128
        %v2652 = vunpack.c.l.b16 %v1129
        %v2653 = vunpack.c.h.b16 %v1129
        %v2654 = vunpack.c.l.b16 %v1130
        %v2655 = vunpack.c.h.b16 %v1130
        %v2656 = vunpack.c.l.b16 %v1131
        %v2657 = vunpack.c.h.b16 %v1131
        %v2658 = vunpack.c.l.b16 %v1132
        %v2659 = vunpack.c.h.b16 %v1132
        %v2660 = vunpack.c.l.b16 %v1133
        %v2661 = vunpack.c.h.b16 %v1133
        %v2662 = vunpack.c.l.b16 %v1134
        %v2663 = vunpack.c.h.b16 %v1134
        %v2664 = vunpack.c.l.b16 %v1135
        %v2665 = vunpack.c.h.b16 %v1135
        %v2666 = vunpack.c.l.b16 %v1136
        %v2667 = vunpack.c.h.b16 %v1136
        %v2668 = vunpack.c.l.b16 %v1137
        %v2669 = vunpack.c.h.b16 %v1137
        %v2670 = vunpack.c.l.b16 %v1138
        %v2671 = vunpack.c.h.b16 %v1138
        %v2672 = vunpack.c.l.b16 %v1139
        %v2673 = vunpack.c.h.b16 %v1139
        %v2674 = vunpack.c.l.b16 %v1140
        %v2675 = vunpack.c.h.b16 %v1140
        %v2676 = vunpack.c.l.b16 %v1141
        %v2677 = vunpack.c.h.b16 %v1141
        %v2678 = vunpack.c.l.b16 %v1142
        %v2679 = vunpack.c.h.b16 %v1142
        %v2680 = vunpack.c.l.b16 %v1143
        %v2681 = vunpack.c.h.b16 %v1143
        %v2682 = vunpack.c.l.b16 %v1144
        %v2683 = vunpack.c.h.b16 %v1144
        %v2684 = vunpack.c.l.b16 %v1145
        %v2685 = vunpack.c.h.b16 %v1145
        %v2686 = vunpack.c.l.b16 %v1146
        %v2687 = vunpack.c.h.b16 %v1146
        %v2688 = vunpack.c.l.b16 %v1147
        %v2689 = vunpack.c.h.b16 %v1147
        %v2690 = vunpack.c.l.b16 %v1148
        %v2691 = vunpack.c.h.b16 %v1148
        %v2692 = vunpack.c.l.b16 %v1149
        %v2693 = vunpack.c.h.b16 %v1149
        %v2694 = vunpack.c.l.b16 %v1150
        %v2695 = vunpack.c.h.b16 %v1150
        %v2696 = vunpack.c.l.b16 %v1151
        %v2697 = vunpack.c.h.b16 %v1151
        %v2698 = vunpack.c.l.b16 %v1152
        %v2699 = vunpack.c.h.b16 %v1152
        %v2700 = vunpack.c.l.b16 %v1153
        %v2701 = vunpack.c.h.b16 %v1153
        %v2702 = vunpack.c.l.b16 %v1154
        %v2703 = vunpack.c.h.b16 %v1154
        %v2704 = vunpack.c.l.b16 %v1155
        %v2705 = vunpack.c.h.b16 %v1155
        %v2706 = vunpack.c.l.b16 %v1156
        %v2707 = vunpack.c.h.b16 %v1156
        %v2708 = vunpack.c.l.b16 %v1157
        %v2709 = vunpack.c.h.b16 %v1157
        %v2710 = vunpack.c.l.b16 %v1158
        %v2711 = vunpack.c.h.b16 %v1158
        %v2712 = vunpack.c.l.b16 %v1159
        %v2713 = vunpack.c.h.b16 %v1159
        %v2714 = vunpack.c.l.b16 %v1160
        %v2715 = vunpack.c.h.b16 %v1160
        %v2716 = vunpack.c.l.b16 %v1161
        %v2717 = vunpack.c.h.b16 %v1161
        %v2718 = vunpack.c.l.b16 %v1162
        %v2719 = vunpack.c.h.b16 %v1162
        %v2720 = vunpack.c.l.b16 %v1163
        %v2721 = vunpack.c.h.b16 %v1163
        %v2722 = vunpack.c.l.b16 %v1164
        %v2723 = vunpack.c.h.b16 %v1164
        %v2724 = vunpack.c.l.b16 %v1165
        %v2725 = vunpack.c.h.b16 %v1165
        %v2726 = vunpack.c.l.b16 %v1166
        %v2727 = vunpack.c.h.b16 %v1166
        %v2728 = vunpack.c.l.b16 %v1167
        %v2729 = vunpack.c.h.b16 %v1167
        %v2730 = vunpack.c.l.b16 %v1168
        %v2731 = vunpack.c.h.b16 %v1168
        %v2732 = vunpack.c.l.b16 %v1169
        %v2733 = vunpack.c.h.b16 %v1169
        %v2734 = vunpack.c.l.b16 %v1170
        %v2735 = vunpack.c.h.b16 %v1170
        %v2736 = vunpack.c.l.b16 %v1171
        %v2737 = vunpack.c.h.b16 %v1171
        %v2738 = vunpack.c.l.b16 %v1172
        %v2739 = vunpack.c.h.b16 %v1172
        %v2740 = vunpack.c.l.b16 %v1173
        %v2741 = vunpack.c.h.b16 %v1173
        %v2742 = vunpack.c.l.b16 %v1174
        %v2743 = vunpack.c.h.b16 %v1174
        %v2744 = vunpack.c.l.b16 %v1175
        %v2745 = vunpack.c.h.b16 %v1175
        %v2746 = vunpack.c.l.b16 %v1176
        %v2747 = vunpack.c.h.b16 %v1176
        %v2748 = vunpack.c.l.b16 %v1177
        %v2749 = vunpack.c.h.b16 %v1177
        %v2750 = vunpack.c.l.b16 %v1178
        %v2751 = vunpack.c.h.b16 %v1178
        %v2752 = vunpack.c.l.b16 %v1179
        %v2753 = vunpack.c.h.b16 %v1179
        %v2754 = vunpack.c.l.b16 %v1180
        %v2755 = vunpack.c.h.b16 %v1180
        %v2756 = vunpack.c.l.b16 %v1181
        %v2757 = vunpack.c.h.b16 %v1181
        %v2758 = vunpack.c.l.b16 %v1182
        %v2759 = vunpack.c.h.b16 %v1182
        %v2760 = vunpack.c.l.b16 %v1183
        %v2761 = vunpack.c.h.b16 %v1183
        %v2762 = vunpack.c.l.b16 %v1184
        %v2763 = vunpack.c.h.b16 %v1184
        %v2764 = vunpack.c.l.b16 %v1185
        %v2765 = vunpack.c.h.b16 %v1185
        %v2766 = vunpack.c.l.b16 %v1186
        %v2767 = vunpack.c.h.b16 %v1186
        %v2768 = vunpack.c.l.b16 %v1187
        %v2769 = vunpack.c.h.b16 %v1187
        %v2770 = vunpack.c.l.b16 %v1188
        %v2771 = vunpack.c.h.b16 %v1188
        %v2772 = vunpack.c.l.b16 %v1189
        %v2773 = vunpack.c.h.b16 %v1189
        %v2774 = vunpack.c.l.b16 %v1190
        %v2775 = vunpack.c.h.b16 %v1190
        %v2776 = vunpack.c.l.b16 %v1191
        %v2777 = vunpack.c.h.b16 %v1191
        %v2778 = vunpack.c.l.b16 %v1192
        %v2779 = vunpack.c.h.b16 %v1192
        %v2780 = vunpack.c.l.b16 %v1193
        %v2781 = vunpack.c.h.b16 %v1193
        %v2782 = vunpack.c.l.b16 %v1194
        %v2783 = vunpack.c.h.b16 %v1194
        %v2784 = vunpack.c.l.b16 %v1195
        %v2785 = vunpack.c.h.b16 %v1195
        %v2786 = vunpack.c.l.b16 %v1196
        %v2787 = vunpack.c.h.b16 %v1196
        %v2788 = vunpack.c.l.b16 %v1197
        %v2789 = vunpack.c.h.b16 %v1197
        %v2790 = vunpack.c.l.b16 %v1198
        %v2791 = vunpack.c.h.b16 %v1198
        %v2792 = vunpack.c.l.b16 %v1199
        %v2793 = vunpack.c.h.b16 %v1199
        %v2794 = vunpack.c.l.b16 %v1200
        %v2795 = vunpack.c.h.b16 %v1200
        %v2796 = vunpack.c.l.b16 %v1201
        %v2797 = vunpack.c.h.b16 %v1201
        %v2798 = vunpack.c.l.b16 %v1202
        %v2799 = vunpack.c.h.b16 %v1202
        %v2800 = vunpack.c.l.b16 %v1203
        %v2801 = vunpack.c.h.b16 %v1203
        %v2802 = vunpack.c.l.b16 %v1204
        %v2803 = vunpack.c.h.b16 %v1204
        %v2804 = vunpack.c.l.b16 %v1205
        %v2805 = vunpack.c.h.b16 %v1205
        %v2806 = vunpack.c.l.b16 %v1206
        %v2807 = vunpack.c.h.b16 %v1206
        %v2808 = vunpack.c.l.b16 %v1207
        %v2809 = vunpack.c.h.b16 %v1207
        %v2810 = vunpack.c.l.b16 %v1208
        %v2811 = vunpack.c.h.b16 %v1208
        %v2812 = vunpack.c.l.b16 %v1209
        %v2813 = vunpack.c.h.b16 %v1209
        %v2814 = vunpack.c.l.b16 %v1210
        %v2815 = vunpack.c.h.b16 %v1210
        %v2816 = vunpack.c.l.b16 %v1211
        %v2817 = vunpack.c.h.b16 %v1211
        %v2818 = vunpack.c.l.b16 %v1212
        %v2819 = vunpack.c.h.b16 %v1212
        %v2820 = vunpack.c.l.b16 %v1213
        %v2821 = vunpack.c.h.b16 %v1213
        %v2822 = vunpack.c.l.b16 %v1214
        %v2823 = vunpack.c.h.b16 %v1214
        %v2824 = vpack.c.b16 %v1808, %v1800
        %v2825 = vpack.c.b16 %v1809, %v1801
        %v2826 = vpack.c.b16 %v1810, %v1802
        %v2827 = vpack.c.b16 %v1811, %v1803
        %v2828 = vpack.c.b16 %v1812, %v1804
        %v2829 = vpack.c.b16 %v1813, %v1805
        %v2830 = vpack.c.b16 %v1814, %v1806
        %v2831 = vpack.c.b16 %v1815, %v1807
        %v2832 = vpack.c.b16 %v1824, %v1816
        %v2833 = vpack.c.b16 %v1825, %v1817
        %v2834 = vpack.c.b16 %v1826, %v1818
        %v2835 = vpack.c.b16 %v1827, %v1819
        %v2836 = vpack.c.b16 %v1828, %v1820
        %v2837 = vpack.c.b16 %v1829, %v1821
        %v2838 = vpack.c.b16 %v1830, %v1822
        %v2839 = vpack.c.b16 %v1831, %v1823
        %v2840 = vpack.c.b16 %v1840, %v1832
        %v2841 = vpack.c.b16 %v1841, %v1833
        %v2842 = vpack.c.b16 %v1842, %v1834
        %v2843 = vpack.c.b16 %v1843, %v1835
        %v2844 = vpack.c.b16 %v1844, %v1836
        %v2845 = vpack.c.b16 %v1845, %v1837
        %v2846 = vpack.c.b16 %v1846, %v1838
        %v2847 = vpack.c.b16 %v1847, %v1839
        %v2848 = vpack.c.b16 %v1856, %v1848
        %v2849 = vpack.c.b16 %v1857, %v1849
        %v2850 = vpack.c.b16 %v1858, %v1850
        %v2851 = vpack.c.b16 %v1859, %v1851
        %v2852 = vpack.c.b16 %v1860, %v1852
        %v2853 = vpack.c.b16 %v1861, %v1853
        %v2854 = vpack.c.b16 %v1862, %v1854
        %v2855 = vpack.c.b16 %v1863, %v1855
        %v2856 = vpack.c.b16 %v1872, %v1864
        %v2857 = vpack.c.b16 %v1873, %v1865
        %v2858 = vpack.c.b16 %v1874, %v1866
        %v2859 = vpack.c.b16 %v1875, %v1867
        %v2860 = vpack.c.b16 %v1876, %v1868
        %v2861 = vpack.c.b16 %v1877, %v1869
        %v2862 = vpack.c.b16 %v1878, %v1870
        %v2863 = vpack.c.b16 %v1879, %v1871
        %v2864 = vpack.c.b16 %v1888, %v1880
        %v2865 = vpack.c.b16 %v1889, %v1881
        %v2866 = vpack.c.b16 %v1890, %v1882
        %v2867 = vpack.c.b16 %v1891, %v1883
        %v2868 = vpack.c.b16 %v1892, %v1884
        %v2869 = vpack.c.b16 %v1893, %v1885
        %v2870 = vpack.c.b16 %v1894, %v1886
        %v2871 = vpack.c.b16 %v1895, %v1887
        %v2872 = vpack.c.b16 %v1904, %v1896
        %v2873 = vpack.c.b16 %v1905, %v1897
        %v2874 = vpack.c.b16 %v1906, %v1898
        %v2875 = vpack.c.b16 %v1907, %v1899
        %v2876 = vpack.c.b16 %v1908, %v1900
        %v2877 = vpack.c.b16 %v1909, %v1901
        %v2878 = vpack.c.b16 %v1910, %v1902
        %v2879 = vpack.c.b16 %v1911, %v1903
        %v2880 = vpack.c.b16 %v1920, %v1912
        %v2881 = vpack.c.b16 %v1921, %v1913
        %v2882 = vpack.c.b16 %v1922, %v1914
        %v2883 = vpack.c.b16 %v1923, %v1915
        %v2884 = vpack.c.b16 %v1924, %v1916
        %v2885 = vpack.c.b16 %v1925, %v1917
        %v2886 = vpack.c.b16 %v1926, %v1918
        %v2887 = vpack.c.b16 %v1927, %v1919
        %v2888 = vpack.c.b16 %v1936, %v1928
        %v2889 = vpack.c.b16 %v1937, %v1929
        %v2890 = vpack.c.b16 %v1938, %v1930
        %v2891 = vpack.c.b16 %v1939, %v1931
        %v2892 = vpack.c.b16 %v1940, %v1932
        %v2893 = vpack.c.b16 %v1941, %v1933
        %v2894 = vpack.c.b16 %v1942, %v1934
        %v2895 = vpack.c.b16 %v1943, %v1935
        %v2896 = vpack.c.b16 %v1952, %v1944
        %v2897 = vpack.c.b16 %v1953, %v1945
        %v2898 = vpack.c.b16 %v1954, %v1946
        %v2899 = vpack.c.b16 %v1955, %v1947
        %v2900 = vpack.c.b16 %v1956, %v1948
        %v2901 = vpack.c.b16 %v1957, %v1949
        %v2902 = vpack.c.b16 %v1958, %v1950
        %v2903 = vpack.c.b16 %v1959, %v1951
        %v2904 = vpack.c.b16 %v1968, %v1960
        %v2905 = vpack.c.b16 %v1969, %v1961
        %v2906 = vpack.c.b16 %v1970, %v1962
        %v2907 = vpack.c.b16 %v1971, %v1963
        %v2908 = vpack.c.b16 %v1972, %v1964
        %v2909 = vpack.c.b16 %v1973, %v1965
        %v2910 = vpack.c.b16 %v1974, %v1966
        %v2911 = vpack.c.b16 %v1975, %v1967
        %v2912 = vpack.c.b16 %v1984, %v1976
        %v2913 = vpack.c.b16 %v1985, %v1977
        %v2914 = vpack.c.b16 %v1986, %v1978
        %v2915 = vpack.c.b16 %v1987, %v1979
        %v2916 = vpack.c.b16 %v1988, %v1980
        %v2917 = vpack.c.b16 %v1989, %v1981
        %v2918 = vpack.c.b16 %v1990, %v1982
        %v2919 = vpack.c.b16 %v1991, %v1983
        %v2920 = vpack.c.b16 %v2000, %v1992
        %v2921 = vpack.c.b16 %v2001, %v1993
        %v2922 = vpack.c.b16 %v2002, %v1994
        %v2923 = vpack.c.b16 %v2003, %v1995
        %v2924 = vpack.c.b16 %v2004, %v1996
        %v2925 = vpack.c.b16 %v2005, %v1997
        %v2926 = vpack.c.b16 %v2006, %v1998
        %v2927 = vpack.c.b16 %v2007, %v1999
        %v2928 = vpack.c.b16 %v2016, %v2008
        %v2929 = vpack.c.b16 %v2017, %v2009
        %v2930 = vpack.c.b16 %v2018, %v2010
        %v2931 = vpack.c.b16 %v2019, %v2011
        %v2932 = vpack.c.b16 %v2020, %v2012
        %v2933 = vpack.c.b16 %v2021, %v2013
        %v2934 = vpack.c.b16 %v2022, %v2014
        %v2935 = vpack.c.b16 %v2023, %v2015
        %v2936 = vpack.c.b16 %v2032, %v2024
        %v2937 = vpack.c.b16 %v2033, %v2025
        %v2938 = vpack.c.b16 %v2034, %v2026
        %v2939 = vpack.c.b16 %v2035, %v2027
        %v2940 = vpack.c.b16 %v2036, %v2028
        %v2941 = vpack.c.b16 %v2037, %v2029
        %v2942 = vpack.c.b16 %v2038, %v2030
        %v2943 = vpack.c.b16 %v2039, %v2031
        %v2944 = vpack.c.b16 %v2048, %v2040
        %v2945 = vpack.c.b16 %v2049, %v2041
        %v2946 = vpack.c.b16 %v2050, %v2042
        %v2947 = vpack.c.b16 %v2051, %v2043
        %v2948 = vpack.c.b16 %v2052, %v2044
        %v2949 = vpack.c.b16 %v2053, %v2045
        %v2950 = vpack.c.b16 %v2054, %v2046
        %v2951 = vpack.c.b16 %v2055, %v2047
        %v2952 = vpack.c.b16 %v2064, %v2056
        %v2953 = vpack.c.b16 %v2065, %v2057
        %v2954 = vpack.c.b16 %v2066, %v2058
        %v2955 = vpack.c.b16 %v2067, %v2059
        %v2956 = vpack.c.b16 %v2068, %v2060
        %v2957 = vpack.c.b16 %v2069, %v2061
        %v2958 = vpack.c.b16 %v2070, %v2062
        %v2959 = vpack.c.b16 %v2071, %v2063
        %v2960 = vpack.c.b16 %v2080, %v2072
        %v2961 = vpack.c.b16 %v2081, %v2073
        %v2962 = vpack.c.b16 %v2082, %v2074
        %v2963 = vpack.c.b16 %v2083, %v2075
        %v2964 = vpack.c.b16 %v2084, %v2076
        %v2965 = vpack.c.b16 %v2085, %v2077
        %v2966 = vpack.c.b16 %v2086, %v2078
        %v2967 = vpack.c.b16 %v2087, %v2079
        %v2968 = vpack.c.b16 %v2096, %v2088
        %v2969 = vpack.c.b16 %v2097, %v2089
        %v2970 = vpack.c.b16 %v2098, %v2090
        %v2971 = vpack.c.b16 %v2099, %v2091
        %v2972 = vpack.c.b16 %v2100, %v2092
        %v2973 = vpack.c.b16 %v2101, %v2093
        %v2974 = vpack.c.b16 %v2102, %v2094
        %v2975 = vpack.c.b16 %v2103, %v2095
        %v2976 = vpack.c.b16 %v2112, %v2104
        %v2977 = vpack.c.b16 %v2113, %v2105
        %v2978 = vpack.c.b16 %v2114, %v2106
        %v2979 = vpack.c.b16 %v2115, %v2107
        %v2980 = vpack.c.b16 %v2116, %v2108
        %v2981 = vpack.c.b16 %v2117, %v2109
        %v2982 = vpack.c.b16 %v2118, %v2110
        %v2983 = vpack.c.b16 %v2119, %v2111
        %v2984 = vpack.c.b16 %v2128, %v2120
        %v2985 = vpack.c.b16 %v2129, %v2121
        %v2986 = vpack.c.b16 %v2130, %v2122
        %v2987 = vpack.c.b16 %v2131, %v2123
        %v2988 = vpack.c.b16 %v2132, %v2124
        %v2989 = vpack.c.b16 %v2133, %v2125
        %v2990 = vpack.c.b16 %v2134, %v2126
        %v2991 = vpack.c.b16 %v2135, %v2127
        %v2992 = vpack.c.b16 %v2144, %v2136
        %v2993 = vpack.c.b16 %v2145, %v2137
        %v2994 = vpack.c.b16 %v2146, %v2138
        %v2995 = vpack.c.b16 %v2147, %v2139
        %v2996 = vpack.c.b16 %v2148, %v2140
        %v2997 = vpack.c.b16 %v2149, %v2141
        %v2998 = vpack.c.b16 %v2150, %v2142
        %v2999 = vpack.c.b16 %v2151, %v2143
        %v3000 = vpack.c.b16 %v2160, %v2152
        %v3001 = vpack.c.b16 %v2161, %v2153
        %v3002 = vpack.c.b16 %v2162, %v2154
        %v3003 = vpack.c.b16 %v2163, %v2155
        %v3004 = vpack.c.b16 %v2164, %v2156
        %v3005 = vpack.c.b16 %v2165, %v2157
        %v3006 = vpack.c.b16 %v2166, %v2158
        %v3007 = vpack.c.b16 %v2167, %v2159
        %v3008 = vpack.c.b16 %v2176, %v2168
        %v3009 = vpack.c.b16 %v2177, %v2169
        %v3010 = vpack.c.b16 %v2178, %v2170
        %v3011 = vpack.c.b16 %v2179, %v2171
        %v3012 = vpack.c.b16 %v2180, %v2172
        %v3013 = vpack.c.b16 %v2181, %v2173
        %v3014 = vpack.c.b16 %v2182, %v2174
        %v3015 = vpack.c.b16 %v2183, %v2175
        %v3016 = vpack.c.b16 %v2192, %v2184
        %v3017 = vpack.c.b16 %v2193, %v2185
        %v3018 = vpack.c.b16 %v2194, %v2186
        %v3019 = vpack.c.b16 %v2195, %v2187
        %v3020 = vpack.c.b16 %v2196, %v2188
        %v3021 = vpack.c.b16 %v2197, %v2189
        %v3022 = vpack.c.b16 %v2198, %v2190
        %v3023 = vpack.c.b16 %v2199, %v2191
        %v3024 = vpack.c.b16 %v2208, %v2200
        %v3025 = vpack.c.b16 %v2209, %v2201
        %v3026 = vpack.c.b16 %v2210, %v2202
        %v3027 = vpack.c.b16 %v2211, %v2203
        %v3028 = vpack.c.b16 %v2212, %v2204
        %v3029 = vpack.c.b16 %v2213, %v2205
        %v3030 = vpack.c.b16 %v2214, %v2206
        %v3031 = vpack.c.b16 %v2215, %v2207
        %v3032 = vpack.c.b16 %v2224, %v2216
        %v3033 = vpack.c.b16 %v2225, %v2217
        %v3034 = vpack.c.b16 %v2226, %v2218
        %v3035 = vpack.c.b16 %v2227, %v2219
        %v3036 = vpack.c.b16 %v2228, %v2220
        %v3037 = vpack.c.b16 %v2229, %v2221
        %v3038 = vpack.c.b16 %v2230, %v2222
        %v3039 = vpack.c.b16 %v2231, %v2223
        %v3040 = vpack.c.b16 %v2240, %v2232
        %v3041 = vpack.c.b16 %v2241, %v2233
        %v3042 = vpack.c.b16 %v2242, %v2234
        %v3043 = vpack.c.b16 %v2243, %v2235
        %v3044 = vpack.c.b16 %v2244, %v2236
        %v3045 = vpack.c.b16 %v2245, %v2237
        %v3046 = vpack.c.b16 %v2246, %v2238
        %v3047 = vpack.c.b16 %v2247, %v2239
        %v3048 = vpack.c.b16 %v2256, %v2248
        %v3049 = vpack.c.b16 %v2257, %v2249
        %v3050 = vpack.c.b16 %v2258, %v2250
        %v3051 = vpack.c.b16 %v2259, %v2251
        %v3052 = vpack.c.b16 %v2260, %v2252
        %v3053 = vpack.c.b16 %v2261, %v2253
        %v3054 = vpack.c.b16 %v2262, %v2254
        %v3055 = vpack.c.b16 %v2263, %v2255
        %v3056 = vpack.c.b16 %v2272, %v2264
        %v3057 = vpack.c.b16 %v2273, %v2265
        %v3058 = vpack.c.b16 %v2274, %v2266
        %v3059 = vpack.c.b16 %v2275, %v2267
        %v3060 = vpack.c.b16 %v2276, %v2268
        %v3061 = vpack.c.b16 %v2277, %v2269
        %v3062 = vpack.c.b16 %v2278, %v2270
        %v3063 = vpack.c.b16 %v2279, %v2271
        %v3064 = vpack.c.b16 %v2288, %v2280
        %v3065 = vpack.c.b16 %v2289, %v2281
        %v3066 = vpack.c.b16 %v2290, %v2282
        %v3067 = vpack.c.b16 %v2291, %v2283
        %v3068 = vpack.c.b16 %v2292, %v2284
        %v3069 = vpack.c.b16 %v2293, %v2285
        %v3070 = vpack.c.b16 %v2294, %v2286
        %v3071 = vpack.c.b16 %v2295, %v2287
        %v3072 = vpack.c.b16 %v2304, %v2296
        %v3073 = vpack.c.b16 %v2305, %v2297
        %v3074 = vpack.c.b16 %v2306, %v2298
        %v3075 = vpack.c.b16 %v2307, %v2299
        %v3076 = vpack.c.b16 %v2308, %v2300
        %v3077 = vpack.c.b16 %v2309, %v2301
        %v3078 = vpack.c.b16 %v2310, %v2302
        %v3079 = vpack.c.b16 %v2311, %v2303
        %v3080 = vpack.c.b16 %v2320, %v2312
        %v3081 = vpack.c.b16 %v2321, %v2313
        %v3082 = vpack.c.b16 %v2322, %v2314
        %v3083 = vpack.c.b16 %v2323, %v2315
        %v3084 = vpack.c.b16 %v2324, %v2316
        %v3085 = vpack.c.b16 %v2325, %v2317
        %v3086 = vpack.c.b16 %v2326, %v2318
        %v3087 = vpack.c.b16 %v2327, %v2319
        %v3088 = vpack.c.b16 %v2336, %v2328
        %v3089 = vpack.c.b16 %v2337, %v2329
        %v3090 = vpack.c.b16 %v2338, %v2330
        %v3091 = vpack.c.b16 %v2339, %v2331
        %v3092 = vpack.c.b16 %v2340, %v2332
        %v3093 = vpack.c.b16 %v2341, %v2333
        %v3094 = vpack.c.b16 %v2342, %v2334
        %v3095 = vpack.c.b16 %v2343, %v2335
        %v3096 = vpack.c.b16 %v2352, %v2344
        %v3097 = vpack.c.b16 %v2353, %v2345
        %v3098 = vpack.c.b16 %v2354, %v2346
        %v3099 = vpack.c.b16 %v2355, %v2347
        %v3100 = vpack.c.b16 %v2356, %v2348
        %v3101 = vpack.c.b16 %v2357, %v2349
        %v3102 = vpack.c.b16 %v2358, %v2350
        %v3103 = vpack.c.b16 %v2359, %v2351
        %v3104 = vpack.c.b16 %v2368, %v2360
        %v3105 = vpack.c.b16 %v2369, %v2361
        %v3106 = vpack.c.b16 %v2370, %v2362
        %v3107 = vpack.c.b16 %v2371, %v2363
        %v3108 = vpack.c.b16 %v2372, %v2364
        %v3109 = vpack.c.b16 %v2373, %v2365
        %v3110 = vpack.c.b16 %v2374, %v2366
        %v3111 = vpack.c.b16 %v2375, %v2367
        %v3112 = vpack.c.b16 %v2384, %v2376
        %v3113 = vpack.c.b16 %v2385, %v2377
        %v3114 = vpack.c.b16 %v2386, %v2378
        %v3115 = vpack.c.b16 %v2387, %v2379
        %v3116 = vpack.c.b16 %v2388, %v2380
        %v3117 = vpack.c.b16 %v2389, %v2381
        %v3118 = vpack.c.b16 %v2390, %v2382
        %v3119 = vpack.c.b16 %v2391, %v2383
        %v3120 = vpack.c.b16 %v2400, %v2392
        %v3121 = vpack.c.b16 %v2401, %v2393
        %v3122 = vpack.c.b16 %v2402, %v2394
        %v3123 = vpack.c.b16 %v2403, %v2395
        %v3124 = vpack.c.b16 %v2404, %v2396
        %v3125 = vpack.c.b16 %v2405, %v2397
        %v3126 = vpack.c.b16 %v2406, %v2398
        %v3127 = vpack.c.b16 %v2407, %v2399
        %v3128 = vpack.c.b16 %v2416, %v2408
        %v3129 = vpack.c.b16 %v2417, %v2409
        %v3130 = vpack.c.b16 %v2418, %v2410
        %v3131 = vpack.c.b16 %v2419, %v2411
        %v3132 = vpack.c.b16 %v2420, %v2412
        %v3133 = vpack.c.b16 %v2421, %v2413
        %v3134 = vpack.c.b16 %v2422, %v2414
        %v3135 = vpack.c.b16 %v2423, %v2415
        %v3136 = vpack.c.b16 %v2432, %v2424
        %v3137 = vpack.c.b16 %v2433, %v2425
        %v3138 = vpack.c.b16 %v2434, %v2426
        %v3139 = vpack.c.b16 %v2435, %v2427
        %v3140 = vpack.c.b16 %v2436, %v2428
        %v3141 = vpack.c.b16 %v2437, %v2429
        %v3142 = vpack.c.b16 %v2438, %v2430
        %v3143 = vpack.c.b16 %v2439, %v2431
        %v3144 = vpack.c.b16 %v2448, %v2440
        %v3145 = vpack.c.b16 %v2449, %v2441
        %v3146 = vpack.c.b16 %v2450, %v2442
        %v3147 = vpack.c.b16 %v2451, %v2443
        %v3148 = vpack.c.b16 %v2452, %v2444
        %v3149 = vpack.c.b16 %v2453, %v2445
        %v3150 = vpack.c.b16 %v2454, %v2446
        %v3151 = vpack.c.b16 %v2455, %v2447
        %v3152 = vpack.c.b16 %v2464, %v2456
        %v3153 = vpack.c.b16 %v2465, %v2457
        %v3154 = vpack.c.b16 %v2466, %v2458
        %v3155 = vpack.c.b16 %v2467, %v2459
        %v3156 = vpack.c.b16 %v2468, %v2460
        %v3157 = vpack.c.b16 %v2469, %v2461
        %v3158 = vpack.c.b16 %v2470, %v2462
        %v3159 = vpack.c.b16 %v2471, %v2463
        %v3160 = vpack.c.b16 %v2480, %v2472
        %v3161 = vpack.c.b16 %v2481, %v2473
        %v3162 = vpack.c.b16 %v2482, %v2474
        %v3163 = vpack.c.b16 %v2483, %v2475
        %v3164 = vpack.c.b16 %v2484, %v2476
        %v3165 = vpack.c.b16 %v2485, %v2477
        %v3166 = vpack.c.b16 %v2486, %v2478
        %v3167 = vpack.c.b16 %v2487, %v2479
        %v3168 = vpack.c.b16 %v2496, %v2488
        %v3169 = vpack.c.b16 %v2497, %v2489
        %v3170 = vpack.c.b16 %v2498, %v2490
        %v3171 = vpack.c.b16 %v2499, %v2491
        %v3172 = vpack.c.b16 %v2500, %v2492
        %v3173 = vpack.c.b16 %v2501, %v2493
        %v3174 = vpack.c.b16 %v2502, %v2494
        %v3175 = vpack.c.b16 %v2503, %v2495
        %v3176 = vpack.c.b16 %v2512, %v2504
        %v3177 = vpack.c.b16 %v2513, %v2505
        %v3178 = vpack.c.b16 %v2514, %v2506
        %v3179 = vpack.c.b16 %v2515, %v2507
        %v3180 = vpack.c.b16 %v2516, %v2508
        %v3181 = vpack.c.b16 %v2517, %v2509
        %v3182 = vpack.c.b16 %v2518, %v2510
        %v3183 = vpack.c.b16 %v2519, %v2511
        %v3184 = vpack.c.b16 %v2528, %v2520
        %v3185 = vpack.c.b16 %v2529, %v2521
        %v3186 = vpack.c.b16 %v2530, %v2522
        %v3187 = vpack.c.b16 %v2531, %v2523
        %v3188 = vpack.c.b16 %v2532, %v2524
        %v3189 = vpack.c.b16 %v2533, %v2525
        %v3190 = vpack.c.b16 %v2534, %v2526
        %v3191 = vpack.c.b16 %v2535, %v2527
        %v3192 = vpack.c.b16 %v2544, %v2536
        %v3193 = vpack.c.b16 %v2545, %v2537
        %v3194 = vpack.c.b16 %v2546, %v2538
        %v3195 = vpack.c.b16 %v2547, %v2539
        %v3196 = vpack.c.b16 %v2548, %v2540
        %v3197 = vpack.c.b16 %v2549, %v2541
        %v3198 = vpack.c.b16 %v2550, %v2542
        %v3199 = vpack.c.b16 %v2551, %v2543
        %v3200 = vpack.c.b16 %v2560, %v2552
        %v3201 = vpack.c.b16 %v2561, %v2553
        %v3202 = vpack.c.b16 %v2562, %v2554
        %v3203 = vpack.c.b16 %v2563, %v2555
        %v3204 = vpack.c.b16 %v2564, %v2556
        %v3205 = vpack.c.b16 %v2565, %v2557
        %v3206 = vpack.c.b16 %v2566, %v2558
        %v3207 = vpack.c.b16 %v2567, %v2559
        %v3208 = vpack.c.b16 %v2576, %v2568
        %v3209 = vpack.c.b16 %v2577, %v2569
        %v3210 = vpack.c.b16 %v2578, %v2570
        %v3211 = vpack.c.b16 %v2579, %v2571
        %v3212 = vpack.c.b16 %v2580, %v2572
        %v3213 = vpack.c.b16 %v2581, %v2573
        %v3214 = vpack.c.b16 %v2582, %v2574
        %v3215 = vpack.c.b16 %v2583, %v2575
        %v3216 = vpack.c.b16 %v2592, %v2584
        %v3217 = vpack.c.b16 %v2593, %v2585
        %v3218 = vpack.c.b16 %v2594, %v2586
        %v3219 = vpack.c.b16 %v2595, %v2587
        %v3220 = vpack.c.b16 %v2596, %v2588
        %v3221 = vpack.c.b16 %v2597, %v2589
        %v3222 = vpack.c.b16 %v2598, %v2590
        %v3223 = vpack.c.b16 %v2599, %v2591
        %v3224 = vpack.c.b16 %v2608, %v2600
        %v3225 = vpack.c.b16 %v2609, %v2601
        %v3226 = vpack.c.b16 %v2610, %v2602
        %v3227 = vpack.c.b16 %v2611, %v2603
        %v3228 = vpack.c.b16 %v2612, %v2604
        %v3229 = vpack.c.b16 %v2613, %v2605
        %v3230 = vpack.c.b16 %v2614, %v2606
        %v3231 = vpack.c.b16 %v2615, %v2607
        %v3232 = vpack.c.b16 %v2624, %v2616
        %v3233 = vpack.c.b16 %v2625, %v2617
        %v3234 = vpack.c.b16 %v2626, %v2618
        %v3235 = vpack.c.b16 %v2627, %v2619
        %v3236 = vpack.c.b16 %v2628, %v2620
        %v3237 = vpack.c.b16 %v2629, %v2621
        %v3238 = vpack.c.b16 %v2630, %v2622
        %v3239 = vpack.c.b16 %v2631, %v2623
        %v3240 = vpack.c.b16 %v2640, %v2632
        %v3241 = vpack.c.b16 %v2641, %v2633
        %v3242 = vpack.c.b16 %v2642, %v2634
        %v3243 = vpack.c.b16 %v2643, %v2635
        %v3244 = vpack.c.b16 %v2644, %v2636
        %v3245 = vpack.c.b16 %v2645, %v2637
        %v3246 = vpack.c.b16 %v2646, %v2638
        %v3247 = vpack.c.b16 %v2647, %v2639
        %v3248 = vpack.c.b16 %v2656, %v2648
        %v3249 = vpack.c.b16 %v2657, %v2649
        %v3250 = vpack.c.b16 %v2658, %v2650
        %v3251 = vpack.c.b16 %v2659, %v2651
        %v3252 = vpack.c.b16 %v2660, %v2652
        %v3253 = vpack.c.b16 %v2661, %v2653
        %v3254 = vpack.c.b16 %v2662, %v2654
        %v3255 = vpack.c.b16 %v2663, %v2655
        %v3256 = vpack.c.b16 %v2672, %v2664
        %v3257 = vpack.c.b16 %v2673, %v2665
        %v3258 = vpack.c.b16 %v2674, %v2666
        %v3259 = vpack.c.b16 %v2675, %v2667
        %v3260 = vpack.c.b16 %v2676, %v2668
        %v3261 = vpack.c.b16 %v2677, %v2669
        %v3262 = vpack.c.b16 %v2678, %v2670
        %v3263 = vpack.c.b16 %v2679, %v2671
        %v3264 = vpack.c.b16 %v2688, %v2680
        %v3265 = vpack.c.b16 %v2689, %v2681
        %v3266 = vpack.c.b16 %v2690, %v2682
        %v3267 = vpack.c.b16 %v2691, %v2683
        %v3268 = vpack.c.b16 %v2692, %v2684
        %v3269 = vpack.c.b16 %v2693, %v2685
        %v3270 = vpack.c.b16 %v2694, %v2686
        %v3271 = vpack.c.b16 %v2695, %v2687
        %v3272 = vpack.c.b16 %v2704, %v2696
        %v3273 = vpack.c.b16 %v2705, %v2697
        %v3274 = vpack.c.b16 %v2706, %v2698
        %v3275 = vpack.c.b16 %v2707, %v2699
        %v3276 = vpack.c.b16 %v2708, %v2700
        %v3277 = vpack.c.b16 %v2709, %v2701
        %v3278 = vpack.c.b16 %v2710, %v2702
        %v3279 = vpack.c.b16 %v2711, %v2703
        %v3280 = vpack.c.b16 %v2720, %v2712
        %v3281 = vpack.c.b16 %v2721, %v2713
        %v3282 = vpack.c.b16 %v2722, %v2714
        %v3283 = vpack.c.b16 %v2723, %v2715
        %v3284 = vpack.c.b16 %v2724, %v2716
        %v3285 = vpack.c.b16 %v2725, %v2717
        %v3286 = vpack.c.b16 %v2726, %v2718
        %v3287 = vpack.c.b16 %v2727, %v2719
        %v3288 = vpack.c.b16 %v2736, %v2728
        %v3289 = vpack.c.b16 %v2737, %v2729
        %v3290 = vpack.c.b16 %v2738, %v2730
        %v3291 = vpack.c.b16 %v2739, %v2731
        %v3292 = vpack.c.b16 %v2740, %v2732
        %v3293 = vpack.c.b16 %v2741, %v2733
        %v3294 = vpack.c.b16 %v2742, %v2734
        %v3295 = vpack.c.b16 %v2743, %v2735
        %v3296 = vpack.c.b16 %v2752, %v2744
        %v3297 = vpack.c.b16 %v2753, %v2745
        %v3298 = vpack.c.b16 %v2754, %v2746
        %v3299 = vpack.c.b16 %v2755, %v2747
        %v3300 = vpack.c.b16 %v2756, %v2748
        %v3301 = vpack.c.b16 %v2757, %v2749
        %v3302 = vpack.c.b16 %v2758, %v2750
        %v3303 = vpack.c.b16 %v2759, %v2751
        %v3304 = vpack.c.b16 %v2768, %v2760
        %v3305 = vpack.c.b16 %v2769, %v2761
        %v3306 = vpack.c.b16 %v2770, %v2762
        %v3307 = vpack.c.b16 %v2771, %v2763
        %v3308 = vpack.c.b16 %v2772, %v2764
        %v3309 = vpack.c.b16 %v2773, %v2765
        %v3310 = vpack.c.b16 %v2774, %v2766
        %v3311 = vpack.c.b16 %v2775, %v2767
        %v3312 = vpack.c.b16 %v2784, %v2776
        %v3313 = vpack.c.b16 %v2785, %v2777
        %v3314 = vpack.c.b16 %v2786, %v2778
        %v3315 = vpack.c.b16 %v2787, %v2779
        %v3316 = vpack.c.b16 %v2788, %v2780
        %v3317 = vpack.c.b16 %v2789, %v2781
        %v3318 = vpack.c.b16 %v2790, %v2782
        %v3319 = vpack.c.b16 %v2791, %v2783
        %v3320 = vpack.c.b16 %v2800, %v2792
        %v3321 = vpack.c.b16 %v2801, %v2793
        %v3322 = vpack.c.b16 %v2802, %v2794
        %v3323 = vpack.c.b16 %v2803, %v2795
        %v3324 = vpack.c.b16 %v2804, %v2796
        %v3325 = vpack.c.b16 %v2805, %v2797
        %v3326 = vpack.c.b16 %v2806, %v2798
        %v3327 = vpack.c.b16 %v2807, %v2799
        %v3328 = vpack.c.b16 %v2816, %v2808
        %v3329 = vpack.c.b16 %v2817, %v2809
        %v3330 = vpack.c.b16 %v2818, %v2810
        %v3331 = vpack.c.b16 %v2819, %v2811
        %v3332 = vpack.c.b16 %v2820, %v2812
        %v3333 = vpack.c.b16 %v2821, %v2813
        %v3334 = vpack.c.b16 %v2822, %v2814
        %v3335 = vpack.c.b16 %v2823, %v2815
        %3848 = vmatprep.subr.bf16.mxu0 %v2825
        %3849 = vmatpush1.bf16.msra.mxu0 %v2824
        %3850 = vmatprep.subr.bf16.mxu0 %v2833
        %3851 = vmatpush1.bf16.msra.mxu0 %v2832
        %3852 = vmatprep.subr.bf16.mxu0 %v2841
        %3853 = vmatpush1.bf16.msra.mxu0 %v2840
        %3854 = vmatprep.subr.bf16.mxu0 %v2849
        %3855 = vmatpush1.bf16.msra.mxu0 %v2848
        %3856 = vmatprep.subr.bf16.mxu0 %v2857
        %3857 = vmatpush1.bf16.msra.mxu0 %v2856
        %3858 = vmatprep.subr.bf16.mxu0 %v2865
        %3859 = vmatpush1.bf16.msra.mxu0 %v2864
        %3860 = vmatprep.subr.bf16.mxu0 %v2873
        %3861 = vmatpush1.bf16.msra.mxu0 %v2872
        %3862 = vmatprep.subr.bf16.mxu0 %v2881
        %3863 = vmatpush1.bf16.msra.mxu0 %v2880
        %3864 = vmatprep.subr.bf16.mxu0 %v2889
        %3865 = vmatpush1.bf16.msra.mxu0 %v2888
        %3866 = vmatprep.subr.bf16.mxu0 %v2897
        %3867 = vmatpush1.bf16.msra.mxu0 %v2896
        %3868 = vmatprep.subr.bf16.mxu0 %v2905
        %3869 = vmatpush1.bf16.msra.mxu0 %v2904
        %3870 = vmatprep.subr.bf16.mxu0 %v2913
        %3871 = vmatpush1.bf16.msra.mxu0 %v2912
        %3872 = vmatprep.subr.bf16.mxu0 %v2921
        %3873 = vmatpush1.bf16.msra.mxu0 %v2920
        %3874 = vmatprep.subr.bf16.mxu0 %v2929
        %3875 = vmatpush1.bf16.msra.mxu0 %v2928
        %3876 = vmatprep.subr.bf16.mxu0 %v2937
        %3877 = vmatpush1.bf16.msra.mxu0 %v2936
        %3878 = vmatprep.subr.bf16.mxu0 %v2945
        %3879 = vmatpush1.bf16.msra.mxu0 %v2944
        %3880 = vmatprep.mubr.bf16.mxu0 %v1273
        %3881 = vmatmul.mubr.bf16.gmra.mrb[0].mxu0 %v1272
        %v3882 = vpop.f32.mrb[0].mxu0
        %v3883 = vadd.f32 %v1223, %v3882
        %v3884 = vpop.f32.mrb[0].mxu0
        %v3885 = vadd.f32 %v1227, %v3884
        %v3886 = vpop.f32.mrb[0].mxu0
        %v3887 = vpop.f32.mrb[0].mxu0
        %3888 = vdwg.mxu0
        %3889 = vmatprep.subr.bf16.mxu0 %v2953
        %3890 = vmatpush1.bf16.msra.mxu0 %v2952
        %3891 = vmatprep.subr.bf16.mxu0 %v2961
        %3892 = vmatpush1.bf16.msra.mxu0 %v2960
        %3893 = vmatprep.subr.bf16.mxu0 %v2969
        %3894 = vmatpush1.bf16.msra.mxu0 %v2968
        %3895 = vmatprep.subr.bf16.mxu0 %v2977
        %3896 = vmatpush1.bf16.msra.mxu0 %v2976
        %3897 = vmatprep.subr.bf16.mxu0 %v2985
        %3898 = vmatpush1.bf16.msra.mxu0 %v2984
        %3899 = vmatprep.subr.bf16.mxu0 %v2993
        %3900 = vmatpush1.bf16.msra.mxu0 %v2992
        %3901 = vmatprep.subr.bf16.mxu0 %v3001
        %3902 = vmatpush1.bf16.msra.mxu0 %v3000
        %3903 = vmatprep.subr.bf16.mxu0 %v3009
        %3904 = vmatpush1.bf16.msra.mxu0 %v3008
        %3905 = vmatprep.subr.bf16.mxu0 %v3017
        %3906 = vmatpush1.bf16.msra.mxu0 %v3016
        %3907 = vmatprep.subr.bf16.mxu0 %v3025
        %3908 = vmatpush1.bf16.msra.mxu0 %v3024
        %3909 = vmatprep.subr.bf16.mxu0 %v3033
        %3910 = vmatpush1.bf16.msra.mxu0 %v3032
        %3911 = vmatprep.subr.bf16.mxu0 %v3041
        %3912 = vmatpush1.bf16.msra.mxu0 %v3040
        %3913 = vmatprep.subr.bf16.mxu0 %v3049
        %3914 = vmatpush1.bf16.msra.mxu0 %v3048
        %3915 = vmatprep.subr.bf16.mxu0 %v3057
        %3916 = vmatpush1.bf16.msra.mxu0 %v3056
        %3917 = vmatprep.subr.bf16.mxu0 %v3065
        %3918 = vmatpush1.bf16.msra.mxu0 %v3064
        %3919 = vmatprep.subr.bf16.mxu0 %v3073
        %3920 = vmatpush1.bf16.msra.mxu0 %v3072
        %3921 = vmatprep.mubr.bf16.mxu0 %v1275
        %3922 = vmatmul.mubr.bf16.gmra.mrb[0].mxu0 %v1274
        %v3923 = vpop.f32.mrb[0].mxu0
        %v3924 = vadd.f32 %v3883, %v3923
        %v3925 = vpop.f32.mrb[0].mxu0
        %v3926 = vadd.f32 %v3885, %v3925
        %v3927 = vpop.f32.mrb[0].mxu0
        %v3928 = vpop.f32.mrb[0].mxu0
        %3929 = vdwg.mxu0
        %3930 = vmatprep.subr.bf16.mxu0 %v3081
        %3931 = vmatpush1.bf16.msra.mxu0 %v3080
        %3932 = vmatprep.subr.bf16.mxu0 %v3089
        %3933 = vmatpush1.bf16.msra.mxu0 %v3088
        %3934 = vmatprep.subr.bf16.mxu0 %v3097
        %3935 = vmatpush1.bf16.msra.mxu0 %v3096
        %3936 = vmatprep.subr.bf16.mxu0 %v3105
        %3937 = vmatpush1.bf16.msra.mxu0 %v3104
        %3938 = vmatprep.subr.bf16.mxu0 %v3113
        %3939 = vmatpush1.bf16.msra.mxu0 %v3112
        %3940 = vmatprep.subr.bf16.mxu0 %v3121
        %3941 = vmatpush1.bf16.msra.mxu0 %v3120
        %3942 = vmatprep.subr.bf16.mxu0 %v3129
        %3943 = vmatpush1.bf16.msra.mxu0 %v3128
        %3944 = vmatprep.subr.bf16.mxu0 %v3137
        %3945 = vmatpush1.bf16.msra.mxu0 %v3136
        %3946 = vmatprep.subr.bf16.mxu0 %v3145
        %3947 = vmatpush1.bf16.msra.mxu0 %v3144
        %3948 = vmatprep.subr.bf16.mxu0 %v3153
        %3949 = vmatpush1.bf16.msra.mxu0 %v3152
        %3950 = vmatprep.subr.bf16.mxu0 %v3161
        %3951 = vmatpush1.bf16.msra.mxu0 %v3160
        %3952 = vmatprep.subr.bf16.mxu0 %v3169
        %3953 = vmatpush1.bf16.msra.mxu0 %v3168
        %3954 = vmatprep.subr.bf16.mxu0 %v3177
        %3955 = vmatpush1.bf16.msra.mxu0 %v3176
        %3956 = vmatprep.subr.bf16.mxu0 %v3185
        %3957 = vmatpush1.bf16.msra.mxu0 %v3184
        %3958 = vmatprep.subr.bf16.mxu0 %v3193
        %3959 = vmatpush1.bf16.msra.mxu0 %v3192
        %3960 = vmatprep.subr.bf16.mxu0 %v3201
        %3961 = vmatpush1.bf16.msra.mxu0 %v3200
        %3962 = vmatprep.mubr.bf16.mxu0 %v1277
        %3963 = vmatmul.mubr.bf16.gmra.mrb[0].mxu0 %v1276
        %v3964 = vpop.f32.mrb[0].mxu0
        %v3965 = vadd.f32 %v3924, %v3964
        %v3966 = vpop.f32.mrb[0].mxu0
        %v3967 = vadd.f32 %v3926, %v3966
        %v3968 = vpop.f32.mrb[0].mxu0
        %v3969 = vpop.f32.mrb[0].mxu0
        %3970 = vdwg.mxu0
        %3971 = vmatprep.subr.bf16.mxu0 %v3209
        %3972 = vmatpush1.bf16.msra.mxu0 %v3208
        %3973 = vmatprep.subr.bf16.mxu0 %v3217
        %3974 = vmatpush1.bf16.msra.mxu0 %v3216
        %3975 = vmatprep.subr.bf16.mxu0 %v3225
        %3976 = vmatpush1.bf16.msra.mxu0 %v3224
        %3977 = vmatprep.subr.bf16.mxu0 %v3233
        %3978 = vmatpush1.bf16.msra.mxu0 %v3232
        %3979 = vmatprep.subr.bf16.mxu0 %v3241
        %3980 = vmatpush1.bf16.msra.mxu0 %v3240
        %3981 = vmatprep.subr.bf16.mxu0 %v3249
        %3982 = vmatpush1.bf16.msra.mxu0 %v3248
        %3983 = vmatprep.subr.bf16.mxu0 %v3257
        %3984 = vmatpush1.bf16.msra.mxu0 %v3256
        %3985 = vmatprep.subr.bf16.mxu0 %v3265
        %3986 = vmatpush1.bf16.msra.mxu0 %v3264
        %3987 = vmatprep.subr.bf16.mxu0 %v3273
        %3988 = vmatpush1.bf16.msra.mxu0 %v3272
        %3989 = vmatprep.subr.bf16.mxu0 %v3281
        %3990 = vmatpush1.bf16.msra.mxu0 %v3280
        %3991 = vmatprep.subr.bf16.mxu0 %v3289
        %3992 = vmatpush1.bf16.msra.mxu0 %v3288
        %3993 = vmatprep.subr.bf16.mxu0 %v3297
        %3994 = vmatpush1.bf16.msra.mxu0 %v3296
        %3995 = vmatprep.subr.bf16.mxu0 %v3305
        %3996 = vmatpush1.bf16.msra.mxu0 %v3304
        %3997 = vmatprep.subr.bf16.mxu0 %v3313
        %3998 = vmatpush1.bf16.msra.mxu0 %v3312
        %3999 = vmatprep.subr.bf16.mxu0 %v3321
        %4000 = vmatpush1.bf16.msra.mxu0 %v3320
        %4001 = vmatprep.subr.bf16.mxu0 %v3329
        %4002 = vmatpush1.bf16.msra.mxu0 %v3328
        %4003 = vmatprep.mubr.bf16.mxu0 %v1279
        %4004 = vmatmul.mubr.bf16.gmra.mrb[0].mxu0 %v1278
        %v4005 = vpop.f32.mrb[0].mxu0
        %v4006 = vadd.f32 %v3965, %v4005
        %v4007 = vpop.f32.mrb[0].mxu0
        %v4008 = vadd.f32 %v3967, %v4007
        %v4009 = vpop.f32.mrb[0].mxu0
        %v4010 = vpop.f32.mrb[0].mxu0
        %4011 = vdwg.mxu0
        %4012 = vmatprep.subr.bf16.mxu0 %v2827
        %4013 = vmatpush1.bf16.msra.mxu0 %v2826
        %4014 = vmatprep.subr.bf16.mxu0 %v2835
        %4015 = vmatpush1.bf16.msra.mxu0 %v2834
        %4016 = vmatprep.subr.bf16.mxu0 %v2843
        %4017 = vmatpush1.bf16.msra.mxu0 %v2842
        %4018 = vmatprep.subr.bf16.mxu0 %v2851
        %4019 = vmatpush1.bf16.msra.mxu0 %v2850
        %4020 = vmatprep.subr.bf16.mxu0 %v2859
        %4021 = vmatpush1.bf16.msra.mxu0 %v2858
        %4022 = vmatprep.subr.bf16.mxu0 %v2867
        %4023 = vmatpush1.bf16.msra.mxu0 %v2866
        %4024 = vmatprep.subr.bf16.mxu0 %v2875
        %4025 = vmatpush1.bf16.msra.mxu0 %v2874
        %4026 = vmatprep.subr.bf16.mxu0 %v2883
        %4027 = vmatpush1.bf16.msra.mxu0 %v2882
        %4028 = vmatprep.subr.bf16.mxu0 %v2891
        %4029 = vmatpush1.bf16.msra.mxu0 %v2890
        %4030 = vmatprep.subr.bf16.mxu0 %v2899
        %4031 = vmatpush1.bf16.msra.mxu0 %v2898
        %4032 = vmatprep.subr.bf16.mxu0 %v2907
        %4033 = vmatpush1.bf16.msra.mxu0 %v2906
        %4034 = vmatprep.subr.bf16.mxu0 %v2915
        %4035 = vmatpush1.bf16.msra.mxu0 %v2914
        %4036 = vmatprep.subr.bf16.mxu0 %v2923
        %4037 = vmatpush1.bf16.msra.mxu0 %v2922
        %4038 = vmatprep.subr.bf16.mxu0 %v2931
        %4039 = vmatpush1.bf16.msra.mxu0 %v2930
        %4040 = vmatprep.subr.bf16.mxu0 %v2939
        %4041 = vmatpush1.bf16.msra.mxu0 %v2938
        %4042 = vmatprep.subr.bf16.mxu0 %v2947
        %4043 = vmatpush1.bf16.msra.mxu0 %v2946
        %4044 = vmatprep.mubr.bf16.mxu0 %v1273
        %4045 = vmatmul.mubr.bf16.gmra.mrb[0].mxu0 %v1272
        %v4046 = vpop.f32.mrb[0].mxu0
        %v4047 = vadd.f32 %v1231, %v4046
        %v4048 = vpop.f32.mrb[0].mxu0
        %v4049 = vadd.f32 %v1235, %v4048
        %v4050 = vpop.f32.mrb[0].mxu0
        %v4051 = vpop.f32.mrb[0].mxu0
        %4052 = vdwg.mxu0
        %4053 = vmatprep.subr.bf16.mxu0 %v2955
        %4054 = vmatpush1.bf16.msra.mxu0 %v2954
        %4055 = vmatprep.subr.bf16.mxu0 %v2963
        %4056 = vmatpush1.bf16.msra.mxu0 %v2962
        %4057 = vmatprep.subr.bf16.mxu0 %v2971
        %4058 = vmatpush1.bf16.msra.mxu0 %v2970
        %4059 = vmatprep.subr.bf16.mxu0 %v2979
        %4060 = vmatpush1.bf16.msra.mxu0 %v2978
        %4061 = vmatprep.subr.bf16.mxu0 %v2987
        %4062 = vmatpush1.bf16.msra.mxu0 %v2986
        %4063 = vmatprep.subr.bf16.mxu0 %v2995
        %4064 = vmatpush1.bf16.msra.mxu0 %v2994
        %4065 = vmatprep.subr.bf16.mxu0 %v3003
        %4066 = vmatpush1.bf16.msra.mxu0 %v3002
        %4067 = vmatprep.subr.bf16.mxu0 %v3011
        %4068 = vmatpush1.bf16.msra.mxu0 %v3010
        %4069 = vmatprep.subr.bf16.mxu0 %v3019
        %4070 = vmatpush1.bf16.msra.mxu0 %v3018
        %4071 = vmatprep.subr.bf16.mxu0 %v3027
        %4072 = vmatpush1.bf16.msra.mxu0 %v3026
        %4073 = vmatprep.subr.bf16.mxu0 %v3035
        %4074 = vmatpush1.bf16.msra.mxu0 %v3034
        %4075 = vmatprep.subr.bf16.mxu0 %v3043
        %4076 = vmatpush1.bf16.msra.mxu0 %v3042
        %4077 = vmatprep.subr.bf16.mxu0 %v3051
        %4078 = vmatpush1.bf16.msra.mxu0 %v3050
        %4079 = vmatprep.subr.bf16.mxu0 %v3059
        %4080 = vmatpush1.bf16.msra.mxu0 %v3058
        %4081 = vmatprep.subr.bf16.mxu0 %v3067
        %4082 = vmatpush1.bf16.msra.mxu0 %v3066
        %4083 = vmatprep.subr.bf16.mxu0 %v3075
        %4084 = vmatpush1.bf16.msra.mxu0 %v3074
        %4085 = vmatprep.mubr.bf16.mxu0 %v1275
        %4086 = vmatmul.mubr.bf16.gmra.mrb[0].mxu0 %v1274
        %v4087 = vpop.f32.mrb[0].mxu0
        %v4088 = vadd.f32 %v4047, %v4087
        %v4089 = vpop.f32.mrb[0].mxu0
        %v4090 = vadd.f32 %v4049, %v4089
        %v4091 = vpop.f32.mrb[0].mxu0
        %v4092 = vpop.f32.mrb[0].mxu0
        %4093 = vdwg.mxu0
        %4094 = vmatprep.subr.bf16.mxu0 %v3083
        %4095 = vmatpush1.bf16.msra.mxu0 %v3082
        %4096 = vmatprep.subr.bf16.mxu0 %v3091
        %4097 = vmatpush1.bf16.msra.mxu0 %v3090
        %4098 = vmatprep.subr.bf16.mxu0 %v3099
        %4099 = vmatpush1.bf16.msra.mxu0 %v3098
        %4100 = vmatprep.subr.bf16.mxu0 %v3107
        %4101 = vmatpush1.bf16.msra.mxu0 %v3106
        %4102 = vmatprep.subr.bf16.mxu0 %v3115
        %4103 = vmatpush1.bf16.msra.mxu0 %v3114
        %4104 = vmatprep.subr.bf16.mxu0 %v3123
        %4105 = vmatpush1.bf16.msra.mxu0 %v3122
        %4106 = vmatprep.subr.bf16.mxu0 %v3131
        %4107 = vmatpush1.bf16.msra.mxu0 %v3130
        %4108 = vmatprep.subr.bf16.mxu0 %v3139
        %4109 = vmatpush1.bf16.msra.mxu0 %v3138
        %4110 = vmatprep.subr.bf16.mxu0 %v3147
        %4111 = vmatpush1.bf16.msra.mxu0 %v3146
        %4112 = vmatprep.subr.bf16.mxu0 %v3155
        %4113 = vmatpush1.bf16.msra.mxu0 %v3154
        %4114 = vmatprep.subr.bf16.mxu0 %v3163
        %4115 = vmatpush1.bf16.msra.mxu0 %v3162
        %4116 = vmatprep.subr.bf16.mxu0 %v3171
        %4117 = vmatpush1.bf16.msra.mxu0 %v3170
        %4118 = vmatprep.subr.bf16.mxu0 %v3179
        %4119 = vmatpush1.bf16.msra.mxu0 %v3178
        %4120 = vmatprep.subr.bf16.mxu0 %v3187
        %4121 = vmatpush1.bf16.msra.mxu0 %v3186
        %4122 = vmatprep.subr.bf16.mxu0 %v3195
        %4123 = vmatpush1.bf16.msra.mxu0 %v3194
        %4124 = vmatprep.subr.bf16.mxu0 %v3203
        %4125 = vmatpush1.bf16.msra.mxu0 %v3202
        %4126 = vmatprep.mubr.bf16.mxu0 %v1277
        %4127 = vmatmul.mubr.bf16.gmra.mrb[0].mxu0 %v1276
        %v4128 = vpop.f32.mrb[0].mxu0
        %v4129 = vadd.f32 %v4088, %v4128
        %v4130 = vpop.f32.mrb[0].mxu0
        %v4131 = vadd.f32 %v4090, %v4130
        %v4132 = vpop.f32.mrb[0].mxu0
        %v4133 = vpop.f32.mrb[0].mxu0
        %4134 = vdwg.mxu0
        %4135 = vmatprep.subr.bf16.mxu0 %v3211
        %4136 = vmatpush1.bf16.msra.mxu0 %v3210
        %4137 = vmatprep.subr.bf16.mxu0 %v3219
        %4138 = vmatpush1.bf16.msra.mxu0 %v3218
        %4139 = vmatprep.subr.bf16.mxu0 %v3227
        %4140 = vmatpush1.bf16.msra.mxu0 %v3226
        %4141 = vmatprep.subr.bf16.mxu0 %v3235
        %4142 = vmatpush1.bf16.msra.mxu0 %v3234
        %4143 = vmatprep.subr.bf16.mxu0 %v3243
        %4144 = vmatpush1.bf16.msra.mxu0 %v3242
        %4145 = vmatprep.subr.bf16.mxu0 %v3251
        %4146 = vmatpush1.bf16.msra.mxu0 %v3250
        %4147 = vmatprep.subr.bf16.mxu0 %v3259
        %4148 = vmatpush1.bf16.msra.mxu0 %v3258
        %4149 = vmatprep.subr.bf16.mxu0 %v3267
        %4150 = vmatpush1.bf16.msra.mxu0 %v3266
        %4151 = vmatprep.subr.bf16.mxu0 %v3275
        %4152 = vmatpush1.bf16.msra.mxu0 %v3274
        %4153 = vmatprep.subr.bf16.mxu0 %v3283
        %4154 = vmatpush1.bf16.msra.mxu0 %v3282
        %4155 = vmatprep.subr.bf16.mxu0 %v3291
        %4156 = vmatpush1.bf16.msra.mxu0 %v3290
        %4157 = vmatprep.subr.bf16.mxu0 %v3299
        %4158 = vmatpush1.bf16.msra.mxu0 %v3298
        %4159 = vmatprep.subr.bf16.mxu0 %v3307
        %4160 = vmatpush1.bf16.msra.mxu0 %v3306
        %4161 = vmatprep.subr.bf16.mxu0 %v3315
        %4162 = vmatpush1.bf16.msra.mxu0 %v3314
        %4163 = vmatprep.subr.bf16.mxu0 %v3323
        %4164 = vmatpush1.bf16.msra.mxu0 %v3322
        %4165 = vmatprep.subr.bf16.mxu0 %v3331
        %4166 = vmatpush1.bf16.msra.mxu0 %v3330
        %4167 = vmatprep.mubr.bf16.mxu0 %v1279
        %4168 = vmatmul.mubr.bf16.gmra.mrb[0].mxu0 %v1278
        %v4169 = vpop.f32.mrb[0].mxu0
        %v4170 = vadd.f32 %v4129, %v4169
        %v4171 = vpop.f32.mrb[0].mxu0
        %v4172 = vadd.f32 %v4131, %v4171
        %v4173 = vpop.f32.mrb[0].mxu0
        %v4174 = vpop.f32.mrb[0].mxu0
        %4175 = vdwg.mxu0
        %4176 = vmatprep.subr.bf16.mxu0 %v2829
        %4177 = vmatpush1.bf16.msra.mxu0 %v2828
        %4178 = vmatprep.subr.bf16.mxu0 %v2837
        %4179 = vmatpush1.bf16.msra.mxu0 %v2836
        %4180 = vmatprep.subr.bf16.mxu0 %v2845
        %4181 = vmatpush1.bf16.msra.mxu0 %v2844
        %4182 = vmatprep.subr.bf16.mxu0 %v2853
        %4183 = vmatpush1.bf16.msra.mxu0 %v2852
        %4184 = vmatprep.subr.bf16.mxu0 %v2861
        %4185 = vmatpush1.bf16.msra.mxu0 %v2860
        %4186 = vmatprep.subr.bf16.mxu0 %v2869
        %4187 = vmatpush1.bf16.msra.mxu0 %v2868
        %4188 = vmatprep.subr.bf16.mxu0 %v2877
        %4189 = vmatpush1.bf16.msra.mxu0 %v2876
        %4190 = vmatprep.subr.bf16.mxu0 %v2885
        %4191 = vmatpush1.bf16.msra.mxu0 %v2884
        %4192 = vmatprep.subr.bf16.mxu0 %v2893
        %4193 = vmatpush1.bf16.msra.mxu0 %v2892
        %4194 = vmatprep.subr.bf16.mxu0 %v2901
        %4195 = vmatpush1.bf16.msra.mxu0 %v2900
        %4196 = vmatprep.subr.bf16.mxu0 %v2909
        %4197 = vmatpush1.bf16.msra.mxu0 %v2908
        %4198 = vmatprep.subr.bf16.mxu0 %v2917
        %4199 = vmatpush1.bf16.msra.mxu0 %v2916
        %4200 = vmatprep.subr.bf16.mxu0 %v2925
        %4201 = vmatpush1.bf16.msra.mxu0 %v2924
        %4202 = vmatprep.subr.bf16.mxu0 %v2933
        %4203 = vmatpush1.bf16.msra.mxu0 %v2932
        %4204 = vmatprep.subr.bf16.mxu0 %v2941
        %4205 = vmatpush1.bf16.msra.mxu0 %v2940
        %4206 = vmatprep.subr.bf16.mxu0 %v2949
        %4207 = vmatpush1.bf16.msra.mxu0 %v2948
        %4208 = vmatprep.mubr.bf16.mxu0 %v1273
        %4209 = vmatmul.mubr.bf16.gmra.mrb[0].mxu0 %v1272
        %v4210 = vpop.f32.mrb[0].mxu0
        %v4211 = vadd.f32 %v1239, %v4210
        %v4212 = vpop.f32.mrb[0].mxu0
        %v4213 = vadd.f32 %v1243, %v4212
        %v4214 = vpop.f32.mrb[0].mxu0
        %v4215 = vpop.f32.mrb[0].mxu0
        %4216 = vdwg.mxu0
        %4217 = vmatprep.subr.bf16.mxu0 %v2957
        %4218 = vmatpush1.bf16.msra.mxu0 %v2956
        %4219 = vmatprep.subr.bf16.mxu0 %v2965
        %4220 = vmatpush1.bf16.msra.mxu0 %v2964
        %4221 = vmatprep.subr.bf16.mxu0 %v2973
        %4222 = vmatpush1.bf16.msra.mxu0 %v2972
        %4223 = vmatprep.subr.bf16.mxu0 %v2981
        %4224 = vmatpush1.bf16.msra.mxu0 %v2980
        %4225 = vmatprep.subr.bf16.mxu0 %v2989
        %4226 = vmatpush1.bf16.msra.mxu0 %v2988
        %4227 = vmatprep.subr.bf16.mxu0 %v2997
        %4228 = vmatpush1.bf16.msra.mxu0 %v2996
        %4229 = vmatprep.subr.bf16.mxu0 %v3005
        %4230 = vmatpush1.bf16.msra.mxu0 %v3004
        %4231 = vmatprep.subr.bf16.mxu0 %v3013
        %4232 = vmatpush1.bf16.msra.mxu0 %v3012
        %4233 = vmatprep.subr.bf16.mxu0 %v3021
        %4234 = vmatpush1.bf16.msra.mxu0 %v3020
        %4235 = vmatprep.subr.bf16.mxu0 %v3029
        %4236 = vmatpush1.bf16.msra.mxu0 %v3028
        %4237 = vmatprep.subr.bf16.mxu0 %v3037
        %4238 = vmatpush1.bf16.msra.mxu0 %v3036
        %4239 = vmatprep.subr.bf16.mxu0 %v3045
        %4240 = vmatpush1.bf16.msra.mxu0 %v3044
        %4241 = vmatprep.subr.bf16.mxu0 %v3053
        %4242 = vmatpush1.bf16.msra.mxu0 %v3052
        %4243 = vmatprep.subr.bf16.mxu0 %v3061
        %4244 = vmatpush1.bf16.msra.mxu0 %v3060
        %4245 = vmatprep.subr.bf16.mxu0 %v3069
        %4246 = vmatpush1.bf16.msra.mxu0 %v3068
        %4247 = vmatprep.subr.bf16.mxu0 %v3077
        %4248 = vmatpush1.bf16.msra.mxu0 %v3076
        %4249 = vmatprep.mubr.bf16.mxu0 %v1275
        %4250 = vmatmul.mubr.bf16.gmra.mrb[0].mxu0 %v1274
        %v4251 = vpop.f32.mrb[0].mxu0
        %v4252 = vadd.f32 %v4211, %v4251
        %v4253 = vpop.f32.mrb[0].mxu0
        %v4254 = vadd.f32 %v4213, %v4253
        %v4255 = vpop.f32.mrb[0].mxu0
        %v4256 = vpop.f32.mrb[0].mxu0
        %4257 = vdwg.mxu0
        %4258 = vmatprep.subr.bf16.mxu0 %v3085
        %4259 = vmatpush1.bf16.msra.mxu0 %v3084
        %4260 = vmatprep.subr.bf16.mxu0 %v3093
        %4261 = vmatpush1.bf16.msra.mxu0 %v3092
        %4262 = vmatprep.subr.bf16.mxu0 %v3101
        %4263 = vmatpush1.bf16.msra.mxu0 %v3100
        %4264 = vmatprep.subr.bf16.mxu0 %v3109
        %4265 = vmatpush1.bf16.msra.mxu0 %v3108
        %4266 = vmatprep.subr.bf16.mxu0 %v3117
        %4267 = vmatpush1.bf16.msra.mxu0 %v3116
        %4268 = vmatprep.subr.bf16.mxu0 %v3125
        %4269 = vmatpush1.bf16.msra.mxu0 %v3124
        %4270 = vmatprep.subr.bf16.mxu0 %v3133
        %4271 = vmatpush1.bf16.msra.mxu0 %v3132
        %4272 = vmatprep.subr.bf16.mxu0 %v3141
        %4273 = vmatpush1.bf16.msra.mxu0 %v3140
        %4274 = vmatprep.subr.bf16.mxu0 %v3149
        %4275 = vmatpush1.bf16.msra.mxu0 %v3148
        %4276 = vmatprep.subr.bf16.mxu0 %v3157
        %4277 = vmatpush1.bf16.msra.mxu0 %v3156
        %4278 = vmatprep.subr.bf16.mxu0 %v3165
        %4279 = vmatpush1.bf16.msra.mxu0 %v3164
        %4280 = vmatprep.subr.bf16.mxu0 %v3173
        %4281 = vmatpush1.bf16.msra.mxu0 %v3172
        %4282 = vmatprep.subr.bf16.mxu0 %v3181
        %4283 = vmatpush1.bf16.msra.mxu0 %v3180
        %4284 = vmatprep.subr.bf16.mxu0 %v3189
        %4285 = vmatpush1.bf16.msra.mxu0 %v3188
        %4286 = vmatprep.subr.bf16.mxu0 %v3197
        %4287 = vmatpush1.bf16.msra.mxu0 %v3196
        %4288 = vmatprep.subr.bf16.mxu0 %v3205
        %4289 = vmatpush1.bf16.msra.mxu0 %v3204
        %4290 = vmatprep.mubr.bf16.mxu0 %v1277
        %4291 = vmatmul.mubr.bf16.gmra.mrb[0].mxu0 %v1276
        %v4292 = vpop.f32.mrb[0].mxu0
        %v4293 = vadd.f32 %v4252, %v4292
        %v4294 = vpop.f32.mrb[0].mxu0
        %v4295 = vadd.f32 %v4254, %v4294
        %v4296 = vpop.f32.mrb[0].mxu0
        %v4297 = vpop.f32.mrb[0].mxu0
        %4298 = vdwg.mxu0
        %4299 = vmatprep.subr.bf16.mxu0 %v3213
        %4300 = vmatpush1.bf16.msra.mxu0 %v3212
        %4301 = vmatprep.subr.bf16.mxu0 %v3221
        %4302 = vmatpush1.bf16.msra.mxu0 %v3220
        %4303 = vmatprep.subr.bf16.mxu0 %v3229
        %4304 = vmatpush1.bf16.msra.mxu0 %v3228
        %4305 = vmatprep.subr.bf16.mxu0 %v3237
        %4306 = vmatpush1.bf16.msra.mxu0 %v3236
        %4307 = vmatprep.subr.bf16.mxu0 %v3245
        %4308 = vmatpush1.bf16.msra.mxu0 %v3244
        %4309 = vmatprep.subr.bf16.mxu0 %v3253
        %4310 = vmatpush1.bf16.msra.mxu0 %v3252
        %4311 = vmatprep.subr.bf16.mxu0 %v3261
        %4312 = vmatpush1.bf16.msra.mxu0 %v3260
        %4313 = vmatprep.subr.bf16.mxu0 %v3269
        %4314 = vmatpush1.bf16.msra.mxu0 %v3268
        %4315 = vmatprep.subr.bf16.mxu0 %v3277
        %4316 = vmatpush1.bf16.msra.mxu0 %v3276
        %4317 = vmatprep.subr.bf16.mxu0 %v3285
        %4318 = vmatpush1.bf16.msra.mxu0 %v3284
        %4319 = vmatprep.subr.bf16.mxu0 %v3293
        %4320 = vmatpush1.bf16.msra.mxu0 %v3292
        %4321 = vmatprep.subr.bf16.mxu0 %v3301
        %4322 = vmatpush1.bf16.msra.mxu0 %v3300
        %4323 = vmatprep.subr.bf16.mxu0 %v3309
        %4324 = vmatpush1.bf16.msra.mxu0 %v3308
        %4325 = vmatprep.subr.bf16.mxu0 %v3317
        %4326 = vmatpush1.bf16.msra.mxu0 %v3316
        %4327 = vmatprep.subr.bf16.mxu0 %v3325
        %4328 = vmatpush1.bf16.msra.mxu0 %v3324
        %4329 = vmatprep.subr.bf16.mxu0 %v3333
        %4330 = vmatpush1.bf16.msra.mxu0 %v3332
        %4331 = vmatprep.mubr.bf16.mxu0 %v1279
        %4332 = vmatmul.mubr.bf16.gmra.mrb[0].mxu0 %v1278
        %v4333 = vpop.f32.mrb[0].mxu0
        %v4334 = vadd.f32 %v4293, %v4333
        %v4335 = vpop.f32.mrb[0].mxu0
        %v4336 = vadd.f32 %v4295, %v4335
        %v4337 = vpop.f32.mrb[0].mxu0
        %v4338 = vpop.f32.mrb[0].mxu0
        %4339 = vdwg.mxu0
        %4340 = vmatprep.subr.bf16.mxu0 %v2831
        %4341 = vmatpush1.bf16.msra.mxu0 %v2830
        %4342 = vmatprep.subr.bf16.mxu0 %v2839
        %4343 = vmatpush1.bf16.msra.mxu0 %v2838
        %4344 = vmatprep.subr.bf16.mxu0 %v2847
        %4345 = vmatpush1.bf16.msra.mxu0 %v2846
        %4346 = vmatprep.subr.bf16.mxu0 %v2855
        %4347 = vmatpush1.bf16.msra.mxu0 %v2854
        %4348 = vmatprep.subr.bf16.mxu0 %v2863
        %4349 = vmatpush1.bf16.msra.mxu0 %v2862
        %4350 = vmatprep.subr.bf16.mxu0 %v2871
        %4351 = vmatpush1.bf16.msra.mxu0 %v2870
        %4352 = vmatprep.subr.bf16.mxu0 %v2879
        %4353 = vmatpush1.bf16.msra.mxu0 %v2878
        %4354 = vmatprep.subr.bf16.mxu0 %v2887
        %4355 = vmatpush1.bf16.msra.mxu0 %v2886
        %4356 = vmatprep.subr.bf16.mxu0 %v2895
        %4357 = vmatpush1.bf16.msra.mxu0 %v2894
        %4358 = vmatprep.subr.bf16.mxu0 %v2903
        %4359 = vmatpush1.bf16.msra.mxu0 %v2902
        %4360 = vmatprep.subr.bf16.mxu0 %v2911
        %4361 = vmatpush1.bf16.msra.mxu0 %v2910
        %4362 = vmatprep.subr.bf16.mxu0 %v2919
        %4363 = vmatpush1.bf16.msra.mxu0 %v2918
        %4364 = vmatprep.subr.bf16.mxu0 %v2927
        %4365 = vmatpush1.bf16.msra.mxu0 %v2926
        %4366 = vmatprep.subr.bf16.mxu0 %v2935
        %4367 = vmatpush1.bf16.msra.mxu0 %v2934
        %4368 = vmatprep.subr.bf16.mxu0 %v2943
        %4369 = vmatpush1.bf16.msra.mxu0 %v2942
        %4370 = vmatprep.subr.bf16.mxu0 %v2951
        %4371 = vmatpush1.bf16.msra.mxu0 %v2950
        %4372 = vmatprep.mubr.bf16.mxu0 %v1273
        %4373 = vmatmul.mubr.bf16.gmra.mrb[0].mxu0 %v1272
        %v4374 = vpop.f32.mrb[0].mxu0
        %v4375 = vadd.f32 %v1247, %v4374
        %v4376 = vpop.f32.mrb[0].mxu0
        %v4377 = vadd.f32 %v1251, %v4376
        %v4378 = vpop.f32.mrb[0].mxu0
        %v4379 = vpop.f32.mrb[0].mxu0
        %4380 = vdwg.mxu0
        %4381 = vmatprep.subr.bf16.mxu0 %v2959
        %4382 = vmatpush1.bf16.msra.mxu0 %v2958
        %4383 = vmatprep.subr.bf16.mxu0 %v2967
        %4384 = vmatpush1.bf16.msra.mxu0 %v2966
        %4385 = vmatprep.subr.bf16.mxu0 %v2975
        %4386 = vmatpush1.bf16.msra.mxu0 %v2974
        %4387 = vmatprep.subr.bf16.mxu0 %v2983
        %4388 = vmatpush1.bf16.msra.mxu0 %v2982
        %4389 = vmatprep.subr.bf16.mxu0 %v2991
        %4390 = vmatpush1.bf16.msra.mxu0 %v2990
        %4391 = vmatprep.subr.bf16.mxu0 %v2999
        %4392 = vmatpush1.bf16.msra.mxu0 %v2998
        %4393 = vmatprep.subr.bf16.mxu0 %v3007
        %4394 = vmatpush1.bf16.msra.mxu0 %v3006
        %4395 = vmatprep.subr.bf16.mxu0 %v3015
        %4396 = vmatpush1.bf16.msra.mxu0 %v3014
        %4397 = vmatprep.subr.bf16.mxu0 %v3023
        %4398 = vmatpush1.bf16.msra.mxu0 %v3022
        %4399 = vmatprep.subr.bf16.mxu0 %v3031
        %4400 = vmatpush1.bf16.msra.mxu0 %v3030
        %4401 = vmatprep.subr.bf16.mxu0 %v3039
        %4402 = vmatpush1.bf16.msra.mxu0 %v3038
        %4403 = vmatprep.subr.bf16.mxu0 %v3047
        %4404 = vmatpush1.bf16.msra.mxu0 %v3046
        %4405 = vmatprep.subr.bf16.mxu0 %v3055
        %4406 = vmatpush1.bf16.msra.mxu0 %v3054
        %4407 = vmatprep.subr.bf16.mxu0 %v3063
        %4408 = vmatpush1.bf16.msra.mxu0 %v3062
        %4409 = vmatprep.subr.bf16.mxu0 %v3071
        %4410 = vmatpush1.bf16.msra.mxu0 %v3070
        %4411 = vmatprep.subr.bf16.mxu0 %v3079
        %4412 = vmatpush1.bf16.msra.mxu0 %v3078
        %4413 = vmatprep.mubr.bf16.mxu0 %v1275
        %4414 = vmatmul.mubr.bf16.gmra.mrb[0].mxu0 %v1274
        %v4415 = vpop.f32.mrb[0].mxu0
        %v4416 = vadd.f32 %v4375, %v4415
        %v4417 = vpop.f32.mrb[0].mxu0
        %v4418 = vadd.f32 %v4377, %v4417
        %v4419 = vpop.f32.mrb[0].mxu0
        %v4420 = vpop.f32.mrb[0].mxu0
        %4421 = vdwg.mxu0
        %4422 = vmatprep.subr.bf16.mxu0 %v3087
        %4423 = vmatpush1.bf16.msra.mxu0 %v3086
        %4424 = vmatprep.subr.bf16.mxu0 %v3095
        %4425 = vmatpush1.bf16.msra.mxu0 %v3094
        %4426 = vmatprep.subr.bf16.mxu0 %v3103
        %4427 = vmatpush1.bf16.msra.mxu0 %v3102
        %4428 = vmatprep.subr.bf16.mxu0 %v3111
        %4429 = vmatpush1.bf16.msra.mxu0 %v3110
        %4430 = vmatprep.subr.bf16.mxu0 %v3119
        %4431 = vmatpush1.bf16.msra.mxu0 %v3118
        %4432 = vmatprep.subr.bf16.mxu0 %v3127
        %4433 = vmatpush1.bf16.msra.mxu0 %v3126
        %4434 = vmatprep.subr.bf16.mxu0 %v3135
        %4435 = vmatpush1.bf16.msra.mxu0 %v3134
        %4436 = vmatprep.subr.bf16.mxu0 %v3143
        %4437 = vmatpush1.bf16.msra.mxu0 %v3142
        %4438 = vmatprep.subr.bf16.mxu0 %v3151
        %4439 = vmatpush1.bf16.msra.mxu0 %v3150
        %4440 = vmatprep.subr.bf16.mxu0 %v3159
        %4441 = vmatpush1.bf16.msra.mxu0 %v3158
        %4442 = vmatprep.subr.bf16.mxu0 %v3167
        %4443 = vmatpush1.bf16.msra.mxu0 %v3166
        %4444 = vmatprep.subr.bf16.mxu0 %v3175
        %4445 = vmatpush1.bf16.msra.mxu0 %v3174
        %4446 = vmatprep.subr.bf16.mxu0 %v3183
        %4447 = vmatpush1.bf16.msra.mxu0 %v3182
        %4448 = vmatprep.subr.bf16.mxu0 %v3191
        %4449 = vmatpush1.bf16.msra.mxu0 %v3190
        %4450 = vmatprep.subr.bf16.mxu0 %v3199
        %4451 = vmatpush1.bf16.msra.mxu0 %v3198
        %4452 = vmatprep.subr.bf16.mxu0 %v3207
        %4453 = vmatpush1.bf16.msra.mxu0 %v3206
        %4454 = vmatprep.mubr.bf16.mxu0 %v1277
        %4455 = vmatmul.mubr.bf16.gmra.mrb[0].mxu0 %v1276
        %v4456 = vpop.f32.mrb[0].mxu0
        %v4457 = vadd.f32 %v4416, %v4456
        %v4458 = vpop.f32.mrb[0].mxu0
        %v4459 = vadd.f32 %v4418, %v4458
        %v4460 = vpop.f32.mrb[0].mxu0
        %v4461 = vpop.f32.mrb[0].mxu0
        %4462 = vdwg.mxu0
        %4463 = vmatprep.subr.bf16.mxu0 %v3215
        %4464 = vmatpush1.bf16.msra.mxu0 %v3214
        %4465 = vmatprep.subr.bf16.mxu0 %v3223
        %4466 = vmatpush1.bf16.msra.mxu0 %v3222
        %4467 = vmatprep.subr.bf16.mxu0 %v3231
        %4468 = vmatpush1.bf16.msra.mxu0 %v3230
        %4469 = vmatprep.subr.bf16.mxu0 %v3239
        %4470 = vmatpush1.bf16.msra.mxu0 %v3238
        %4471 = vmatprep.subr.bf16.mxu0 %v3247
        %4472 = vmatpush1.bf16.msra.mxu0 %v3246
        %4473 = vmatprep.subr.bf16.mxu0 %v3255
        %4474 = vmatpush1.bf16.msra.mxu0 %v3254
        %4475 = vmatprep.subr.bf16.mxu0 %v3263
        %4476 = vmatpush1.bf16.msra.mxu0 %v3262
        %4477 = vmatprep.subr.bf16.mxu0 %v3271
        %4478 = vmatpush1.bf16.msra.mxu0 %v3270
        %4479 = vmatprep.subr.bf16.mxu0 %v3279
        %4480 = vmatpush1.bf16.msra.mxu0 %v3278
        %4481 = vmatprep.subr.bf16.mxu0 %v3287
        %4482 = vmatpush1.bf16.msra.mxu0 %v3286
        %4483 = vmatprep.subr.bf16.mxu0 %v3295
        %4484 = vmatpush1.bf16.msra.mxu0 %v3294
        %4485 = vmatprep.subr.bf16.mxu0 %v3303
        %4486 = vmatpush1.bf16.msra.mxu0 %v3302
        %4487 = vmatprep.subr.bf16.mxu0 %v3311
        %4488 = vmatpush1.bf16.msra.mxu0 %v3310
        %4489 = vmatprep.subr.bf16.mxu0 %v3319
        %4490 = vmatpush1.bf16.msra.mxu0 %v3318
        %4491 = vmatprep.subr.bf16.mxu0 %v3327
        %4492 = vmatpush1.bf16.msra.mxu0 %v3326
        %4493 = vmatprep.subr.bf16.mxu0 %v3335
        %4494 = vmatpush1.bf16.msra.mxu0 %v3334
        %4495 = vmatprep.mubr.bf16.mxu0 %v1279
        %4496 = vmatmul.mubr.bf16.gmra.mrb[0].mxu0 %v1278
        %v4497 = vpop.f32.mrb[0].mxu0
        %v4498 = vadd.f32 %v4457, %v4497
        %v4499 = vpop.f32.mrb[0].mxu0
        %v4500 = vadd.f32 %v4459, %v4499
        %v4501 = vpop.f32.mrb[0].mxu0
        %v4502 = vpop.f32.mrb[0].mxu0
        %4503 = vdwg.mxu0
        %v4504 = vmax.f32 %v4006, 0.0
        %v4505 = vmax.f32 %v4008, 0.0
        %v4506 = vmax.f32 %v4170, 0.0
        %v4507 = vmax.f32 %v4172, 0.0
        %v4508 = vmax.f32 %v4334, 0.0
        %v4509 = vmax.f32 %v4336, 0.0
        %v4510 = vmax.f32 %v4498, 0.0
        %v4511 = vmax.f32 %v4500, 0.0
        %v4512 = vld [vmem:[#allocation3] sm:$0xff]
        %v4513 = vpack.c.bf16 %v4504, %v4504
        %v4514 = vpack.c.bf16 %v4505, %v4505
        %v4515 = vpack.c.bf16 %v4506, %v4506
        %v4516 = vpack.c.bf16 %v4507, %v4507
        %v4517 = vpack.c.bf16 %v4508, %v4508
        %v4518 = vpack.c.bf16 %v4509, %v4509
        %v4519 = vpack.c.bf16 %v4510, %v4510
        %v4520 = vpack.c.bf16 %v4511, %v4511
        %s4521 = sshra.s32 %s698, 3
        %s4522 = sand.u32 %s698, 7
        %s4523 = smul.addr %s4521, 4
        %s4524 = scalar_lea.vmem %s5, %s4523
        %v4525 = vld [vmem:[%s4524] sm:$0xf]
        %v4526 = vld [vmem:[%s4524 + $0x4] sm:$0xf]
        %v4527 = vld [vmem:[%s4524 + $0x8] sm:$0xf]
        %v4528 = vld [vmem:[%s4524 + $0xc] sm:$0xf]
        %v4529 = vld [vmem:[%s4524 + $0x10] sm:$0xf]
        %v4530 = vld [vmem:[%s4524 + $0x14] sm:$0xf]
        %v4531 = vld [vmem:[%s4524 + $0x18] sm:$0xf]
        %v4532 = vld [vmem:[%s4524 + $0x1c] sm:$0xf]
        %v4533 = vld [vmem:[%s4524 + $0x20] sm:$0xf]
        %v4534 = vld [vmem:[%s4524 + $0x24] sm:$0xf]
        %v4535 = vld [vmem:[%s4524 + $0x28] sm:$0xf]
        %v4536 = vld [vmem:[%s4524 + $0x2c] sm:$0xf]
        %v4537 = vld [vmem:[%s4524 + $0x30] sm:$0xf]
        %v4538 = vld [vmem:[%s4524 + $0x34] sm:$0xf]
        %v4539 = vld [vmem:[%s4524 + $0x38] sm:$0xf]
        %v4540 = vld [vmem:[%s4524 + $0x3c] sm:$0xf]
        %v4541 = vld [vmem:[%s4524 + $0x40] sm:$0xf]
        %v4542 = vld [vmem:[%s4524 + $0x44] sm:$0xf]
        %v4543 = vld [vmem:[%s4524 + $0x48] sm:$0xf]
        %v4544 = vld [vmem:[%s4524 + $0x4c] sm:$0xf]
        %v4545 = vld [vmem:[%s4524 + $0x50] sm:$0xf]
        %v4546 = vld [vmem:[%s4524 + $0x54] sm:$0xf]
        %v4547 = vld [vmem:[%s4524 + $0x58] sm:$0xf]
        %v4548 = vld [vmem:[%s4524 + $0x5c] sm:$0xf]
        %v4549 = vld [vmem:[%s4524 + $0x60] sm:$0xf]
        %v4550 = vld [vmem:[%s4524 + $0x64] sm:$0xf]
        %v4551 = vld [vmem:[%s4524 + $0x68] sm:$0xf]
        %v4552 = vld [vmem:[%s4524 + $0x6c] sm:$0xf]
        %v4553 = vld [vmem:[%s4524 + $0x70] sm:$0xf]
        %v4554 = vld [vmem:[%s4524 + $0x74] sm:$0xf]
        %v4555 = vld [vmem:[%s4524 + $0x78] sm:$0xf]
        %v4556 = vld [vmem:[%s4524 + $0x7c] sm:$0xf]
        %v4557 = vld [vmem:[%s4524 + $0x80] sm:$0xf]
        %v4558 = vld [vmem:[%s4524 + $0x84] sm:$0xf]
        %v4559 = vld [vmem:[%s4524 + $0x88] sm:$0xf]
        %v4560 = vld [vmem:[%s4524 + $0x8c] sm:$0xf]
        %v4561 = vld [vmem:[%s4524 + $0x90] sm:$0xf]
        %v4562 = vld [vmem:[%s4524 + $0x94] sm:$0xf]
        %v4563 = vld [vmem:[%s4524 + $0x98] sm:$0xf]
        %v4564 = vld [vmem:[%s4524 + $0x9c] sm:$0xf]
        %v4565 = vld [vmem:[%s4524 + $0xa0] sm:$0xf]
        %v4566 = vld [vmem:[%s4524 + $0xa4] sm:$0xf]
        %v4567 = vld [vmem:[%s4524 + $0xa8] sm:$0xf]
        %v4568 = vld [vmem:[%s4524 + $0xac] sm:$0xf]
        %v4569 = vld [vmem:[%s4524 + $0xb0] sm:$0xf]
        %v4570 = vld [vmem:[%s4524 + $0xb4] sm:$0xf]
        %v4571 = vld [vmem:[%s4524 + $0xb8] sm:$0xf]
        %v4572 = vld [vmem:[%s4524 + $0xbc] sm:$0xf]
        %v4573 = vld [vmem:[%s4524 + $0xc0] sm:$0xf]
        %v4574 = vld [vmem:[%s4524 + $0xc4] sm:$0xf]
        %v4575 = vld [vmem:[%s4524 + $0xc8] sm:$0xf]
        %v4576 = vld [vmem:[%s4524 + $0xcc] sm:$0xf]
        %v4577 = vld [vmem:[%s4524 + $0xd0] sm:$0xf]
        %v4578 = vld [vmem:[%s4524 + $0xd4] sm:$0xf]
        %v4579 = vld [vmem:[%s4524 + $0xd8] sm:$0xf]
        %v4580 = vld [vmem:[%s4524 + $0xdc] sm:$0xf]
        %v4581 = vld [vmem:[%s4524 + $0xe0] sm:$0xf]
        %v4582 = vld [vmem:[%s4524 + $0xe4] sm:$0xf]
        %v4583 = vld [vmem:[%s4524 + $0xe8] sm:$0xf]
        %v4584 = vld [vmem:[%s4524 + $0xec] sm:$0xf]
        %v4585 = vld [vmem:[%s4524 + $0xf0] sm:$0xf]
        %v4586 = vld [vmem:[%s4524 + $0xf4] sm:$0xf]
        %v4587 = vld [vmem:[%s4524 + $0xf8] sm:$0xf]
        %v4588 = vld [vmem:[%s4524 + $0xfc] sm:$0xf]
        %v4589 = vld [vmem:[%s4524 + $0x100] sm:$0xf]
        %v4590 = vld [vmem:[%s4524 + $0x104] sm:$0xf]
        %v4591 = vld [vmem:[%s4524 + $0x108] sm:$0xf]
        %v4592 = vld [vmem:[%s4524 + $0x10c] sm:$0xf]
        %v4593 = vld [vmem:[%s4524 + $0x110] sm:$0xf]
        %v4594 = vld [vmem:[%s4524 + $0x114] sm:$0xf]
        %v4595 = vld [vmem:[%s4524 + $0x118] sm:$0xf]
        %v4596 = vld [vmem:[%s4524 + $0x11c] sm:$0xf]
        %v4597 = vld [vmem:[%s4524 + $0x120] sm:$0xf]
        %v4598 = vld [vmem:[%s4524 + $0x124] sm:$0xf]
        %v4599 = vld [vmem:[%s4524 + $0x128] sm:$0xf]
        %v4600 = vld [vmem:[%s4524 + $0x12c] sm:$0xf]
        %v4601 = vld [vmem:[%s4524 + $0x130] sm:$0xf]
        %v4602 = vld [vmem:[%s4524 + $0x134] sm:$0xf]
        %v4603 = vld [vmem:[%s4524 + $0x138] sm:$0xf]
        %v4604 = vld [vmem:[%s4524 + $0x13c] sm:$0xf]
        %v4605 = vld [vmem:[%s4524 + $0x140] sm:$0xf]
        %v4606 = vld [vmem:[%s4524 + $0x144] sm:$0xf]
        %v4607 = vld [vmem:[%s4524 + $0x148] sm:$0xf]
        %v4608 = vld [vmem:[%s4524 + $0x14c] sm:$0xf]
        %v4609 = vld [vmem:[%s4524 + $0x150] sm:$0xf]
        %v4610 = vld [vmem:[%s4524 + $0x154] sm:$0xf]
        %v4611 = vld [vmem:[%s4524 + $0x158] sm:$0xf]
        %v4612 = vld [vmem:[%s4524 + $0x15c] sm:$0xf]
        %v4613 = vld [vmem:[%s4524 + $0x160] sm:$0xf]
        %v4614 = vld [vmem:[%s4524 + $0x164] sm:$0xf]
        %v4615 = vld [vmem:[%s4524 + $0x168] sm:$0xf]
        %v4616 = vld [vmem:[%s4524 + $0x16c] sm:$0xf]
        %v4617 = vld [vmem:[%s4524 + $0x170] sm:$0xf]
        %v4618 = vld [vmem:[%s4524 + $0x174] sm:$0xf]
        %v4619 = vld [vmem:[%s4524 + $0x178] sm:$0xf]
        %v4620 = vld [vmem:[%s4524 + $0x17c] sm:$0xf]
        %v4621 = vld [vmem:[%s4524 + $0x180] sm:$0xf]
        %v4622 = vld [vmem:[%s4524 + $0x184] sm:$0xf]
        %v4623 = vld [vmem:[%s4524 + $0x188] sm:$0xf]
        %v4624 = vld [vmem:[%s4524 + $0x18c] sm:$0xf]
        %v4625 = vld [vmem:[%s4524 + $0x190] sm:$0xf]
        %v4626 = vld [vmem:[%s4524 + $0x194] sm:$0xf]
        %v4627 = vld [vmem:[%s4524 + $0x198] sm:$0xf]
        %v4628 = vld [vmem:[%s4524 + $0x19c] sm:$0xf]
        %v4629 = vld [vmem:[%s4524 + $0x1a0] sm:$0xf]
        %v4630 = vld [vmem:[%s4524 + $0x1a4] sm:$0xf]
        %v4631 = vld [vmem:[%s4524 + $0x1a8] sm:$0xf]
        %v4632 = vld [vmem:[%s4524 + $0x1ac] sm:$0xf]
        %v4633 = vld [vmem:[%s4524 + $0x1b0] sm:$0xf]
        %v4634 = vld [vmem:[%s4524 + $0x1b4] sm:$0xf]
        %v4635 = vld [vmem:[%s4524 + $0x1b8] sm:$0xf]
        %v4636 = vld [vmem:[%s4524 + $0x1bc] sm:$0xf]
        %v4637 = vld [vmem:[%s4524 + $0x1c0] sm:$0xf]
        %v4638 = vld [vmem:[%s4524 + $0x1c4] sm:$0xf]
        %v4639 = vld [vmem:[%s4524 + $0x1c8] sm:$0xf]
        %v4640 = vld [vmem:[%s4524 + $0x1cc] sm:$0xf]
        %v4641 = vld [vmem:[%s4524 + $0x1d0] sm:$0xf]
        %v4642 = vld [vmem:[%s4524 + $0x1d4] sm:$0xf]
        %v4643 = vld [vmem:[%s4524 + $0x1d8] sm:$0xf]
        %v4644 = vld [vmem:[%s4524 + $0x1dc] sm:$0xf]
        %v4645 = vld [vmem:[%s4524 + $0x1e0] sm:$0xf]
        %v4646 = vld [vmem:[%s4524 + $0x1e4] sm:$0xf]
        %v4647 = vld [vmem:[%s4524 + $0x1e8] sm:$0xf]
        %v4648 = vld [vmem:[%s4524 + $0x1ec] sm:$0xf]
        %v4649 = vld [vmem:[%s4524 + $0x1f0] sm:$0xf]
        %v4650 = vld [vmem:[%s4524 + $0x1f4] sm:$0xf]
        %v4651 = vld [vmem:[%s4524 + $0x1f8] sm:$0xf]
        %v4652 = vld [vmem:[%s4524 + $0x1fc] sm:$0xf]
        %v4781 = vunpack.c.l.b16 %v4525
        %v4782 = vunpack.c.l.b16 %v4526
        %v4783 = vunpack.c.l.b16 %v4527
        %v4784 = vunpack.c.l.b16 %v4528
        %v4785 = vunpack.c.l.b16 %v4529
        %v4786 = vunpack.c.l.b16 %v4530
        %v4787 = vunpack.c.l.b16 %v4531
        %v4788 = vunpack.c.l.b16 %v4532
        %v4789 = vunpack.c.l.b16 %v4533
        %v4790 = vunpack.c.l.b16 %v4534
        %v4791 = vunpack.c.l.b16 %v4535
        %v4792 = vunpack.c.l.b16 %v4536
        %v4793 = vunpack.c.l.b16 %v4537
        %v4794 = vunpack.c.l.b16 %v4538
        %v4795 = vunpack.c.l.b16 %v4539
        %v4796 = vunpack.c.l.b16 %v4540
        %v4797 = vunpack.c.l.b16 %v4541
        %v4798 = vunpack.c.l.b16 %v4542
        %v4799 = vunpack.c.l.b16 %v4543
        %v4800 = vunpack.c.l.b16 %v4544
        %v4801 = vunpack.c.l.b16 %v4545
        %v4802 = vunpack.c.l.b16 %v4546
        %v4803 = vunpack.c.l.b16 %v4547
        %v4804 = vunpack.c.l.b16 %v4548
        %v4805 = vunpack.c.l.b16 %v4549
        %v4806 = vunpack.c.l.b16 %v4550
        %v4807 = vunpack.c.l.b16 %v4551
        %v4808 = vunpack.c.l.b16 %v4552
        %v4809 = vunpack.c.l.b16 %v4553
        %v4810 = vunpack.c.l.b16 %v4554
        %v4811 = vunpack.c.l.b16 %v4555
        %v4812 = vunpack.c.l.b16 %v4556
        %v4813 = vunpack.c.l.b16 %v4557
        %v4814 = vunpack.c.l.b16 %v4558
        %v4815 = vunpack.c.l.b16 %v4559
        %v4816 = vunpack.c.l.b16 %v4560
        %v4817 = vunpack.c.l.b16 %v4561
        %v4818 = vunpack.c.l.b16 %v4562
        %v4819 = vunpack.c.l.b16 %v4563
        %v4820 = vunpack.c.l.b16 %v4564
        %v4821 = vunpack.c.l.b16 %v4565
        %v4822 = vunpack.c.l.b16 %v4566
        %v4823 = vunpack.c.l.b16 %v4567
        %v4824 = vunpack.c.l.b16 %v4568
        %v4825 = vunpack.c.l.b16 %v4569
        %v4826 = vunpack.c.l.b16 %v4570
        %v4827 = vunpack.c.l.b16 %v4571
        %v4828 = vunpack.c.l.b16 %v4572
        %v4829 = vunpack.c.l.b16 %v4573
        %v4830 = vunpack.c.l.b16 %v4574
        %v4831 = vunpack.c.l.b16 %v4575
        %v4832 = vunpack.c.l.b16 %v4576
        %v4833 = vunpack.c.l.b16 %v4577
        %v4834 = vunpack.c.l.b16 %v4578
        %v4835 = vunpack.c.l.b16 %v4579
        %v4836 = vunpack.c.l.b16 %v4580
        %v4837 = vunpack.c.l.b16 %v4581
        %v4838 = vunpack.c.l.b16 %v4582
        %v4839 = vunpack.c.l.b16 %v4583
        %v4840 = vunpack.c.l.b16 %v4584
        %v4841 = vunpack.c.l.b16 %v4585
        %v4842 = vunpack.c.l.b16 %v4586
        %v4843 = vunpack.c.l.b16 %v4587
        %v4844 = vunpack.c.l.b16 %v4588
        %v4845 = vunpack.c.l.b16 %v4589
        %v4846 = vunpack.c.l.b16 %v4590
        %v4847 = vunpack.c.l.b16 %v4591
        %v4848 = vunpack.c.l.b16 %v4592
        %v4849 = vunpack.c.l.b16 %v4593
        %v4850 = vunpack.c.l.b16 %v4594
        %v4851 = vunpack.c.l.b16 %v4595
        %v4852 = vunpack.c.l.b16 %v4596
        %v4853 = vunpack.c.l.b16 %v4597
        %v4854 = vunpack.c.l.b16 %v4598
        %v4855 = vunpack.c.l.b16 %v4599
        %v4856 = vunpack.c.l.b16 %v4600
        %v4857 = vunpack.c.l.b16 %v4601
        %v4858 = vunpack.c.l.b16 %v4602
        %v4859 = vunpack.c.l.b16 %v4603
        %v4860 = vunpack.c.l.b16 %v4604
        %v4861 = vunpack.c.l.b16 %v4605
        %v4862 = vunpack.c.l.b16 %v4606
        %v4863 = vunpack.c.l.b16 %v4607
        %v4864 = vunpack.c.l.b16 %v4608
        %v4865 = vunpack.c.l.b16 %v4609
        %v4866 = vunpack.c.l.b16 %v4610
        %v4867 = vunpack.c.l.b16 %v4611
        %v4868 = vunpack.c.l.b16 %v4612
        %v4869 = vunpack.c.l.b16 %v4613
        %v4870 = vunpack.c.l.b16 %v4614
        %v4871 = vunpack.c.l.b16 %v4615
        %v4872 = vunpack.c.l.b16 %v4616
        %v4873 = vunpack.c.l.b16 %v4617
        %v4874 = vunpack.c.l.b16 %v4618
        %v4875 = vunpack.c.l.b16 %v4619
        %v4876 = vunpack.c.l.b16 %v4620
        %v4877 = vunpack.c.l.b16 %v4621
        %v4878 = vunpack.c.l.b16 %v4622
        %v4879 = vunpack.c.l.b16 %v4623
        %v4880 = vunpack.c.l.b16 %v4624
        %v4881 = vunpack.c.l.b16 %v4625
        %v4882 = vunpack.c.l.b16 %v4626
        %v4883 = vunpack.c.l.b16 %v4627
        %v4884 = vunpack.c.l.b16 %v4628
        %v4885 = vunpack.c.l.b16 %v4629
        %v4886 = vunpack.c.l.b16 %v4630
        %v4887 = vunpack.c.l.b16 %v4631
        %v4888 = vunpack.c.l.b16 %v4632
        %v4889 = vunpack.c.l.b16 %v4633
        %v4890 = vunpack.c.l.b16 %v4634
        %v4891 = vunpack.c.l.b16 %v4635
        %v4892 = vunpack.c.l.b16 %v4636
        %v4893 = vunpack.c.l.b16 %v4637
        %v4894 = vunpack.c.l.b16 %v4638
        %v4895 = vunpack.c.l.b16 %v4639
        %v4896 = vunpack.c.l.b16 %v4640
        %v4897 = vunpack.c.l.b16 %v4641
        %v4898 = vunpack.c.l.b16 %v4642
        %v4899 = vunpack.c.l.b16 %v4643
        %v4900 = vunpack.c.l.b16 %v4644
        %v4901 = vunpack.c.l.b16 %v4645
        %v4902 = vunpack.c.l.b16 %v4646
        %v4903 = vunpack.c.l.b16 %v4647
        %v4904 = vunpack.c.l.b16 %v4648
        %v4905 = vunpack.c.l.b16 %v4649
        %v4906 = vunpack.c.l.b16 %v4650
        %v4907 = vunpack.c.l.b16 %v4651
        %v4908 = vunpack.c.l.b16 %v4652
        %v4909 = vpack.c.b16 %v4782, %v4781
        %v4910 = vpack.c.b16 %v4784, %v4783
        %v4911 = vpack.c.b16 %v4786, %v4785
        %v4912 = vpack.c.b16 %v4788, %v4787
        %v4913 = vpack.c.b16 %v4790, %v4789
        %v4914 = vpack.c.b16 %v4792, %v4791
        %v4915 = vpack.c.b16 %v4794, %v4793
        %v4916 = vpack.c.b16 %v4796, %v4795
        %v4917 = vpack.c.b16 %v4798, %v4797
        %v4918 = vpack.c.b16 %v4800, %v4799
        %v4919 = vpack.c.b16 %v4802, %v4801
        %v4920 = vpack.c.b16 %v4804, %v4803
        %v4921 = vpack.c.b16 %v4806, %v4805
        %v4922 = vpack.c.b16 %v4808, %v4807
        %v4923 = vpack.c.b16 %v4810, %v4809
        %v4924 = vpack.c.b16 %v4812, %v4811
        %v4925 = vpack.c.b16 %v4814, %v4813
        %v4926 = vpack.c.b16 %v4816, %v4815
        %v4927 = vpack.c.b16 %v4818, %v4817
        %v4928 = vpack.c.b16 %v4820, %v4819
        %v4929 = vpack.c.b16 %v4822, %v4821
        %v4930 = vpack.c.b16 %v4824, %v4823
        %v4931 = vpack.c.b16 %v4826, %v4825
        %v4932 = vpack.c.b16 %v4828, %v4827
        %v4933 = vpack.c.b16 %v4830, %v4829
        %v4934 = vpack.c.b16 %v4832, %v4831
        %v4935 = vpack.c.b16 %v4834, %v4833
        %v4936 = vpack.c.b16 %v4836, %v4835
        %v4937 = vpack.c.b16 %v4838, %v4837
        %v4938 = vpack.c.b16 %v4840, %v4839
        %v4939 = vpack.c.b16 %v4842, %v4841
        %v4940 = vpack.c.b16 %v4844, %v4843
        %v4941 = vpack.c.b16 %v4846, %v4845
        %v4942 = vpack.c.b16 %v4848, %v4847
        %v4943 = vpack.c.b16 %v4850, %v4849
        %v4944 = vpack.c.b16 %v4852, %v4851
        %v4945 = vpack.c.b16 %v4854, %v4853
        %v4946 = vpack.c.b16 %v4856, %v4855
        %v4947 = vpack.c.b16 %v4858, %v4857
        %v4948 = vpack.c.b16 %v4860, %v4859
        %v4949 = vpack.c.b16 %v4862, %v4861
        %v4950 = vpack.c.b16 %v4864, %v4863
        %v4951 = vpack.c.b16 %v4866, %v4865
        %v4952 = vpack.c.b16 %v4868, %v4867
        %v4953 = vpack.c.b16 %v4870, %v4869
        %v4954 = vpack.c.b16 %v4872, %v4871
        %v4955 = vpack.c.b16 %v4874, %v4873
        %v4956 = vpack.c.b16 %v4876, %v4875
        %v4957 = vpack.c.b16 %v4878, %v4877
        %v4958 = vpack.c.b16 %v4880, %v4879
        %v4959 = vpack.c.b16 %v4882, %v4881
        %v4960 = vpack.c.b16 %v4884, %v4883
        %v4961 = vpack.c.b16 %v4886, %v4885
        %v4962 = vpack.c.b16 %v4888, %v4887
        %v4963 = vpack.c.b16 %v4890, %v4889
        %v4964 = vpack.c.b16 %v4892, %v4891
        %v4965 = vpack.c.b16 %v4894, %v4893
        %v4966 = vpack.c.b16 %v4896, %v4895
        %v4967 = vpack.c.b16 %v4898, %v4897
        %v4968 = vpack.c.b16 %v4900, %v4899
        %v4969 = vpack.c.b16 %v4902, %v4901
        %v4970 = vpack.c.b16 %v4904, %v4903
        %v4971 = vpack.c.b16 %v4906, %v4905
        %v4972 = vpack.c.b16 %v4908, %v4907
        %5037 = vmatprep.subr.bf16.mxu0 0
        %5038 = vmatpush1.bf16.msra.mxu0 %v4909
        %5039 = vmatprep.subr.bf16.mxu0 0
        %5040 = vmatpush1.bf16.msra.mxu0 %v4910
        %5041 = vmatprep.subr.bf16.mxu0 0
        %5042 = vmatpush1.bf16.msra.mxu0 %v4911
        %5043 = vmatprep.subr.bf16.mxu0 0
        %5044 = vmatpush1.bf16.msra.mxu0 %v4912
        %5045 = vmatprep.subr.bf16.mxu0 0
        %5046 = vmatpush1.bf16.msra.mxu0 %v4913
        %5047 = vmatprep.subr.bf16.mxu0 0
        %5048 = vmatpush1.bf16.msra.mxu0 %v4914
        %5049 = vmatprep.subr.bf16.mxu0 0
        %5050 = vmatpush1.bf16.msra.mxu0 %v4915
        %5051 = vmatprep.subr.bf16.mxu0 0
        %5052 = vmatpush1.bf16.msra.mxu0 %v4916
        %5053 = vmatprep.subr.bf16.mxu0 0
        %5054 = vmatpush1.bf16.msra.mxu0 %v4917
        %5055 = vmatprep.subr.bf16.mxu0 0
        %5056 = vmatpush1.bf16.msra.mxu0 %v4918
        %5057 = vmatprep.subr.bf16.mxu0 0
        %5058 = vmatpush1.bf16.msra.mxu0 %v4919
        %5059 = vmatprep.subr.bf16.mxu0 0
        %5060 = vmatpush1.bf16.msra.mxu0 %v4920
        %5061 = vmatprep.subr.bf16.mxu0 0
        %5062 = vmatpush1.bf16.msra.mxu0 %v4921
        %5063 = vmatprep.subr.bf16.mxu0 0
        %5064 = vmatpush1.bf16.msra.mxu0 %v4922
        %5065 = vmatprep.subr.bf16.mxu0 0
        %5066 = vmatpush1.bf16.msra.mxu0 %v4923
        %5067 = vmatprep.subr.bf16.mxu0 0
        %5068 = vmatpush1.bf16.msra.mxu0 %v4924
        %5069 = vmatprep.mubr.bf16.mxu0 %v4514
        %5070 = vmatmul.mubr.bf16.gmra.mrb[0].mxu0 %v4513
        %v5071 = vpop.f32.mrb[0].mxu0
        %v5072 = vadd.f32 0.0, %v5071
        %v5073 = vpop.f32.mrb[0].mxu0
        %v5074 = vpop.f32.mrb[0].mxu0
        %v5075 = vpop.f32.mrb[0].mxu0
        %5076 = vdwg.mxu0
        %5077 = vmatprep.subr.bf16.mxu0 0
        %5078 = vmatpush1.bf16.msra.mxu0 %v4925
        %5079 = vmatprep.subr.bf16.mxu0 0
        %5080 = vmatpush1.bf16.msra.mxu0 %v4926
        %5081 = vmatprep.subr.bf16.mxu0 0
        %5082 = vmatpush1.bf16.msra.mxu0 %v4927
        %5083 = vmatprep.subr.bf16.mxu0 0
        %5084 = vmatpush1.bf16.msra.mxu0 %v4928
        %5085 = vmatprep.subr.bf16.mxu0 0
        %5086 = vmatpush1.bf16.msra.mxu0 %v4929
        %5087 = vmatprep.subr.bf16.mxu0 0
        %5088 = vmatpush1.bf16.msra.mxu0 %v4930
        %5089 = vmatprep.subr.bf16.mxu0 0
        %5090 = vmatpush1.bf16.msra.mxu0 %v4931
        %5091 = vmatprep.subr.bf16.mxu0 0
        %5092 = vmatpush1.bf16.msra.mxu0 %v4932
        %5093 = vmatprep.subr.bf16.mxu0 0
        %5094 = vmatpush1.bf16.msra.mxu0 %v4933
        %5095 = vmatprep.subr.bf16.mxu0 0
        %5096 = vmatpush1.bf16.msra.mxu0 %v4934
        %5097 = vmatprep.subr.bf16.mxu0 0
        %5098 = vmatpush1.bf16.msra.mxu0 %v4935
        %5099 = vmatprep.subr.bf16.mxu0 0
        %5100 = vmatpush1.bf16.msra.mxu0 %v4936
        %5101 = vmatprep.subr.bf16.mxu0 0
        %5102 = vmatpush1.bf16.msra.mxu0 %v4937
        %5103 = vmatprep.subr.bf16.mxu0 0
        %5104 = vmatpush1.bf16.msra.mxu0 %v4938
        %5105 = vmatprep.subr.bf16.mxu0 0
        %5106 = vmatpush1.bf16.msra.mxu0 %v4939
        %5107 = vmatprep.subr.bf16.mxu0 0
        %5108 = vmatpush1.bf16.msra.mxu0 %v4940
        %5109 = vmatprep.mubr.bf16.mxu0 %v4516
        %5110 = vmatmul.mubr.bf16.gmra.mrb[0].mxu0 %v4515
        %v5111 = vpop.f32.mrb[0].mxu0
        %v5112 = vadd.f32 %v5072, %v5111
        %v5113 = vpop.f32.mrb[0].mxu0
        %v5114 = vpop.f32.mrb[0].mxu0
        %v5115 = vpop.f32.mrb[0].mxu0
        %5116 = vdwg.mxu0
        %5117 = vmatprep.subr.bf16.mxu0 0
        %5118 = vmatpush1.bf16.msra.mxu0 %v4941
        %5119 = vmatprep.subr.bf16.mxu0 0
        %5120 = vmatpush1.bf16.msra.mxu0 %v4942
        %5121 = vmatprep.subr.bf16.mxu0 0
        %5122 = vmatpush1.bf16.msra.mxu0 %v4943
        %5123 = vmatprep.subr.bf16.mxu0 0
        %5124 = vmatpush1.bf16.msra.mxu0 %v4944
        %5125 = vmatprep.subr.bf16.mxu0 0
        %5126 = vmatpush1.bf16.msra.mxu0 %v4945
        %5127 = vmatprep.subr.bf16.mxu0 0
        %5128 = vmatpush1.bf16.msra.mxu0 %v4946
        %5129 = vmatprep.subr.bf16.mxu0 0
        %5130 = vmatpush1.bf16.msra.mxu0 %v4947
        %5131 = vmatprep.subr.bf16.mxu0 0
        %5132 = vmatpush1.bf16.msra.mxu0 %v4948
        %5133 = vmatprep.subr.bf16.mxu0 0
        %5134 = vmatpush1.bf16.msra.mxu0 %v4949
        %5135 = vmatprep.subr.bf16.mxu0 0
        %5136 = vmatpush1.bf16.msra.mxu0 %v4950
        %5137 = vmatprep.subr.bf16.mxu0 0
        %5138 = vmatpush1.bf16.msra.mxu0 %v4951
        %5139 = vmatprep.subr.bf16.mxu0 0
        %5140 = vmatpush1.bf16.msra.mxu0 %v4952
        %5141 = vmatprep.subr.bf16.mxu0 0
        %5142 = vmatpush1.bf16.msra.mxu0 %v4953
        %5143 = vmatprep.subr.bf16.mxu0 0
        %5144 = vmatpush1.bf16.msra.mxu0 %v4954
        %5145 = vmatprep.subr.bf16.mxu0 0
        %5146 = vmatpush1.bf16.msra.mxu0 %v4955
        %5147 = vmatprep.subr.bf16.mxu0 0
        %5148 = vmatpush1.bf16.msra.mxu0 %v4956
        %5149 = vmatprep.mubr.bf16.mxu0 %v4518
        %5150 = vmatmul.mubr.bf16.gmra.mrb[0].mxu0 %v4517
        %v5151 = vpop.f32.mrb[0].mxu0
        %v5152 = vadd.f32 %v5112, %v5151
        %v5153 = vpop.f32.mrb[0].mxu0
        %v5154 = vpop.f32.mrb[0].mxu0
        %v5155 = vpop.f32.mrb[0].mxu0
        %5156 = vdwg.mxu0
        %5157 = vmatprep.subr.bf16.mxu0 0
        %5158 = vmatpush1.bf16.msra.mxu0 %v4957
        %5159 = vmatprep.subr.bf16.mxu0 0
        %5160 = vmatpush1.bf16.msra.mxu0 %v4958
        %5161 = vmatprep.subr.bf16.mxu0 0
        %5162 = vmatpush1.bf16.msra.mxu0 %v4959
        %5163 = vmatprep.subr.bf16.mxu0 0
        %5164 = vmatpush1.bf16.msra.mxu0 %v4960
        %5165 = vmatprep.subr.bf16.mxu0 0
        %5166 = vmatpush1.bf16.msra.mxu0 %v4961
        %5167 = vmatprep.subr.bf16.mxu0 0
        %5168 = vmatpush1.bf16.msra.mxu0 %v4962
        %5169 = vmatprep.subr.bf16.mxu0 0
        %5170 = vmatpush1.bf16.msra.mxu0 %v4963
        %5171 = vmatprep.subr.bf16.mxu0 0
        %5172 = vmatpush1.bf16.msra.mxu0 %v4964
        %5173 = vmatprep.subr.bf16.mxu0 0
        %5174 = vmatpush1.bf16.msra.mxu0 %v4965
        %5175 = vmatprep.subr.bf16.mxu0 0
        %5176 = vmatpush1.bf16.msra.mxu0 %v4966
        %5177 = vmatprep.subr.bf16.mxu0 0
        %5178 = vmatpush1.bf16.msra.mxu0 %v4967
        %5179 = vmatprep.subr.bf16.mxu0 0
        %5180 = vmatpush1.bf16.msra.mxu0 %v4968
        %5181 = vmatprep.subr.bf16.mxu0 0
        %5182 = vmatpush1.bf16.msra.mxu0 %v4969
        %5183 = vmatprep.subr.bf16.mxu0 0
        %5184 = vmatpush1.bf16.msra.mxu0 %v4970
        %5185 = vmatprep.subr.bf16.mxu0 0
        %5186 = vmatpush1.bf16.msra.mxu0 %v4971
        %5187 = vmatprep.subr.bf16.mxu0 0
        %5188 = vmatpush1.bf16.msra.mxu0 %v4972
        %5189 = vmatprep.mubr.bf16.mxu0 %v4520
        %5190 = vmatmul.mubr.bf16.gmra.mrb[0].mxu0 %v4519
        %v5191 = vpop.f32.mrb[0].mxu0
        %v5192 = vadd.f32 %v5152, %v5191
        %v5193 = vpop.f32.mrb[0].mxu0
        %v5194 = vpop.f32.mrb[0].mxu0
        %v5195 = vpop.f32.mrb[0].mxu0
        %5196 = vdwg.mxu0
        %v5197 = vadd.f32 %v4512, %v5192
        %vm5198 = vcmask 31744
        %5199 = vst.msk [vmem:[#allocation3] sm:$0xff] %vm5198, %v5197
        %p5200 = scmp.eq.s32.totalorder %s29, 1
        // Predicated region
        $region77: #{dqn_forward.1} parent=47 // pred_check
          %p5201 = pneg %p5200
        $region78: #{dqn_forward.1} parent=47 // pred_check_branch
          %5203 = sbr.rel (%p5201) target = $region80
        $region79: #{dqn_forward.1} parent=47 // pred_region
          %v5204 = vld [vmem:[#allocation3] sm:$0xff]
          %5205 = vst.msk [vmem:[%s378] sm:$0xff] %vm5198, %v5204
        $region80: #{dqn_forward.1} parent=47 // pred_fallthru
          _
        %p5206 = scmp.lt.s32.totalorder %s28, 0
        %s5207 = scalar_select %p5206, %s28, 0
        %s5208 = smul.addr %s5207, 8
        %s5209 = scalar_lea.vmem %s7, %s5208
        // Predicated region
        $region81: #{dqn_forward.1} parent=47 // pred_check
          %p5210 = pneg %p211
        $region82: #{dqn_forward.1} parent=47 // pred_check_branch
          %5212 = sbr.rel (%p5210) target = $region84
        $region83: #{dqn_forward.1} parent=47 // pred_region
          _
        $region84: #{dqn_forward.1} parent=47 // pred_fallthru
          _
        // Predicated region
        $region85: #{dqn_forward.1} parent=47 // pred_check
          %p5213 = pneg %p211
        $region86: #{dqn_forward.1} parent=47 // pred_check_branch
          %5215 = sbr.rel (%p5213) target = $region88
        $region87: #{dqn_forward.1} parent=47 // pred_region
          %p5216 = scmp.lt.s32.totalorder %s28, 0
          %s5217 = scalar_select %p5216, %s28, 0
          %s5218 = smul.addr %s5217, 8
          %s5219 = scalar_lea.vmem %s7, %s5218
        $region88: #{dqn_forward.1} parent=47 // pred_fallthru
          _
      $region48: #{dqn_forward.1} parent=5 // pred_fallthru
        _
      %p5220 = scmp.le.s32.totalorder 2, %s19
      // Predicated region
      $region89: #{dqn_forward.1} parent=5 // pred_check
        %p5221 = pneg %p5220
      $region90: #{dqn_forward.1} parent=5 // pred_check_branch
        %5223 = sbr.rel (%p5221) target = $region92
      $region91: #{dqn_forward.1} parent=5 // pred_region
        %s5224 = ssub.s32 %s19, 2
      $region92: #{dqn_forward.1} parent=5 // pred_fallthru
        _
    $region6: #{dqn_forward.1} parent=1 // loop_footer
      %s23 = sadd.s32 1, %s19
    $region7: #{dqn_forward.1} parent=1 // loop_footer_branch
      %18 = sbr.rel target = $region3
    $region8: #{dqn_forward.1} parent=1 // loop_exit
      _
    %5225 = vsyncpa [#allocation5], 1
    %s5226 = scalar_lea.sflag [#allocation5], 1
    %5227 = vsyncpa %s5226, 1
    %5228 = vsyncpa [#allocation7], 1
    %5229 = vsyncpa [#allocation10], 1
    %s5230 = scalar_lea.sflag [#allocation10], 1
    %5231 = vsyncpa %s5230, 1
    %5232 = vsyncpa [#allocation13], 1

</llo_original>
